<compile_context>
chip_gen: v7x
topology: tpu7x:2x2x1
jax: 0.10.0
libtpu: 0.0.40
codegen_flags: <defaults>
</compile_context>

<pallas_src>
import functools

import numpy as np
import jax
import jax.numpy as jnp
from jax import lax
from jax.experimental import pallas as pl
from jax.experimental.pallas import tpu as pltpu

KERNEL_SIZE = 15
THRESHOLD = 0.6
ITERATIONS = 1


def make_soft_erosion_weight(kernel_size=KERNEL_SIZE):
    """Deterministic weight exactly as in SoftErosion.__init__ (torch meshgrid is 'ij')."""
    r = kernel_size // 2
    y, x = np.meshgrid(
        np.arange(kernel_size, dtype=np.float64),
        np.arange(kernel_size, dtype=np.float64),
        indexing="ij",
    )
    dist = np.sqrt((x - r) ** 2 + (y - r) ** 2)
    k = dist.max() - dist
    k = k / k.sum()
    return jnp.asarray(k, dtype=jnp.float32)  # (K, K)


def _round_up(a, m):
    return (a + m - 1) // m * m


# ----------------------------------------------------------------------------
# Kernel 1: depthwise "same" convolution, one image per grid step.
#   w_sref : (K*K,) f32 in SMEM (scalar prefetch)
#   x_ref  : (H, W)   unpadded input block
#   o_ref  : (H, WL)  lane-dense output block (cols >= W are don't-care)
#   xpad   : (H+2r, WL+2r) VMEM scratch, zero-padded image
# ----------------------------------------------------------------------------
def _conv_kernel(w_sref, x_ref, o_ref, xpad_ref, *, H, W, WL, K):
    r = K // 2

    # In-kernel zero padding (replaces wrapper-side jnp.pad HBM round trip).
    xpad_ref[...] = jnp.zeros_like(xpad_ref)
    xpad_ref[pl.ds(r, H), pl.ds(r, W)] = x_ref[...]

    acc = jnp.zeros((H, WL), jnp.float32)

    # Fully static / unrolled taps.  4-fold radial symmetry of the weight
    # (guaranteed by SoftErosion.__init__): rows dy and K-1-dy share a weight
    # row, columns dx and K-1-dx share a weight -> sum windows first, multiply
    # once per group (64 vmuls instead of 225).
    for dy in range(r + 1):
        dy2 = K - 1 - dy
        row = xpad_ref[pl.ds(dy, H), :]                 # load row window once
        if dy2 != dy:
            row = row + xpad_ref[pl.ds(dy2, H), :]      # vertical symmetry
        for dx in range(r + 1):
            dx2 = K - 1 - dx
            win = row[:, dx:dx + WL]                    # static lane shift
            if dx2 != dx:
                win = win + row[:, dx2:dx2 + WL]        # horizontal symmetry
            acc = acc + w_sref[dy * K + dx] * win

    o_ref[...] = acc


def _conv_flat(x_flat, weight_kk):
    """x_flat: (B, H, W) f32 -> (B, H, WL) f32, WL = round_up(W, 128)."""
    B, H, W = x_flat.shape
    K = int(weight_kk.shape[0])
    r = K // 2
    WL = _round_up(W, 128)
    w_flat = weight_kk.reshape(-1).astype(jnp.float32)

    return pl.pallas_call(
        functools.partial(_conv_kernel, H=H, W=W, WL=WL, K=K),
        out_shape=jax.ShapeDtypeStruct((B, H, WL), jnp.float32),
        grid_spec=pltpu.PrefetchScalarGridSpec(
            num_scalar_prefetch=1,
            grid=(B,),
            in_specs=[pl.BlockSpec((None, H, W), lambda b, wref: (b, 0, 0))],
            out_specs=pl.BlockSpec((None, H, WL), lambda b, wref: (b, 0, 0)),
            scratch_shapes=[pltpu.VMEM((H + 2 * r, WL + 2 * r), jnp.float32)],
        ),
        compiler_params=pltpu.CompilerParams(dimension_semantics=("parallel",)),
        cost_estimate=pl.CostEstimate(
            flops=2 * B * H * WL * K * K,
            transcendentals=0,
            bytes_accessed=4 * B * H * (W + WL),
        ),
    )(w_flat, x_flat)


def depthwise_conv_same(x_nchw, weight_kk):
    N, C, H, W = x_nchw.shape
    y = _conv_flat(x_nchw.reshape(N * C, H, W).astype(jnp.float32), weight_kk)
    return y[:, :, :W].reshape(N, C, H, W)


# ----------------------------------------------------------------------------
# Kernel 2a: blocked global max over non-masked (x < threshold) valid elements.
# Sequential grid, accumulator is the resident (1,1) output block.
# ----------------------------------------------------------------------------
def _nonmask_max_kernel(x_ref, mx_ref, *, H, W, TH):
    b = pl.program_id(0)
    t = pl.program_id(1)
    x = x_ref[...]                                   # (TH, WL)
    rows = t * TH + lax.broadcasted_iota(jnp.int32, x.shape, 0)
    cols = lax.broadcasted_iota(jnp.int32, x.shape, 1)
    keep = (rows < H) & (cols < W) & (x < jnp.float32(THRESHOLD))
    bmax = jnp.max(jnp.where(keep, x, -jnp.inf))

    @pl.when((b == 0) & (t == 0))
    def _():
        mx_ref[...] = jnp.full((1, 1), -jnp.inf, jnp.float32)

    mx_ref[...] = jnp.maximum(mx_ref[...], bmax)


# ----------------------------------------------------------------------------
# Kernel 2b: apply threshold / normalization.  Mask stored as int8.
# ----------------------------------------------------------------------------
def _apply_kernel(x_ref, mx_ref, out_ref, mask_ref):
    x = x_ref[...]
    mask = x >= jnp.float32(THRESHOLD)
    inv = pl.reciprocal(mx_ref[...], approx=False)   # (1,1), broadcasts (EUP, not VPU divide)
    out_ref[...] = jnp.where(mask, jnp.float32(1.0), x * inv)
    mask_ref[...] = mask.astype(jnp.int8)


def _threshold_normalize_flat(y_flat, W_valid):
    """y_flat: (B, H, WL); only columns < W_valid are meaningful."""
    B, H, WL = y_flat.shape
    TH = min(H, 256)
    nT = pl.cdiv(H, TH)

    mx = pl.pallas_call(
        functools.partial(_nonmask_max_kernel, H=H, W=W_valid, TH=TH),
        out_shape=jax.ShapeDtypeStruct((1, 1), jnp.float32),
        grid=(B, nT),
        in_specs=[pl.BlockSpec((None, TH, WL), lambda b, t: (b, t, 0))],
        out_specs=pl.BlockSpec((1, 1), lambda b, t: (0, 0)),
        compiler_params=pltpu.CompilerParams(
            dimension_semantics=("arbitrary", "arbitrary")),
    )(y_flat)

    out, mask_i8 = pl.pallas_call(
        _apply_kernel,
        out_shape=(
            jax.ShapeDtypeStruct((B, H, WL), jnp.float32),
            jax.ShapeDtypeStruct((B, H, WL), jnp.int8),
        ),
        grid=(B, nT),
        in_specs=[
            pl.BlockSpec((None, TH, WL), lambda b, t: (b, t, 0)),
            pl.BlockSpec((1, 1), lambda b, t: (0, 0)),
        ],
        out_specs=(
            pl.BlockSpec((None, TH, WL), lambda b, t: (b, t, 0)),
            pl.BlockSpec((None, TH, WL), lambda b, t: (b, t, 0)),
        ),
        compiler_params=pltpu.CompilerParams(
            dimension_semantics=("parallel", "parallel")),
    )(y_flat, mx)
    return out, mask_i8


# ----------------------------------------------------------------------------
# Full SoftErosion forward.
# ----------------------------------------------------------------------------
def soft_erosion(x_nchw, weight_kk, iterations=ITERATIONS):
    N, C, H, W = x_nchw.shape
    x = x_nchw.astype(jnp.float32)
    for _ in range(iterations - 1):
        x = jnp.minimum(x, depthwise_conv_same(x, weight_kk))
    y = _conv_flat(x.reshape(N * C, H, W), weight_kk)        # (B, H, WL)
    out_p, mask_p = _threshold_normalize_flat(y, W)
    out = out_p[:, :, :W].reshape(N, C, H, W)
    mask = mask_p[:, :, :W].reshape(N, C, H, W).astype(jnp.bool_)
    return out, mask


# ----------------------------------------------------------------------------
# Pure-JAX reference for verification.
# ----------------------------------------------------------------------------
def ref_soft_erosion(x_nchw, weight_kk, iterations=ITERATIONS):
    xf = x_nchw.astype(jnp.float32)
    K = weight_kk.shape[0]
    r = K // 2
    w = weight_kk.reshape(1, 1, K, K)

    def conv(x):
        return lax.conv_general_dilated(
            x, w, window_strides=(1, 1), padding=((r, r), (r, r)),
            dimension_numbers=("NCHW", "OIHW", "NCHW"),
            feature_group_count=x.shape[1],
        )

    for _ in range(iterations - 1):
        xf = jnp.minimum(xf, conv(xf))
    xf = conv(xf)
    mask = xf >= THRESHOLD
    mx = jnp.max(jnp.where(mask, -jnp.inf, xf))
    out = jnp.where(mask, 1.0, xf / mx)
    return out, mask, xf


if __name__ == "__main__":
    key = jax.random.PRNGKey(0)
    # SoftErosion is applied to a single-channel soft mask -> C = 1 (groups=C with a
    # (1,1,K,K) weight is only valid for C == 1 in PyTorch).  Shift input to (0.5, 1)
    # so both the masked (>= threshold) and normalized branches are exercised.
    x = jax.random.uniform(key, (2, 1, 16, 16), dtype=jnp.float32) * 0.5 + 0.5
    weight = make_soft_erosion_weight(KERNEL_SIZE)

    out, mask = jax.jit(soft_erosion)(x, weight)
    out = jax.block_until_ready(out)
    mask = jax.block_until_ready(mask)

    ref_out, ref_mask, ref_conv = ref_soft_erosion(x, weight)
    out_np = np.asarray(out)
    mask_np = np.asarray(mask)
    ref_out_np = np.asarray(ref_out)
    ref_mask_np = np.asarray(ref_mask)
    ref_conv_np = np.asarray(ref_conv)

    assert out.shape == (2, 1, 16, 16) and mask.dtype == jnp.bool_

    # Elements within float-noise of the threshold may legitimately flip the mask
    # between two bit-exact-different (but both correct) conv implementations.
    borderline = np.abs(ref_conv_np - THRESHOLD) < 1e-4
    assert ((mask_np == ref_mask_np) | borderline).all()
    ok = np.isclose(out_np, ref_out_np, rtol=1e-4, atol=1e-4) | borderline
    assert ok.all()

    print("KERNEL_OK")
</pallas_src>

<mosaic_0001>
module attributes {stable_mosaic.version = 11 : i64} {
  func.func @_apply_kernel(%arg0: i32, %arg1: i32, %arg2: memref<1x16x128xf32, #tpu.memory_space<vmem>>, %arg3: memref<1x1xf32, #tpu.memory_space<vmem>>, %arg4: memref<1x16x128xf32, #tpu.memory_space<vmem>>, %arg5: memref<1x16x128xi8, #tpu.memory_space<vmem>>) attributes {dimension_semantics = [#tpu.dimension_semantics<parallel>, #tpu.dimension_semantics<parallel>], iteration_bounds = array<i64: 2, 1>, scalar_prefetch = 0 : i64, scratch_operands = 0 : i64, tpu.core_type = #tpu.core_type<tc>, window_params = [{transform_indices = @transform_0, window_bounds = array<i64: 1, 16, 128>}, {pipeline_mode = #tpu.pipeline_mode<synchronous>, transform_indices = @transform_1, window_bounds = array<i64: 1, 1>}, {transform_indices = @transform_2, window_bounds = array<i64: 1, 16, 128>}, {transform_indices = @transform_3, window_bounds = array<i64: 1, 16, 128>}]} {
    %c0 = arith.constant 0 : index
    %c0_0 = arith.constant 0 : index
    %c0_1 = arith.constant 0 : index
    %0 = vector.load %arg2[%c0, %c0_0, %c0_1] : memref<1x16x128xf32, #tpu.memory_space<vmem>>, vector<1x16x128xf32>
    %1 = vector.shape_cast %0 : vector<1x16x128xf32> to vector<16x128xf32>
    %cst = arith.constant 6.000000e-01 : f32
    %2 = vector.broadcast %cst : f32 to vector<16x128xf32>
    %3 = arith.cmpf oge, %1, %2 : vector<16x128xf32>
    %c0_2 = arith.constant 0 : index
    %c0_3 = arith.constant 0 : index
    %4 = vector.load %arg3[%c0_2, %c0_3] : memref<1x1xf32, #tpu.memory_space<vmem>>, vector<1x1xf32>
    %5 = tpu.reciprocal %4 : vector<1x1xf32> -> vector<1x1xf32>
    %6 = vector.broadcast %5 : vector<1x1xf32> to vector<16x128xf32>
    %7 = arith.mulf %1, %6 : vector<16x128xf32>
    %cst_4 = arith.constant 1.000000e+00 : f32
    %8 = vector.broadcast %cst_4 : f32 to vector<16x128xf32>
    %9 = arith.select %3, %8, %7 : vector<16x128xi1>, vector<16x128xf32>
    %c0_5 = arith.constant 0 : index
    %c0_6 = arith.constant 0 : index
    %c0_7 = arith.constant 0 : index
    %10 = vector.load %arg4[%c0_5, %c0_6, %c0_7] : memref<1x16x128xf32, #tpu.memory_space<vmem>>, vector<1x16x128xf32>
    %11 = vector.shape_cast %10 : vector<1x16x128xf32> to vector<16x128xf32>
    %12 = vector.shape_cast %9 : vector<16x128xf32> to vector<1x16x128xf32>
    tpu.vector_store %arg4[%c0_5, %c0_6, %c0_7], %12 {strides = array<i32>} : memref<1x16x128xf32, #tpu.memory_space<vmem>>, vector<1x16x128xf32>,
    %13 = arith.extui %3 : vector<16x128xi1> to vector<16x128xi8>
    %c0_8 = arith.constant 0 : index
    %c0_9 = arith.constant 0 : index
    %c0_10 = arith.constant 0 : index
    %14 = vector.load %arg5[%c0_8, %c0_9, %c0_10] : memref<1x16x128xi8, #tpu.memory_space<vmem>>, vector<1x16x128xi8>
    %15 = vector.shape_cast %14 : vector<1x16x128xi8> to vector<16x128xi8>
    %16 = vector.shape_cast %13 : vector<16x128xi8> to vector<1x16x128xi8>
    tpu.vector_store %arg5[%c0_8, %c0_9, %c0_10], %16 {strides = array<i32>} : memref<1x16x128xi8, #tpu.memory_space<vmem>>, vector<1x16x128xi8>,
    return
  }
  func.func @transform_0(%arg0: i32, %arg1: i32) -> (i32, i32, i32) {
    %c0_i32 = arith.constant 0 : i32
    %c0_i32_0 = arith.constant 0 : i32
    return %arg0, %arg1, %c0_i32 : i32, i32, i32
  }
  func.func @transform_1(%arg0: i32, %arg1: i32) -> (i32, i32) {
    %c0_i32 = arith.constant 0 : i32
    %c0_i32_0 = arith.constant 0 : i32
    %c0_i32_1 = arith.constant 0 : i32
    return %c0_i32, %c0_i32_0 : i32, i32
  }
  func.func @transform_2(%arg0: i32, %arg1: i32) -> (i32, i32, i32) {
    %c0_i32 = arith.constant 0 : i32
    %c0_i32_0 = arith.constant 0 : i32
    return %arg0, %arg1, %c0_i32 : i32, i32, i32
  }
  func.func @transform_3(%arg0: i32, %arg1: i32) -> (i32, i32, i32) {
    %c0_i32 = arith.constant 0 : i32
    %c0_i32_0 = arith.constant 0 : i32
    return %arg0, %arg1, %c0_i32 : i32, i32, i32
  }
}

module attributes {stable_mosaic.version = 11 : i64} {
  func.func @_nonmask_max_kernel(%arg0: i32, %arg1: i32, %arg2: memref<1x16x128xf32, #tpu.memory_space<vmem>>, %arg3: memref<1x1xf32, #tpu.memory_space<vmem>>) attributes {dimension_semantics = [#tpu.dimension_semantics<arbitrary>, #tpu.dimension_semantics<arbitrary>], iteration_bounds = array<i64: 2, 1>, scalar_prefetch = 0 : i64, scratch_operands = 0 : i64, tpu.core_type = #tpu.core_type<tc>, window_params = [{transform_indices = @transform_0, window_bounds = array<i64: 1, 16, 128>}, {pipeline_mode = #tpu.pipeline_mode<synchronous>, transform_indices = @transform_1, window_bounds = array<i64: 1, 1>}]} {
    %c0 = arith.constant 0 : index
    %c0_0 = arith.constant 0 : index
    %c0_1 = arith.constant 0 : index
    %0 = vector.load %arg2[%c0, %c0_0, %c0_1] : memref<1x16x128xf32, #tpu.memory_space<vmem>>, vector<1x16x128xf32>
    %1 = vector.shape_cast %0 : vector<1x16x128xf32> to vector<16x128xf32>
    %c16_i32 = arith.constant 16 : i32
    %2 = arith.muli %arg1, %c16_i32 : i32
    %3 = tpu.iota {dimensions = array<i32: 0>} : vector<16x128xi32>
    %4 = vector.broadcast %2 : i32 to vector<16x128xi32>
    %5 = arith.addi %4, %3 : vector<16x128xi32>
    %6 = tpu.iota {dimensions = array<i32: 1>} : vector<16x128xi32>
    %c16_i32_2 = arith.constant 16 : i32
    %7 = vector.broadcast %c16_i32_2 : i32 to vector<16x128xi32>
    %8 = arith.cmpi slt, %5, %7 : vector<16x128xi32>
    %c16_i32_3 = arith.constant 16 : i32
    %9 = vector.broadcast %c16_i32_3 : i32 to vector<16x128xi32>
    %10 = arith.cmpi slt, %6, %9 : vector<16x128xi32>
    %11 = arith.andi %8, %10 : vector<16x128xi1>
    %cst = arith.constant 6.000000e-01 : f32
    %12 = vector.broadcast %cst : f32 to vector<16x128xf32>
    %13 = arith.cmpf olt, %1, %12 : vector<16x128xf32>
    %14 = arith.andi %11, %13 : vector<16x128xi1>
    %cst_4 = arith.constant 0xFF800000 : f32
    %15 = vector.broadcast %cst_4 : f32 to vector<16x128xf32>
    %16 = arith.select %14, %1, %15 : vector<16x128xi1>, vector<16x128xf32>
    %17 = vector.shape_cast %16 : vector<16x128xf32> to vector<1x16x128xf32>
    %cst_5 = arith.constant dense<0xFF800000> : vector<1xf32>
    %18 = vector.multi_reduction <maximumf>, %17, %cst_5 [1, 2] : vector<1x16x128xf32> to vector<1xf32>
    %19 = vector.shape_cast %18 : vector<1xf32> to vector<1x1x1xf32>
    %20 = vector.extract %19[0, 0, 0] : f32 from vector<1x1x1xf32>
    %c0_i32 = arith.constant 0 : i32
    %21 = arith.cmpi eq, %arg0, %c0_i32 : i32
    %c0_i32_6 = arith.constant 0 : i32
    %22 = arith.cmpi eq, %arg1, %c0_i32_6 : i32
    %23 = arith.andi %21, %22 : i1
    %24 = arith.extui %23 : i1 to i32
    %c0_i32_7 = arith.constant 0 : i32
    %25 = arith.cmpi ne, %24, %c0_i32_7 : i32
    scf.if %25 {
      %cst_12 = arith.constant 0xFF800000 : f32
      %30 = vector.broadcast %cst_12 : f32 to vector<1x1xf32>
      %c0_13 = arith.constant 0 : index
      %c0_14 = arith.constant 0 : index
      %31 = vector.load %arg3[%c0_13, %c0_14] : memref<1x1xf32, #tpu.memory_space<vmem>>, vector<1x1xf32>
      tpu.vector_store %arg3[%c0_13, %c0_14], %30 {strides = array<i32>} : memref<1x1xf32, #tpu.memory_space<vmem>>, vector<1x1xf32>,
    } else {
    }
    %c0_8 = arith.constant 0 : index
    %c0_9 = arith.constant 0 : index
    %26 = vector.load %arg3[%c0_8, %c0_9] : memref<1x1xf32, #tpu.memory_space<vmem>>, vector<1x1xf32>
    %27 = vector.broadcast %20 : f32 to vector<1x1xf32>
    %28 = arith.maximumf %26, %27 : vector<1x1xf32>
    %c0_10 = arith.constant 0 : index
    %c0_11 = arith.constant 0 : index
    %29 = vector.load %arg3[%c0_10, %c0_11] : memref<1x1xf32, #tpu.memory_space<vmem>>, vector<1x1xf32>
    tpu.vector_store %arg3[%c0_10, %c0_11], %28 {strides = array<i32>} : memref<1x1xf32, #tpu.memory_space<vmem>>, vector<1x1xf32>,
    return
  }
  func.func @transform_0(%arg0: i32, %arg1: i32) -> (i32, i32, i32) {
    %c0_i32 = arith.constant 0 : i32
    %c0_i32_0 = arith.constant 0 : i32
    return %arg0, %arg1, %c0_i32 : i32, i32, i32
  }
  func.func @transform_1(%arg0: i32, %arg1: i32) -> (i32, i32) {
    %c0_i32 = arith.constant 0 : i32
    %c0_i32_0 = arith.constant 0 : i32
    %c0_i32_1 = arith.constant 0 : i32
    return %c0_i32, %c0_i32_0 : i32, i32
  }
}

module attributes {stable_mosaic.version = 11 : i64} {
  func.func @_conv_kernel(%arg0: i32, %arg1: memref<225xf32, #tpu.memory_space<smem>>, %arg2: memref<1x16x16xf32, #tpu.memory_space<vmem>>, %arg3: memref<1x16x128xf32, #tpu.memory_space<vmem>>, %arg4: memref<30x142xf32, #tpu.memory_space<vmem>>) attributes {dimension_semantics = [#tpu.dimension_semantics<parallel>], iteration_bounds = array<i64: 2>, scalar_prefetch = 1 : i64, scratch_operands = 1 : i64, tpu.core_type = #tpu.core_type<tc>, window_params = [{transform_indices = @transform_0, window_bounds = array<i64: 1, 16, 16>}, {transform_indices = @transform_1, window_bounds = array<i64: 1, 16, 128>}]} {
    %cst = arith.constant 0.000000e+00 : f32
    %0 = vector.broadcast %cst : f32 to vector<30x142xf32>
    %c0 = arith.constant 0 : index
    %c0_0 = arith.constant 0 : index
    %1 = vector.load %arg4[%c0, %c0_0] : memref<30x142xf32, #tpu.memory_space<vmem>>, vector<30x142xf32>
    tpu.vector_store %arg4[%c0, %c0_0], %0 {strides = array<i32>} : memref<30x142xf32, #tpu.memory_space<vmem>>, vector<30x142xf32>,
    %c0_1 = arith.constant 0 : index
    %c0_2 = arith.constant 0 : index
    %c0_3 = arith.constant 0 : index
    %2 = vector.load %arg2[%c0_1, %c0_2, %c0_3] : memref<1x16x16xf32, #tpu.memory_space<vmem>>, vector<1x16x16xf32>
    %3 = vector.shape_cast %2 : vector<1x16x16xf32> to vector<16x16xf32>
    %c7 = arith.constant 7 : index
    %c7_4 = arith.constant 7 : index
    %4 = vector.load %arg4[%c7, %c7_4] : memref<30x142xf32, #tpu.memory_space<vmem>>, vector<16x16xf32>
    tpu.vector_store %arg4[%c7, %c7_4], %3 {strides = array<i32>} : memref<30x142xf32, #tpu.memory_space<vmem>>, vector<16x16xf32>,
    %cst_5 = arith.constant 0.000000e+00 : f32
    %5 = vector.broadcast %cst_5 : f32 to vector<16x128xf32>
    %c0_6 = arith.constant 0 : index
    %c0_7 = arith.constant 0 : index
    %6 = vector.load %arg4[%c0_6, %c0_7] : memref<30x142xf32, #tpu.memory_space<vmem>>, vector<16x142xf32>
    %c14 = arith.constant 14 : index
    %c0_8 = arith.constant 0 : index
    %7 = vector.load %arg4[%c14, %c0_8] : memref<30x142xf32, #tpu.memory_space<vmem>>, vector<16x142xf32>
    %8 = arith.addf %6, %7 : vector<16x142xf32>
    %9 = vector.extract_strided_slice %8 {offsets = [0, 0], sizes = [16, 128], strides = [1, 1]} : vector<16x142xf32> to vector<16x128xf32>
    %10 = vector.extract_strided_slice %8 {offsets = [0, 14], sizes = [16, 128], strides = [1, 1]} : vector<16x142xf32> to vector<16x128xf32>
    %11 = arith.addf %9, %10 : vector<16x128xf32>
    %c0_9 = arith.constant 0 : index
    %12 = memref.load %arg1[%c0_9] : memref<225xf32, #tpu.memory_space<smem>>
    %13 = vector.broadcast %12 : f32 to vector<16x128xf32>
    %14 = arith.mulf %13, %11 : vector<16x128xf32>
    %15 = arith.addf %5, %14 : vector<16x128xf32>
    %16 = vector.extract_strided_slice %8 {offsets = [0, 1], sizes = [16, 128], strides = [1, 1]} : vector<16x142xf32> to vector<16x128xf32>
    %17 = vector.extract_strided_slice %8 {offsets = [0, 13], sizes = [16, 128], strides = [1, 1]} : vector<16x142xf32> to vector<16x128xf32>
    %18 = arith.addf %16, %17 : vector<16x128xf32>
    %c1 = arith.constant 1 : index
    %19 = memref.load %arg1[%c1] : memref<225xf32, #tpu.memory_space<smem>>
    %20 = vector.broadcast %19 : f32 to vector<16x128xf32>
    %21 = arith.mulf %20, %18 : vector<16x128xf32>
    %22 = arith.addf %15, %21 : vector<16x128xf32>
    %23 = vector.extract_strided_slice %8 {offsets = [0, 2], sizes = [16, 128], strides = [1, 1]} : vector<16x142xf32> to vector<16x128xf32>
    %24 = vector.extract_strided_slice %8 {offsets = [0, 12], sizes = [16, 128], strides = [1, 1]} : vector<16x142xf32> to vector<16x128xf32>
    %25 = arith.addf %23, %24 : vector<16x128xf32>
    %c2 = arith.constant 2 : index
    %26 = memref.load %arg1[%c2] : memref<225xf32, #tpu.memory_space<smem>>
    %27 = vector.broadcast %26 : f32 to vector<16x128xf32>
    %28 = arith.mulf %27, %25 : vector<16x128xf32>
    %29 = arith.addf %22, %28 : vector<16x128xf32>
    %30 = vector.extract_strided_slice %8 {offsets = [0, 3], sizes = [16, 128], strides = [1, 1]} : vector<16x142xf32> to vector<16x128xf32>
    %31 = vector.extract_strided_slice %8 {offsets = [0, 11], sizes = [16, 128], strides = [1, 1]} : vector<16x142xf32> to vector<16x128xf32>
    %32 = arith.addf %30, %31 : vector<16x128xf32>
    %c3 = arith.constant 3 : index
    %33 = memref.load %arg1[%c3] : memref<225xf32, #tpu.memory_space<smem>>
    %34 = vector.broadcast %33 : f32 to vector<16x128xf32>
    %35 = arith.mulf %34, %32 : vector<16x128xf32>
    %36 = arith.addf %29, %35 : vector<16x128xf32>
    %37 = vector.extract_strided_slice %8 {offsets = [0, 4], sizes = [16, 128], strides = [1, 1]} : vector<16x142xf32> to vector<16x128xf32>
    %38 = vector.extract_strided_slice %8 {offsets = [0, 10], sizes = [16, 128], strides = [1, 1]} : vector<16x142xf32> to vector<16x128xf32>
    %39 = arith.addf %37, %38 : vector<16x128xf32>
    %c4 = arith.constant 4 : index
    %40 = memref.load %arg1[%c4] : memref<225xf32, #tpu.memory_space<smem>>
    %41 = vector.broadcast %40 : f32 to vector<16x128xf32>
    %42 = arith.mulf %41, %39 : vector<16x128xf32>
    %43 = arith.addf %36, %42 : vector<16x128xf32>
    %44 = vector.extract_strided_slice %8 {offsets = [0, 5], sizes = [16, 128], strides = [1, 1]} : vector<16x142xf32> to vector<16x128xf32>
    %45 = vector.extract_strided_slice %8 {offsets = [0, 9], sizes = [16, 128], strides = [1, 1]} : vector<16x142xf32> to vector<16x128xf32>
    %46 = arith.addf %44, %45 : vector<16x128xf32>
    %c5 = arith.constant 5 : index
    %47 = memref.load %arg1[%c5] : memref<225xf32, #tpu.memory_space<smem>>
    %48 = vector.broadcast %47 : f32 to vector<16x128xf32>
    %49 = arith.mulf %48, %46 : vector<16x128xf32>
    %50 = arith.addf %43, %49 : vector<16x128xf32>
    %51 = vector.extract_strided_slice %8 {offsets = [0, 6], sizes = [16, 128], strides = [1, 1]} : vector<16x142xf32> to vector<16x128xf32>
    %52 = vector.extract_strided_slice %8 {offsets = [0, 8], sizes = [16, 128], strides = [1, 1]} : vector<16x142xf32> to vector<16x128xf32>
    %53 = arith.addf %51, %52 : vector<16x128xf32>
    %c6 = arith.constant 6 : index
    %54 = memref.load %arg1[%c6] : memref<225xf32, #tpu.memory_space<smem>>
    %55 = vector.broadcast %54 : f32 to vector<16x128xf32>
    %56 = arith.mulf %55, %53 : vector<16x128xf32>
    %57 = arith.addf %50, %56 : vector<16x128xf32>
    %58 = vector.extract_strided_slice %8 {offsets = [0, 7], sizes = [16, 128], strides = [1, 1]} : vector<16x142xf32> to vector<16x128xf32>
    %c7_10 = arith.constant 7 : index
    %59 = memref.load %arg1[%c7_10] : memref<225xf32, #tpu.memory_space<smem>>
    %60 = vector.broadcast %59 : f32 to vector<16x128xf32>
    %61 = arith.mulf %60, %58 : vector<16x128xf32>
    %62 = arith.addf %57, %61 : vector<16x128xf32>
    %c1_11 = arith.constant 1 : index
    %c0_12 = arith.constant 0 : index
    %63 = vector.load %arg4[%c1_11, %c0_12] : memref<30x142xf32, #tpu.memory_space<vmem>>, vector<16x142xf32>
    %c13 = arith.constant 13 : index
    %c0_13 = arith.constant 0 : index
    %64 = vector.load %arg4[%c13, %c0_13] : memref<30x142xf32, #tpu.memory_space<vmem>>, vector<16x142xf32>
    %65 = arith.addf %63, %64 : vector<16x142xf32>
    %66 = vector.extract_strided_slice %65 {offsets = [0, 0], sizes = [16, 128], strides = [1, 1]} : vector<16x142xf32> to vector<16x128xf32>
    %67 = vector.extract_strided_slice %65 {offsets = [0, 14], sizes = [16, 128], strides = [1, 1]} : vector<16x142xf32> to vector<16x128xf32>
    %68 = arith.addf %66, %67 : vector<16x128xf32>
    %c15 = arith.constant 15 : index
    %69 = memref.load %arg1[%c15] : memref<225xf32, #tpu.memory_space<smem>>
    %70 = vector.broadcast %69 : f32 to vector<16x128xf32>
    %71 = arith.mulf %70, %68 : vector<16x128xf32>
    %72 = arith.addf %62, %71 : vector<16x128xf32>
    %73 = vector.extract_strided_slice %65 {offsets = [0, 1], sizes = [16, 128], strides = [1, 1]} : vector<16x142xf32> to vector<16x128xf32>
    %74 = vector.extract_strided_slice %65 {offsets = [0, 13], sizes = [16, 128], strides = [1, 1]} : vector<16x142xf32> to vector<16x128xf32>
    %75 = arith.addf %73, %74 : vector<16x128xf32>
    %c16 = arith.constant 16 : index
    %76 = memref.load %arg1[%c16] : memref<225xf32, #tpu.memory_space<smem>>
    %77 = vector.broadcast %76 : f32 to vector<16x128xf32>
    %78 = arith.mulf %77, %75 : vector<16x128xf32>
    %79 = arith.addf %72, %78 : vector<16x128xf32>
    %80 = vector.extract_strided_slice %65 {offsets = [0, 2], sizes = [16, 128], strides = [1, 1]} : vector<16x142xf32> to vector<16x128xf32>
    %81 = vector.extract_strided_slice %65 {offsets = [0, 12], sizes = [16, 128], strides = [1, 1]} : vector<16x142xf32> to vector<16x128xf32>
    %82 = arith.addf %80, %81 : vector<16x128xf32>
    %c17 = arith.constant 17 : index
    %83 = memref.load %arg1[%c17] : memref<225xf32, #tpu.memory_space<smem>>
    %84 = vector.broadcast %83 : f32 to vector<16x128xf32>
    %85 = arith.mulf %84, %82 : vector<16x128xf32>
    %86 = arith.addf %79, %85 : vector<16x128xf32>
    %87 = vector.extract_strided_slice %65 {offsets = [0, 3], sizes = [16, 128], strides = [1, 1]} : vector<16x142xf32> to vector<16x128xf32>
    %88 = vector.extract_strided_slice %65 {offsets = [0, 11], sizes = [16, 128], strides = [1, 1]} : vector<16x142xf32> to vector<16x128xf32>
    %89 = arith.addf %87, %88 : vector<16x128xf32>
    %c18 = arith.constant 18 : index
    %90 = memref.load %arg1[%c18] : memref<225xf32, #tpu.memory_space<smem>>
    %91 = vector.broadcast %90 : f32 to vector<16x128xf32>
    %92 = arith.mulf %91, %89 : vector<16x128xf32>
    %93 = arith.addf %86, %92 : vector<16x128xf32>
    %94 = vector.extract_strided_slice %65 {offsets = [0, 4], sizes = [16, 128], strides = [1, 1]} : vector<16x142xf32> to vector<16x128xf32>
    %95 = vector.extract_strided_slice %65 {offsets = [0, 10], sizes = [16, 128], strides = [1, 1]} : vector<16x142xf32> to vector<16x128xf32>
    %96 = arith.addf %94, %95 : vector<16x128xf32>
    %c19 = arith.constant 19 : index
    %97 = memref.load %arg1[%c19] : memref<225xf32, #tpu.memory_space<smem>>
    %98 = vector.broadcast %97 : f32 to vector<16x128xf32>
    %99 = arith.mulf %98, %96 : vector<16x128xf32>
    %100 = arith.addf %93, %99 : vector<16x128xf32>
    %101 = vector.extract_strided_slice %65 {offsets = [0, 5], sizes = [16, 128], strides = [1, 1]} : vector<16x142xf32> to vector<16x128xf32>
    %102 = vector.extract_strided_slice %65 {offsets = [0, 9], sizes = [16, 128], strides = [1, 1]} : vector<16x142xf32> to vector<16x128xf32>
    %103 = arith.addf %101, %102 : vector<16x128xf32>
    %c20 = arith.constant 20 : index
    %104 = memref.load %arg1[%c20] : memref<225xf32, #tpu.memory_space<smem>>
    %105 = vector.broadcast %104 : f32 to vector<16x128xf32>
    %106 = arith.mulf %105, %103 : vector<16x128xf32>
    %107 = arith.addf %100, %106 : vector<16x128xf32>
    %108 = vector.extract_strided_slice %65 {offsets = [0, 6], sizes = [16, 128], strides = [1, 1]} : vector<16x142xf32> to vector<16x128xf32>
    %109 = vector.extract_strided_slice %65 {offsets = [0, 8], sizes = [16, 128], strides = [1, 1]} : vector<16x142xf32> to vector<16x128xf32>
    %110 = arith.addf %108, %109 : vector<16x128xf32>
    %c21 = arith.constant 21 : index
    %111 = memref.load %arg1[%c21] : memref<225xf32, #tpu.memory_space<smem>>
    %112 = vector.broadcast %111 : f32 to vector<16x128xf32>
    %113 = arith.mulf %112, %110 : vector<16x128xf32>
    %114 = arith.addf %107, %113 : vector<16x128xf32>
    %115 = vector.extract_strided_slice %65 {offsets = [0, 7], sizes = [16, 128], strides = [1, 1]} : vector<16x142xf32> to vector<16x128xf32>
    %c22 = arith.constant 22 : index
    %116 = memref.load %arg1[%c22] : memref<225xf32, #tpu.memory_space<smem>>
    %117 = vector.broadcast %116 : f32 to vector<16x128xf32>
    %118 = arith.mulf %117, %115 : vector<16x128xf32>
    %119 = arith.addf %114, %118 : vector<16x128xf32>
    %c2_14 = arith.constant 2 : index
    %c0_15 = arith.constant 0 : index
    %120 = vector.load %arg4[%c2_14, %c0_15] : memref<30x142xf32, #tpu.memory_space<vmem>>, vector<16x142xf32>
    %c12 = arith.constant 12 : index
    %c0_16 = arith.constant 0 : index
    %121 = vector.load %arg4[%c12, %c0_16] : memref<30x142xf32, #tpu.memory_space<vmem>>, vector<16x142xf32>
    %122 = arith.addf %120, %121 : vector<16x142xf32>
    %123 = vector.extract_strided_slice %122 {offsets = [0, 0], sizes = [16, 128], strides = [1, 1]} : vector<16x142xf32> to vector<16x128xf32>
    %124 = vector.extract_strided_slice %122 {offsets = [0, 14], sizes = [16, 128], strides = [1, 1]} : vector<16x142xf32> to vector<16x128xf32>
    %125 = arith.addf %123, %124 : vector<16x128xf32>
    %c30 = arith.constant 30 : index
    %126 = memref.load %arg1[%c30] : memref<225xf32, #tpu.memory_space<smem>>
    %127 = vector.broadcast %126 : f32 to vector<16x128xf32>
    %128 = arith.mulf %127, %125 : vector<16x128xf32>
    %129 = arith.addf %119, %128 : vector<16x128xf32>
    %130 = vector.extract_strided_slice %122 {offsets = [0, 1], sizes = [16, 128], strides = [1, 1]} : vector<16x142xf32> to vector<16x128xf32>
    %131 = vector.extract_strided_slice %122 {offsets = [0, 13], sizes = [16, 128], strides = [1, 1]} : vector<16x142xf32> to vector<16x128xf32>
    %132 = arith.addf %130, %131 : vector<16x128xf32>
    %c31 = arith.constant 31 : index
    %133 = memref.load %arg1[%c31] : memref<225xf32, #tpu.memory_space<smem>>
    %134 = vector.broadcast %133 : f32 to vector<16x128xf32>
    %135 = arith.mulf %134, %132 : vector<16x128xf32>
    %136 = arith.addf %129, %135 : vector<16x128xf32>
    %137 = vector.extract_strided_slice %122 {offsets = [0, 2], sizes = [16, 128], strides = [1, 1]} : vector<16x142xf32> to vector<16x128xf32>
    %138 = vector.extract_strided_slice %122 {offsets = [0, 12], sizes = [16, 128], strides = [1, 1]} : vector<16x142xf32> to vector<16x128xf32>
    %139 = arith.addf %137, %138 : vector<16x128xf32>
    %c32 = arith.constant 32 : index
    %140 = memref.load %arg1[%c32] : memref<225xf32, #tpu.memory_space<smem>>
    %141 = vector.broadcast %140 : f32 to vector<16x128xf32>
    %142 = arith.mulf %141, %139 : vector<16x128xf32>
    %143 = arith.addf %136, %142 : vector<16x128xf32>
    %144 = vector.extract_strided_slice %122 {offsets = [0, 3], sizes = [16, 128], strides = [1, 1]} : vector<16x142xf32> to vector<16x128xf32>
    %145 = vector.extract_strided_slice %122 {offsets = [0, 11], sizes = [16, 128], strides = [1, 1]} : vector<16x142xf32> to vector<16x128xf32>
    %146 = arith.addf %144, %145 : vector<16x128xf32>
    %c33 = arith.constant 33 : index
    %147 = memref.load %arg1[%c33] : memref<225xf32, #tpu.memory_space<smem>>
    %148 = vector.broadcast %147 : f32 to vector<16x128xf32>
    %149 = arith.mulf %148, %146 : vector<16x128xf32>
    %150 = arith.addf %143, %149 : vector<16x128xf32>
    %151 = vector.extract_strided_slice %122 {offsets = [0, 4], sizes = [16, 128], strides = [1, 1]} : vector<16x142xf32> to vector<16x128xf32>
    %152 = vector.extract_strided_slice %122 {offsets = [0, 10], sizes = [16, 128], strides = [1, 1]} : vector<16x142xf32> to vector<16x128xf32>
    %153 = arith.addf %151, %152 : vector<16x128xf32>
    %c34 = arith.constant 34 : index
    %154 = memref.load %arg1[%c34] : memref<225xf32, #tpu.memory_space<smem>>
    %155 = vector.broadcast %154 : f32 to vector<16x128xf32>
    %156 = arith.mulf %155, %153 : vector<16x128xf32>
    %157 = arith.addf %150, %156 : vector<16x128xf32>
    %158 = vector.extract_strided_slice %122 {offsets = [0, 5], sizes = [16, 128], strides = [1, 1]} : vector<16x142xf32> to vector<16x128xf32>
    %159 = vector.extract_strided_slice %122 {offsets = [0, 9], sizes = [16, 128], strides = [1, 1]} : vector<16x142xf32> to vector<16x128xf32>
    %160 = arith.addf %158, %159 : vector<16x128xf32>
    %c35 = arith.constant 35 : index
    %161 = memref.load %arg1[%c35] : memref<225xf32, #tpu.memory_space<smem>>
    %162 = vector.broadcast %161 : f32 to vector<16x128xf32>
    %163 = arith.mulf %162, %160 : vector<16x128xf32>
    %164 = arith.addf %157, %163 : vector<16x128xf32>
    %165 = vector.extract_strided_slice %122 {offsets = [0, 6], sizes = [16, 128], strides = [1, 1]} : vector<16x142xf32> to vector<16x128xf32>
    %166 = vector.extract_strided_slice %122 {offsets = [0, 8], sizes = [16, 128], strides = [1, 1]} : vector<16x142xf32> to vector<16x128xf32>
    %167 = arith.addf %165, %166 : vector<16x128xf32>
    %c36 = arith.constant 36 : index
    %168 = memref.load %arg1[%c36] : memref<225xf32, #tpu.memory_space<smem>>
    %169 = vector.broadcast %168 : f32 to vector<16x128xf32>
    %170 = arith.mulf %169, %167 : vector<16x128xf32>
    %171 = arith.addf %164, %170 : vector<16x128xf32>
    %172 = vector.extract_strided_slice %122 {offsets = [0, 7], sizes = [16, 128], strides = [1, 1]} : vector<16x142xf32> to vector<16x128xf32>
    %c37 = arith.constant 37 : index
    %173 = memref.load %arg1[%c37] : memref<225xf32, #tpu.memory_space<smem>>
    %174 = vector.broadcast %173 : f32 to vector<16x128xf32>
    %175 = arith.mulf %174, %172 : vector<16x128xf32>
    %176 = arith.addf %171, %175 : vector<16x128xf32>
    %c3_17 = arith.constant 3 : index
    %c0_18 = arith.constant 0 : index
    %177 = vector.load %arg4[%c3_17, %c0_18] : memref<30x142xf32, #tpu.memory_space<vmem>>, vector<16x142xf32>
    %c11 = arith.constant 11 : index
    %c0_19 = arith.constant 0 : index
    %178 = vector.load %arg4[%c11, %c0_19] : memref<30x142xf32, #tpu.memory_space<vmem>>, vector<16x142xf32>
    %179 = arith.addf %177, %178 : vector<16x142xf32>
    %180 = vector.extract_strided_slice %179 {offsets = [0, 0], sizes = [16, 128], strides = [1, 1]} : vector<16x142xf32> to vector<16x128xf32>
    %181 = vector.extract_strided_slice %179 {offsets = [0, 14], sizes = [16, 128], strides = [1, 1]} : vector<16x142xf32> to vector<16x128xf32>
    %182 = arith.addf %180, %181 : vector<16x128xf32>
    %c45 = arith.constant 45 : index
    %183 = memref.load %arg1[%c45] : memref<225xf32, #tpu.memory_space<smem>>
    %184 = vector.broadcast %183 : f32 to vector<16x128xf32>
    %185 = arith.mulf %184, %182 : vector<16x128xf32>
    %186 = arith.addf %176, %185 : vector<16x128xf32>
    %187 = vector.extract_strided_slice %179 {offsets = [0, 1], sizes = [16, 128], strides = [1, 1]} : vector<16x142xf32> to vector<16x128xf32>
    %188 = vector.extract_strided_slice %179 {offsets = [0, 13], sizes = [16, 128], strides = [1, 1]} : vector<16x142xf32> to vector<16x128xf32>
    %189 = arith.addf %187, %188 : vector<16x128xf32>
    %c46 = arith.constant 46 : index
    %190 = memref.load %arg1[%c46] : memref<225xf32, #tpu.memory_space<smem>>
    %191 = vector.broadcast %190 : f32 to vector<16x128xf32>
    %192 = arith.mulf %191, %189 : vector<16x128xf32>
    %193 = arith.addf %186, %192 : vector<16x128xf32>
    %194 = vector.extract_strided_slice %179 {offsets = [0, 2], sizes = [16, 128], strides = [1, 1]} : vector<16x142xf32> to vector<16x128xf32>
    %195 = vector.extract_strided_slice %179 {offsets = [0, 12], sizes = [16, 128], strides = [1, 1]} : vector<16x142xf32> to vector<16x128xf32>
    %196 = arith.addf %194, %195 : vector<16x128xf32>
    %c47 = arith.constant 47 : index
    %197 = memref.load %arg1[%c47] : memref<225xf32, #tpu.memory_space<smem>>
    %198 = vector.broadcast %197 : f32 to vector<16x128xf32>
    %199 = arith.mulf %198, %196 : vector<16x128xf32>
    %200 = arith.addf %193, %199 : vector<16x128xf32>
    %201 = vector.extract_strided_slice %179 {offsets = [0, 3], sizes = [16, 128], strides = [1, 1]} : vector<16x142xf32> to vector<16x128xf32>
    %202 = vector.extract_strided_slice %179 {offsets = [0, 11], sizes = [16, 128], strides = [1, 1]} : vector<16x142xf32> to vector<16x128xf32>
    %203 = arith.addf %201, %202 : vector<16x128xf32>
    %c48 = arith.constant 48 : index
    %204 = memref.load %arg1[%c48] : memref<225xf32, #tpu.memory_space<smem>>
    %205 = vector.broadcast %204 : f32 to vector<16x128xf32>
    %206 = arith.mulf %205, %203 : vector<16x128xf32>
    %207 = arith.addf %200, %206 : vector<16x128xf32>
    %208 = vector.extract_strided_slice %179 {offsets = [0, 4], sizes = [16, 128], strides = [1, 1]} : vector<16x142xf32> to vector<16x128xf32>
    %209 = vector.extract_strided_slice %179 {offsets = [0, 10], sizes = [16, 128], strides = [1, 1]} : vector<16x142xf32> to vector<16x128xf32>
    %210 = arith.addf %208, %209 : vector<16x128xf32>
    %c49 = arith.constant 49 : index
    %211 = memref.load %arg1[%c49] : memref<225xf32, #tpu.memory_space<smem>>
    %212 = vector.broadcast %211 : f32 to vector<16x128xf32>
    %213 = arith.mulf %212, %210 : vector<16x128xf32>
    %214 = arith.addf %207, %213 : vector<16x128xf32>
    %215 = vector.extract_strided_slice %179 {offsets = [0, 5], sizes = [16, 128], strides = [1, 1]} : vector<16x142xf32> to vector<16x128xf32>
    %216 = vector.extract_strided_slice %179 {offsets = [0, 9], sizes = [16, 128], strides = [1, 1]} : vector<16x142xf32> to vector<16x128xf32>
    %217 = arith.addf %215, %216 : vector<16x128xf32>
    %c50 = arith.constant 50 : index
    %218 = memref.load %arg1[%c50] : memref<225xf32, #tpu.memory_space<smem>>
    %219 = vector.broadcast %218 : f32 to vector<16x128xf32>
    %220 = arith.mulf %219, %217 : vector<16x128xf32>
    %221 = arith.addf %214, %220 : vector<16x128xf32>
    %222 = vector.extract_strided_slice %179 {offsets = [0, 6], sizes = [16, 128], strides = [1, 1]} : vector<16x142xf32> to vector<16x128xf32>
    %223 = vector.extract_strided_slice %179 {offsets = [0, 8], sizes = [16, 128], strides = [1, 1]} : vector<16x142xf32> to vector<16x128xf32>
    %224 = arith.addf %222, %223 : vector<16x128xf32>
    %c51 = arith.constant 51 : index
    %225 = memref.load %arg1[%c51] : memref<225xf32, #tpu.memory_space<smem>>
    %226 = vector.broadcast %225 : f32 to vector<16x128xf32>
    %227 = arith.mulf %226, %224 : vector<16x128xf32>
    %228 = arith.addf %221, %227 : vector<16x128xf32>
    %229 = vector.extract_strided_slice %179 {offsets = [0, 7], sizes = [16, 128], strides = [1, 1]} : vector<16x142xf32> to vector<16x128xf32>
    %c52 = arith.constant 52 : index
    %230 = memref.load %arg1[%c52] : memref<225xf32, #tpu.memory_space<smem>>
    %231 = vector.broadcast %230 : f32 to vector<16x128xf32>
    %232 = arith.mulf %231, %229 : vector<16x128xf32>
    %233 = arith.addf %228, %232 : vector<16x128xf32>
    %c4_20 = arith.constant 4 : index
    %c0_21 = arith.constant 0 : index
    %234 = vector.load %arg4[%c4_20, %c0_21] : memref<30x142xf32, #tpu.memory_space<vmem>>, vector<16x142xf32>
    %c10 = arith.constant 10 : index
    %c0_22 = arith.constant 0 : index
    %235 = vector.load %arg4[%c10, %c0_22] : memref<30x142xf32, #tpu.memory_space<vmem>>, vector<16x142xf32>
    %236 = arith.addf %234, %235 : vector<16x142xf32>
    %237 = vector.extract_strided_slice %236 {offsets = [0, 0], sizes = [16, 128], strides = [1, 1]} : vector<16x142xf32> to vector<16x128xf32>
    %238 = vector.extract_strided_slice %236 {offsets = [0, 14], sizes = [16, 128], strides = [1, 1]} : vector<16x142xf32> to vector<16x128xf32>
    %239 = arith.addf %237, %238 : vector<16x128xf32>
    %c60 = arith.constant 60 : index
    %240 = memref.load %arg1[%c60] : memref<225xf32, #tpu.memory_space<smem>>
    %241 = vector.broadcast %240 : f32 to vector<16x128xf32>
    %242 = arith.mulf %241, %239 : vector<16x128xf32>
    %243 = arith.addf %233, %242 : vector<16x128xf32>
    %244 = vector.extract_strided_slice %236 {offsets = [0, 1], sizes = [16, 128], strides = [1, 1]} : vector<16x142xf32> to vector<16x128xf32>
    %245 = vector.extract_strided_slice %236 {offsets = [0, 13], sizes = [16, 128], strides = [1, 1]} : vector<16x142xf32> to vector<16x128xf32>
    %246 = arith.addf %244, %245 : vector<16x128xf32>
    %c61 = arith.constant 61 : index
    %247 = memref.load %arg1[%c61] : memref<225xf32, #tpu.memory_space<smem>>
    %248 = vector.broadcast %247 : f32 to vector<16x128xf32>
    %249 = arith.mulf %248, %246 : vector<16x128xf32>
    %250 = arith.addf %243, %249 : vector<16x128xf32>
    %251 = vector.extract_strided_slice %236 {offsets = [0, 2], sizes = [16, 128], strides = [1, 1]} : vector<16x142xf32> to vector<16x128xf32>
    %252 = vector.extract_strided_slice %236 {offsets = [0, 12], sizes = [16, 128], strides = [1, 1]} : vector<16x142xf32> to vector<16x128xf32>
    %253 = arith.addf %251, %252 : vector<16x128xf32>
    %c62 = arith.constant 62 : index
    %254 = memref.load %arg1[%c62] : memref<225xf32, #tpu.memory_space<smem>>
    %255 = vector.broadcast %254 : f32 to vector<16x128xf32>
    %256 = arith.mulf %255, %253 : vector<16x128xf32>
    %257 = arith.addf %250, %256 : vector<16x128xf32>
    %258 = vector.extract_strided_slice %236 {offsets = [0, 3], sizes = [16, 128], strides = [1, 1]} : vector<16x142xf32> to vector<16x128xf32>
    %259 = vector.extract_strided_slice %236 {offsets = [0, 11], sizes = [16, 128], strides = [1, 1]} : vector<16x142xf32> to vector<16x128xf32>
    %260 = arith.addf %258, %259 : vector<16x128xf32>
    %c63 = arith.constant 63 : index
    %261 = memref.load %arg1[%c63] : memref<225xf32, #tpu.memory_space<smem>>
    %262 = vector.broadcast %261 : f32 to vector<16x128xf32>
    %263 = arith.mulf %262, %260 : vector<16x128xf32>
    %264 = arith.addf %257, %263 : vector<16x128xf32>
    %265 = vector.extract_strided_slice %236 {offsets = [0, 4], sizes = [16, 128], strides = [1, 1]} : vector<16x142xf32> to vector<16x128xf32>
    %266 = vector.extract_strided_slice %236 {offsets = [0, 10], sizes = [16, 128], strides = [1, 1]} : vector<16x142xf32> to vector<16x128xf32>
    %267 = arith.addf %265, %266 : vector<16x128xf32>
    %c64 = arith.constant 64 : index
    %268 = memref.load %arg1[%c64] : memref<225xf32, #tpu.memory_space<smem>>
    %269 = vector.broadcast %268 : f32 to vector<16x128xf32>
    %270 = arith.mulf %269, %267 : vector<16x128xf32>
    %271 = arith.addf %264, %270 : vector<16x128xf32>
    %272 = vector.extract_strided_slice %236 {offsets = [0, 5], sizes = [16, 128], strides = [1, 1]} : vector<16x142xf32> to vector<16x128xf32>
    %273 = vector.extract_strided_slice %236 {offsets = [0, 9], sizes = [16, 128], strides = [1, 1]} : vector<16x142xf32> to vector<16x128xf32>
    %274 = arith.addf %272, %273 : vector<16x128xf32>
    %c65 = arith.constant 65 : index
    %275 = memref.load %arg1[%c65] : memref<225xf32, #tpu.memory_space<smem>>
    %276 = vector.broadcast %275 : f32 to vector<16x128xf32>
    %277 = arith.mulf %276, %274 : vector<16x128xf32>
    %278 = arith.addf %271, %277 : vector<16x128xf32>
    %279 = vector.extract_strided_slice %236 {offsets = [0, 6], sizes = [16, 128], strides = [1, 1]} : vector<16x142xf32> to vector<16x128xf32>
    %280 = vector.extract_strided_slice %236 {offsets = [0, 8], sizes = [16, 128], strides = [1, 1]} : vector<16x142xf32> to vector<16x128xf32>
    %281 = arith.addf %279, %280 : vector<16x128xf32>
    %c66 = arith.constant 66 : index
    %282 = memref.load %arg1[%c66] : memref<225xf32, #tpu.memory_space<smem>>
    %283 = vector.broadcast %282 : f32 to vector<16x128xf32>
    %284 = arith.mulf %283, %281 : vector<16x128xf32>
    %285 = arith.addf %278, %284 : vector<16x128xf32>
    %286 = vector.extract_strided_slice %236 {offsets = [0, 7], sizes = [16, 128], strides = [1, 1]} : vector<16x142xf32> to vector<16x128xf32>
    %c67 = arith.constant 67 : index
    %287 = memref.load %arg1[%c67] : memref<225xf32, #tpu.memory_space<smem>>
    %288 = vector.broadcast %287 : f32 to vector<16x128xf32>
    %289 = arith.mulf %288, %286 : vector<16x128xf32>
    %290 = arith.addf %285, %289 : vector<16x128xf32>
    %c5_23 = arith.constant 5 : index
    %c0_24 = arith.constant 0 : index
    %291 = vector.load %arg4[%c5_23, %c0_24] : memref<30x142xf32, #tpu.memory_space<vmem>>, vector<16x142xf32>
    %c9 = arith.constant 9 : index
    %c0_25 = arith.constant 0 : index
    %292 = vector.load %arg4[%c9, %c0_25] : memref<30x142xf32, #tpu.memory_space<vmem>>, vector<16x142xf32>
    %293 = arith.addf %291, %292 : vector<16x142xf32>
    %294 = vector.extract_strided_slice %293 {offsets = [0, 0], sizes = [16, 128], strides = [1, 1]} : vector<16x142xf32> to vector<16x128xf32>
    %295 = vector.extract_strided_slice %293 {offsets = [0, 14], sizes = [16, 128], strides = [1, 1]} : vector<16x142xf32> to vector<16x128xf32>
    %296 = arith.addf %294, %295 : vector<16x128xf32>
    %c75 = arith.constant 75 : index
    %297 = memref.load %arg1[%c75] : memref<225xf32, #tpu.memory_space<smem>>
    %298 = vector.broadcast %297 : f32 to vector<16x128xf32>
    %299 = arith.mulf %298, %296 : vector<16x128xf32>
    %300 = arith.addf %290, %299 : vector<16x128xf32>
    %301 = vector.extract_strided_slice %293 {offsets = [0, 1], sizes = [16, 128], strides = [1, 1]} : vector<16x142xf32> to vector<16x128xf32>
    %302 = vector.extract_strided_slice %293 {offsets = [0, 13], sizes = [16, 128], strides = [1, 1]} : vector<16x142xf32> to vector<16x128xf32>
    %303 = arith.addf %301, %302 : vector<16x128xf32>
    %c76 = arith.constant 76 : index
    %304 = memref.load %arg1[%c76] : memref<225xf32, #tpu.memory_space<smem>>
    %305 = vector.broadcast %304 : f32 to vector<16x128xf32>
    %306 = arith.mulf %305, %303 : vector<16x128xf32>
    %307 = arith.addf %300, %306 : vector<16x128xf32>
    %308 = vector.extract_strided_slice %293 {offsets = [0, 2], sizes = [16, 128], strides = [1, 1]} : vector<16x142xf32> to vector<16x128xf32>
    %309 = vector.extract_strided_slice %293 {offsets = [0, 12], sizes = [16, 128], strides = [1, 1]} : vector<16x142xf32> to vector<16x128xf32>
    %310 = arith.addf %308, %309 : vector<16x128xf32>
    %c77 = arith.constant 77 : index
    %311 = memref.load %arg1[%c77] : memref<225xf32, #tpu.memory_space<smem>>
    %312 = vector.broadcast %311 : f32 to vector<16x128xf32>
    %313 = arith.mulf %312, %310 : vector<16x128xf32>
    %314 = arith.addf %307, %313 : vector<16x128xf32>
    %315 = vector.extract_strided_slice %293 {offsets = [0, 3], sizes = [16, 128], strides = [1, 1]} : vector<16x142xf32> to vector<16x128xf32>
    %316 = vector.extract_strided_slice %293 {offsets = [0, 11], sizes = [16, 128], strides = [1, 1]} : vector<16x142xf32> to vector<16x128xf32>
    %317 = arith.addf %315, %316 : vector<16x128xf32>
    %c78 = arith.constant 78 : index
    %318 = memref.load %arg1[%c78] : memref<225xf32, #tpu.memory_space<smem>>
    %319 = vector.broadcast %318 : f32 to vector<16x128xf32>
    %320 = arith.mulf %319, %317 : vector<16x128xf32>
    %321 = arith.addf %314, %320 : vector<16x128xf32>
    %322 = vector.extract_strided_slice %293 {offsets = [0, 4], sizes = [16, 128], strides = [1, 1]} : vector<16x142xf32> to vector<16x128xf32>
    %323 = vector.extract_strided_slice %293 {offsets = [0, 10], sizes = [16, 128], strides = [1, 1]} : vector<16x142xf32> to vector<16x128xf32>
    %324 = arith.addf %322, %323 : vector<16x128xf32>
    %c79 = arith.constant 79 : index
    %325 = memref.load %arg1[%c79] : memref<225xf32, #tpu.memory_space<smem>>
    %326 = vector.broadcast %325 : f32 to vector<16x128xf32>
    %327 = arith.mulf %326, %324 : vector<16x128xf32>
    %328 = arith.addf %321, %327 : vector<16x128xf32>
    %329 = vector.extract_strided_slice %293 {offsets = [0, 5], sizes = [16, 128], strides = [1, 1]} : vector<16x142xf32> to vector<16x128xf32>
    %330 = vector.extract_strided_slice %293 {offsets = [0, 9], sizes = [16, 128], strides = [1, 1]} : vector<16x142xf32> to vector<16x128xf32>
    %331 = arith.addf %329, %330 : vector<16x128xf32>
    %c80 = arith.constant 80 : index
    %332 = memref.load %arg1[%c80] : memref<225xf32, #tpu.memory_space<smem>>
    %333 = vector.broadcast %332 : f32 to vector<16x128xf32>
    %334 = arith.mulf %333, %331 : vector<16x128xf32>
    %335 = arith.addf %328, %334 : vector<16x128xf32>
    %336 = vector.extract_strided_slice %293 {offsets = [0, 6], sizes = [16, 128], strides = [1, 1]} : vector<16x142xf32> to vector<16x128xf32>
    %337 = vector.extract_strided_slice %293 {offsets = [0, 8], sizes = [16, 128], strides = [1, 1]} : vector<16x142xf32> to vector<16x128xf32>
    %338 = arith.addf %336, %337 : vector<16x128xf32>
    %c81 = arith.constant 81 : index
    %339 = memref.load %arg1[%c81] : memref<225xf32, #tpu.memory_space<smem>>
    %340 = vector.broadcast %339 : f32 to vector<16x128xf32>
    %341 = arith.mulf %340, %338 : vector<16x128xf32>
    %342 = arith.addf %335, %341 : vector<16x128xf32>
    %343 = vector.extract_strided_slice %293 {offsets = [0, 7], sizes = [16, 128], strides = [1, 1]} : vector<16x142xf32> to vector<16x128xf32>
    %c82 = arith.constant 82 : index
    %344 = memref.load %arg1[%c82] : memref<225xf32, #tpu.memory_space<smem>>
    %345 = vector.broadcast %344 : f32 to vector<16x128xf32>
    %346 = arith.mulf %345, %343 : vector<16x128xf32>
    %347 = arith.addf %342, %346 : vector<16x128xf32>
    %c6_26 = arith.constant 6 : index
    %c0_27 = arith.constant 0 : index
    %348 = vector.load %arg4[%c6_26, %c0_27] : memref<30x142xf32, #tpu.memory_space<vmem>>, vector<16x142xf32>
    %c8 = arith.constant 8 : index
    %c0_28 = arith.constant 0 : index
    %349 = vector.load %arg4[%c8, %c0_28] : memref<30x142xf32, #tpu.memory_space<vmem>>, vector<16x142xf32>
    %350 = arith.addf %348, %349 : vector<16x142xf32>
    %351 = vector.extract_strided_slice %350 {offsets = [0, 0], sizes = [16, 128], strides = [1, 1]} : vector<16x142xf32> to vector<16x128xf32>
    %352 = vector.extract_strided_slice %350 {offsets = [0, 14], sizes = [16, 128], strides = [1, 1]} : vector<16x142xf32> to vector<16x128xf32>
    %353 = arith.addf %351, %352 : vector<16x128xf32>
    %c90 = arith.constant 90 : index
    %354 = memref.load %arg1[%c90] : memref<225xf32, #tpu.memory_space<smem>>
    %355 = vector.broadcast %354 : f32 to vector<16x128xf32>
    %356 = arith.mulf %355, %353 : vector<16x128xf32>
    %357 = arith.addf %347, %356 : vector<16x128xf32>
    %358 = vector.extract_strided_slice %350 {offsets = [0, 1], sizes = [16, 128], strides = [1, 1]} : vector<16x142xf32> to vector<16x128xf32>
    %359 = vector.extract_strided_slice %350 {offsets = [0, 13], sizes = [16, 128], strides = [1, 1]} : vector<16x142xf32> to vector<16x128xf32>
    %360 = arith.addf %358, %359 : vector<16x128xf32>
    %c91 = arith.constant 91 : index
    %361 = memref.load %arg1[%c91] : memref<225xf32, #tpu.memory_space<smem>>
    %362 = vector.broadcast %361 : f32 to vector<16x128xf32>
    %363 = arith.mulf %362, %360 : vector<16x128xf32>
    %364 = arith.addf %357, %363 : vector<16x128xf32>
    %365 = vector.extract_strided_slice %350 {offsets = [0, 2], sizes = [16, 128], strides = [1, 1]} : vector<16x142xf32> to vector<16x128xf32>
    %366 = vector.extract_strided_slice %350 {offsets = [0, 12], sizes = [16, 128], strides = [1, 1]} : vector<16x142xf32> to vector<16x128xf32>
    %367 = arith.addf %365, %366 : vector<16x128xf32>
    %c92 = arith.constant 92 : index
    %368 = memref.load %arg1[%c92] : memref<225xf32, #tpu.memory_space<smem>>
    %369 = vector.broadcast %368 : f32 to vector<16x128xf32>
    %370 = arith.mulf %369, %367 : vector<16x128xf32>
    %371 = arith.addf %364, %370 : vector<16x128xf32>
    %372 = vector.extract_strided_slice %350 {offsets = [0, 3], sizes = [16, 128], strides = [1, 1]} : vector<16x142xf32> to vector<16x128xf32>
    %373 = vector.extract_strided_slice %350 {offsets = [0, 11], sizes = [16, 128], strides = [1, 1]} : vector<16x142xf32> to vector<16x128xf32>
    %374 = arith.addf %372, %373 : vector<16x128xf32>
    %c93 = arith.constant 93 : index
    %375 = memref.load %arg1[%c93] : memref<225xf32, #tpu.memory_space<smem>>
    %376 = vector.broadcast %375 : f32 to vector<16x128xf32>
    %377 = arith.mulf %376, %374 : vector<16x128xf32>
    %378 = arith.addf %371, %377 : vector<16x128xf32>
    %379 = vector.extract_strided_slice %350 {offsets = [0, 4], sizes = [16, 128], strides = [1, 1]} : vector<16x142xf32> to vector<16x128xf32>
    %380 = vector.extract_strided_slice %350 {offsets = [0, 10], sizes = [16, 128], strides = [1, 1]} : vector<16x142xf32> to vector<16x128xf32>
    %381 = arith.addf %379, %380 : vector<16x128xf32>
    %c94 = arith.constant 94 : index
    %382 = memref.load %arg1[%c94] : memref<225xf32, #tpu.memory_space<smem>>
    %383 = vector.broadcast %382 : f32 to vector<16x128xf32>
    %384 = arith.mulf %383, %381 : vector<16x128xf32>
    %385 = arith.addf %378, %384 : vector<16x128xf32>
    %386 = vector.extract_strided_slice %350 {offsets = [0, 5], sizes = [16, 128], strides = [1, 1]} : vector<16x142xf32> to vector<16x128xf32>
    %387 = vector.extract_strided_slice %350 {offsets = [0, 9], sizes = [16, 128], strides = [1, 1]} : vector<16x142xf32> to vector<16x128xf32>
    %388 = arith.addf %386, %387 : vector<16x128xf32>
    %c95 = arith.constant 95 : index
    %389 = memref.load %arg1[%c95] : memref<225xf32, #tpu.memory_space<smem>>
    %390 = vector.broadcast %389 : f32 to vector<16x128xf32>
    %391 = arith.mulf %390, %388 : vector<16x128xf32>
    %392 = arith.addf %385, %391 : vector<16x128xf32>
    %393 = vector.extract_strided_slice %350 {offsets = [0, 6], sizes = [16, 128], strides = [1, 1]} : vector<16x142xf32> to vector<16x128xf32>
    %394 = vector.extract_strided_slice %350 {offsets = [0, 8], sizes = [16, 128], strides = [1, 1]} : vector<16x142xf32> to vector<16x128xf32>
    %395 = arith.addf %393, %394 : vector<16x128xf32>
    %c96 = arith.constant 96 : index
    %396 = memref.load %arg1[%c96] : memref<225xf32, #tpu.memory_space<smem>>
    %397 = vector.broadcast %396 : f32 to vector<16x128xf32>
    %398 = arith.mulf %397, %395 : vector<16x128xf32>
    %399 = arith.addf %392, %398 : vector<16x128xf32>
    %400 = vector.extract_strided_slice %350 {offsets = [0, 7], sizes = [16, 128], strides = [1, 1]} : vector<16x142xf32> to vector<16x128xf32>
    %c97 = arith.constant 97 : index
    %401 = memref.load %arg1[%c97] : memref<225xf32, #tpu.memory_space<smem>>
    %402 = vector.broadcast %401 : f32 to vector<16x128xf32>
    %403 = arith.mulf %402, %400 : vector<16x128xf32>
    %404 = arith.addf %399, %403 : vector<16x128xf32>
    %c7_29 = arith.constant 7 : index
    %c0_30 = arith.constant 0 : index
    %405 = vector.load %arg4[%c7_29, %c0_30] : memref<30x142xf32, #tpu.memory_space<vmem>>, vector<16x142xf32>
    %406 = vector.extract_strided_slice %405 {offsets = [0, 0], sizes = [16, 128], strides = [1, 1]} : vector<16x142xf32> to vector<16x128xf32>
    %407 = vector.extract_strided_slice %405 {offsets = [0, 14], sizes = [16, 128], strides = [1, 1]} : vector<16x142xf32> to vector<16x128xf32>
    %408 = arith.addf %406, %407 : vector<16x128xf32>
    %c105 = arith.constant 105 : index
    %409 = memref.load %arg1[%c105] : memref<225xf32, #tpu.memory_space<smem>>
    %410 = vector.broadcast %409 : f32 to vector<16x128xf32>
    %411 = arith.mulf %410, %408 : vector<16x128xf32>
    %412 = arith.addf %404, %411 : vector<16x128xf32>
    %413 = vector.extract_strided_slice %405 {offsets = [0, 1], sizes = [16, 128], strides = [1, 1]} : vector<16x142xf32> to vector<16x128xf32>
    %414 = vector.extract_strided_slice %405 {offsets = [0, 13], sizes = [16, 128], strides = [1, 1]} : vector<16x142xf32> to vector<16x128xf32>
    %415 = arith.addf %413, %414 : vector<16x128xf32>
    %c106 = arith.constant 106 : index
    %416 = memref.load %arg1[%c106] : memref<225xf32, #tpu.memory_space<smem>>
    %417 = vector.broadcast %416 : f32 to vector<16x128xf32>
    %418 = arith.mulf %417, %415 : vector<16x128xf32>
    %419 = arith.addf %412, %418 : vector<16x128xf32>
    %420 = vector.extract_strided_slice %405 {offsets = [0, 2], sizes = [16, 128], strides = [1, 1]} : vector<16x142xf32> to vector<16x128xf32>
    %421 = vector.extract_strided_slice %405 {offsets = [0, 12], sizes = [16, 128], strides = [1, 1]} : vector<16x142xf32> to vector<16x128xf32>
    %422 = arith.addf %420, %421 : vector<16x128xf32>
    %c107 = arith.constant 107 : index
    %423 = memref.load %arg1[%c107] : memref<225xf32, #tpu.memory_space<smem>>
    %424 = vector.broadcast %423 : f32 to vector<16x128xf32>
    %425 = arith.mulf %424, %422 : vector<16x128xf32>
    %426 = arith.addf %419, %425 : vector<16x128xf32>
    %427 = vector.extract_strided_slice %405 {offsets = [0, 3], sizes = [16, 128], strides = [1, 1]} : vector<16x142xf32> to vector<16x128xf32>
    %428 = vector.extract_strided_slice %405 {offsets = [0, 11], sizes = [16, 128], strides = [1, 1]} : vector<16x142xf32> to vector<16x128xf32>
    %429 = arith.addf %427, %428 : vector<16x128xf32>
    %c108 = arith.constant 108 : index
    %430 = memref.load %arg1[%c108] : memref<225xf32, #tpu.memory_space<smem>>
    %431 = vector.broadcast %430 : f32 to vector<16x128xf32>
    %432 = arith.mulf %431, %429 : vector<16x128xf32>
    %433 = arith.addf %426, %432 : vector<16x128xf32>
    %434 = vector.extract_strided_slice %405 {offsets = [0, 4], sizes = [16, 128], strides = [1, 1]} : vector<16x142xf32> to vector<16x128xf32>
    %435 = vector.extract_strided_slice %405 {offsets = [0, 10], sizes = [16, 128], strides = [1, 1]} : vector<16x142xf32> to vector<16x128xf32>
    %436 = arith.addf %434, %435 : vector<16x128xf32>
    %c109 = arith.constant 109 : index
    %437 = memref.load %arg1[%c109] : memref<225xf32, #tpu.memory_space<smem>>
    %438 = vector.broadcast %437 : f32 to vector<16x128xf32>
    %439 = arith.mulf %438, %436 : vector<16x128xf32>
    %440 = arith.addf %433, %439 : vector<16x128xf32>
    %441 = vector.extract_strided_slice %405 {offsets = [0, 5], sizes = [16, 128], strides = [1, 1]} : vector<16x142xf32> to vector<16x128xf32>
    %442 = vector.extract_strided_slice %405 {offsets = [0, 9], sizes = [16, 128], strides = [1, 1]} : vector<16x142xf32> to vector<16x128xf32>
    %443 = arith.addf %441, %442 : vector<16x128xf32>
    %c110 = arith.constant 110 : index
    %444 = memref.load %arg1[%c110] : memref<225xf32, #tpu.memory_space<smem>>
    %445 = vector.broadcast %444 : f32 to vector<16x128xf32>
    %446 = arith.mulf %445, %443 : vector<16x128xf32>
    %447 = arith.addf %440, %446 : vector<16x128xf32>
    %448 = vector.extract_strided_slice %405 {offsets = [0, 6], sizes = [16, 128], strides = [1, 1]} : vector<16x142xf32> to vector<16x128xf32>
    %449 = vector.extract_strided_slice %405 {offsets = [0, 8], sizes = [16, 128], strides = [1, 1]} : vector<16x142xf32> to vector<16x128xf32>
    %450 = arith.addf %448, %449 : vector<16x128xf32>
    %c111 = arith.constant 111 : index
    %451 = memref.load %arg1[%c111] : memref<225xf32, #tpu.memory_space<smem>>
    %452 = vector.broadcast %451 : f32 to vector<16x128xf32>
    %453 = arith.mulf %452, %450 : vector<16x128xf32>
    %454 = arith.addf %447, %453 : vector<16x128xf32>
    %455 = vector.extract_strided_slice %405 {offsets = [0, 7], sizes = [16, 128], strides = [1, 1]} : vector<16x142xf32> to vector<16x128xf32>
    %c112 = arith.constant 112 : index
    %456 = memref.load %arg1[%c112] : memref<225xf32, #tpu.memory_space<smem>>
    %457 = vector.broadcast %456 : f32 to vector<16x128xf32>
    %458 = arith.mulf %457, %455 : vector<16x128xf32>
    %459 = arith.addf %454, %458 : vector<16x128xf32>
    %c0_31 = arith.constant 0 : index
    %c0_32 = arith.constant 0 : index
    %c0_33 = arith.constant 0 : index
    %460 = vector.load %arg3[%c0_31, %c0_32, %c0_33] : memref<1x16x128xf32, #tpu.memory_space<vmem>>, vector<1x16x128xf32>
    %461 = vector.shape_cast %460 : vector<1x16x128xf32> to vector<16x128xf32>
    %462 = vector.shape_cast %459 : vector<16x128xf32> to vector<1x16x128xf32>
    tpu.vector_store %arg3[%c0_31, %c0_32, %c0_33], %462 {strides = array<i32>} : memref<1x16x128xf32, #tpu.memory_space<vmem>>, vector<1x16x128xf32>,
    return
  }
  func.func @transform_0(%arg0: i32, %arg1: memref<225xf32, #tpu.memory_space<smem>>) -> (i32, i32, i32) {
    %c0_i32 = arith.constant 0 : i32
    %c0_i32_0 = arith.constant 0 : i32
    %c0_i32_1 = arith.constant 0 : i32
    return %arg0, %c0_i32, %c0_i32_0 : i32, i32, i32
  }
  func.func @transform_1(%arg0: i32, %arg1: memref<225xf32, #tpu.memory_space<smem>>) -> (i32, i32, i32) {
    %c0_i32 = arith.constant 0 : i32
    %c0_i32_0 = arith.constant 0 : i32
    %c0_i32_1 = arith.constant 0 : i32
    return %arg0, %c0_i32, %c0_i32_0 : i32, i32, i32
  }
}

</mosaic_0001>

<llo_original>
// kernel: soft_erosion.4
$region0: #{soft_erosion.4}
  #allocation0 [shape = 'u32[]', space=smem, size = 0x4, offset = 0x4, fixed_abs, tag = 'smem constant byte address 0x4 - core index']
  #allocation1 [shape = 'u32[144,128]{1,0:T(1,128)}', space=vmem, size = 0x12000, scoped, tag = 'internal scratch']
  %s0 = inlined_call_operand.vmem [shape: f32[2,16,128], index: 0, kind: input, shape index: {}]
  %s1 = inlined_call_operand.hbm [shape: f32[1,1], index: 1, kind: output, shape index: {}]
  %s2 = sld [smem:[#allocation0]]
  $region41: #{soft_erosion.4} parent=0
    _
  %s4 = ssub.s32 1, %s2
  %s5 = scalar_select 0, %s4, %s2
  $region1: #{soft_erosion.4} parent=0
    #allocation2 [shape = 'u8[512]{0}', space=vmem, size = 0x400, scoped, tag = 'output window, operand 0, single buffered']
    #allocation3 [shape = 's32[2]{0}', space=sflag, size = 0x8, scoped, tag = 'scoped memory for soft_erosion.4']
    %6 = vsyncpa [#allocation3], 0
    loop: start=0, step=1, limit=4
    $region2: #{soft_erosion.4} parent=1 // loop_pre_header
      _
    $region3: #{soft_erosion.4} parent=1 // loop_header
      %s8 = sphi 0, %s12
      %p9 = scmp.ge.s32.totalorder %s8, 4
      %s15 = sphi 0, %s27
      %s16 = sphi 0, %s23
      %s17 = sphi 0, %s15
      %s18 = sphi 0, %s16
      %s19 = sphi 0, %s17
      %s20 = sphi 0, %s18
      %s32 = sphi 0, %s34
      %s35 = sphi 0, %s32
      %s36 = sphi 0, %s35
      %s52 = sphi 0, %s36
      %s56 = sphi 0, %s56
      %s58 = sphi 0, %s56
      %s59 = sphi 0, %s58
      %s73 = sphi 0, %s59
    $region4: #{soft_erosion.4} parent=1 // loop_header_branch
      %11 = sbr.rel (%p9) target = $region8
    $region5: #{soft_erosion.4} parent=1 // loop_body
      %s13 = ssub.s32 %s8, 1
      %s14 = ssub.s32 %s8, 2
      %s21 = sadd.s32 1, %s16
      %p22 = scmp.ge.s32.totalorder %s21, 1
      %s23 = scalar_select %p22, 0, %s21
      %s24 = sadd.s32 1, %s15
      %s25 = scalar_select %p22, %s24, %s15
      %p26 = scmp.ge.s32.totalorder %s25, 2
      %s27 = scalar_select %p26, 0, %s25
      %s28 = ssub.s32 %s15, %s27
      %s29 = ssub.s32 %s16, %s23
      %s30 = sor.u32 %s28, %s29
      %p31 = scmp.eq.s32.totalorder %s30, 0
      %s33 = sadd.s32 %s32, 1
      %s34 = scalar_select %p31, %s32, %s33
      %p37 = pneg %p31
      %p38 = scmp.eq.s32.totalorder %s8, 1
      %p39 = por %p37, %p38
      %p40 = scmp.ne.s32.totalorder %s32, %s35
      %p41 = scmp.eq.s32.totalorder %s8, 0
      %p42 = por %p40, %p41
      %p43 = scmp.ne.s32.totalorder %s32, %s35
      %p44 = scmp.eq.s32.totalorder %s13, 1
      %p45 = por %p43, %p44
      %p46 = scmp.ne.s32.totalorder %s35, %s36
      %p47 = scmp.eq.s32.totalorder %s13, 0
      %p48 = por %p46, %p47
      %p49 = scmp.ne.s32.totalorder %s35, %s36
      %p50 = scmp.eq.s32.totalorder %s14, 1
      %p51 = por %p49, %p50
      %p53 = scmp.ne.s32.totalorder %s36, %s52
      %p54 = scmp.eq.s32.totalorder %s14, 0
      %p55 = por %p53, %p54
      %s57 = sadd.s32 %s56, 1
      %p60 = scmp.eq.s32.totalorder %s8, 1
      %p61 = scmp.ne.s32.totalorder %s56, %s58
      %p62 = scmp.eq.s32.totalorder %s8, 0
      %p63 = por %p61, %p62
      %p64 = scmp.ne.s32.totalorder %s56, %s58
      %p65 = scmp.eq.s32.totalorder %s13, 1
      %p66 = por %p64, %p65
      %p67 = scmp.ne.s32.totalorder %s58, %s59
      %p68 = scmp.eq.s32.totalorder %s13, 0
      %p69 = por %p67, %p68
      %p70 = scmp.ne.s32.totalorder %s58, %s59
      %p71 = scmp.eq.s32.totalorder %s14, 1
      %p72 = por %p70, %p71
      %p74 = scmp.ne.s32.totalorder %s59, %s73
      %p75 = scmp.eq.s32.totalorder %s14, 0
      %p76 = por %p74, %p75
      %p77 = scmp.le.s32.totalorder 1, %s8
      %p78 = scmp.lt.s32.totalorder %s8, 3
      %p79 = pnand %p77, %p78
      %p80 = pneg %p79
      // Predicated region
      $region9: #{soft_erosion.4} parent=5 // pred_check
        _
      $region10: #{soft_erosion.4} parent=5 // pred_check_branch
        %82 = sbr.rel (%p79) target = $region12
      $region11: #{soft_erosion.4} parent=5 // pred_region
        %s83 = ssub.s32 %s8, 1
      $region12: #{soft_erosion.4} parent=5 // pred_fallthru
        _
      %p84 = scmp.lt.s32.totalorder %s8, 2
      // Predicated region
      $region13: #{soft_erosion.4} parent=5 // pred_check
        %p85 = pneg %p84
      $region14: #{soft_erosion.4} parent=5 // pred_check_branch
        %87 = sbr.rel (%p85) target = $region16
      $region15: #{soft_erosion.4} parent=5 // pred_region
        // Predicated region
        $region17: #{soft_erosion.4} parent=15 // pred_check
          %p88 = pneg %p42
        $region18: #{soft_erosion.4} parent=15 // pred_check_branch
          %90 = sbr.rel (%p88) target = $region20
        $region19: #{soft_erosion.4} parent=15 // pred_region
          %s91 = smul.u32 2, %s16
          %p92 = scmp.lt.s32.totalorder %s15, 1
          %s93 = scalar_select %p92, %s15, 1
          %p94 = scmp.lt.s32.totalorder %s91, 1
          %s95 = scalar_select %p94, %s91, 1
          %s96 = smul.addr %s93, 2
          %s97 = sadd.s32 %s95, %s96
          %s98 = smul.addr %s97, 8
          %s99 = scalar_lea.vmem %s0, %s98
          %s100 = smul.u32 2, %s16
        $region20: #{soft_erosion.4} parent=15 // pred_fallthru
          _
      $region16: #{soft_erosion.4} parent=5 // pred_fallthru
        _
      %p101 = scmp.le.s32.totalorder 1, %s8
      %p102 = scmp.lt.s32.totalorder %s8, 3
      %p103 = pnand %p101, %p102
      %p104 = pneg %p103
      // Predicated region
      $region21: #{soft_erosion.4} parent=5 // pred_check
        _
      $region22: #{soft_erosion.4} parent=5 // pred_check_branch
        %106 = sbr.rel (%p103) target = $region24
      $region23: #{soft_erosion.4} parent=5 // pred_region
        %s107 = ssub.s32 %s8, 1
        %s108 = smul.u32 2, %s18
        %p109 = scmp.lt.s32.totalorder %s17, 1
        %s110 = scalar_select %p109, %s17, 1
        %p111 = scmp.lt.s32.totalorder %s108, 1
        %s112 = scalar_select %p111, %s108, 1
        %s113 = smul.addr %s110, 2
        %s114 = sadd.s32 %s112, %s113
        %s115 = smul.addr %s114, 8
        %s116 = scalar_lea.vmem %s0, %s115
        %p117 = pneg %p48
        %p118 = pneg %p45
        %p119 = pneg %p69
        %p120 = pneg %p66
        %s121 = smul.u32 2, %s18
        %p122 = scmp.lt.s32.totalorder %s17, 1
        %s123 = scalar_select %p122, %s17, 1
        %p124 = scmp.lt.s32.totalorder %s121, 1
        %s125 = scalar_select %p124, %s121, 1
        %s126 = smul.addr %s123, 2
        %s127 = sadd.s32 %s125, %s126
        %s128 = smul.addr %s127, 8
        %s129 = scalar_lea.vmem %s0, %s128
        %s130 = smul.u32 2, %s18
        %v131 = vld [vmem:[%s129] sm:$0xff]
        %v132 = vld [vmem:[%s129 + $0x8] sm:$0xff]
        %s133 = smul.u32 %s18, 16
        %v134 = vlaneseq
        %v135 = vshrl.u32 %v134, 7
        %v136 = vadd.s32 %v135, 8
        %v137 = vstv %s133
        %v138 = vadd.s32 %v137, %v135
        %v139 = vadd.s32 %v137, %v136
        %v140 = vlaneseq
        %v141 = vand.u32 %v140, 127
        %vm142 = vcmp.lt.s32.totalorder %v138, 16
        %vm143 = vcmp.lt.s32.totalorder %v139, 16
        %vm144 = vcmp.lt.s32.totalorder %v141, 16
        %vm145 = vmand %vm142, %vm144
        %vm146 = vmand %vm143, %vm144
        %vm147 = vcmp.lt.f32.partialorder %v131, 0.6
        %vm148 = vcmp.lt.f32.partialorder %v132, 0.6
        %vm149 = vmand %vm145, %vm147
        %vm150 = vmand %vm146, %vm148
        %v151 = vsel %vm149, %v131, -inf
        %v152 = vsel %vm150, %v132, -inf
        %v153 = vmax.f32 %v151, %v152
        %154 = vmax.xlane.f32.xlu0 %v153
        %v155 = vpop.xlane.xlu0 %154
        %v156 = vrot.slane %v155, 4
        %v157 = vmax.f32 %v155, %v156
        %v158 = vrot.slane %v157, 2
        %v159 = vmax.f32 %v157, %v158
        %v160 = vrot.slane %v159, 1
        %v161 = vmax.f32 %v159, %v160
        %s162 = vtos %v161
        %p163 = scmp.eq.s32.totalorder %s17, 0
        %p164 = scmp.eq.s32.totalorder %s18, 0
        %p165 = pnand %p163, %p164
        %p166 = pneg %p165
        // Predicated region
        $region25: #{soft_erosion.4} parent=23 // pred_check
          _
        $region26: #{soft_erosion.4} parent=23 // pred_check_branch
          %168 = sbr.rel (%p165) target = $region28
        $region27: #{soft_erosion.4} parent=23 // pred_region
          %vm169 = vcmask 0
          %170 = vst.msk [vmem:[#allocation2] sm:$0x1] %vm169, -inf
        $region28: #{soft_erosion.4} parent=23 // pred_fallthru
          _
        %v171 = vld [vmem:[#allocation2] sm:$0x1]
        %v172 = vstv %s162
        %v173 = vmax.f32 %v171, %v172
        %vm174 = vcmask 0
        %175 = vst.msk [vmem:[#allocation2] sm:$0x1] %vm174, %v173
        // Predicated region
        $region29: #{soft_erosion.4} parent=23 // pred_check
          %p176 = pneg %p66
        $region30: #{soft_erosion.4} parent=23 // pred_check_branch
          %178 = sbr.rel (%p176) target = $region32
        $region31: #{soft_erosion.4} parent=23 // pred_region
          %s180 = ssub.s32 16, 16
          %181 = vsyncadd [#allocation3], %s180
          %s183 = sshll.u32 [#allocation2], 4
          %s184 = int_to_ptr.vmem [resolvable:$true] %s183
          %186 = dma.vmem_to_hbm [thread:$0]  %s184, 16, %s1, [#allocation3]
        $region32: #{soft_erosion.4} parent=23 // pred_fallthru
          _
        // Predicated region
        $region33: #{soft_erosion.4} parent=23 // pred_check
          %p187 = pneg %p66
        $region34: #{soft_erosion.4} parent=23 // pred_check_branch
          %189 = sbr.rel (%p187) target = $region36
        $region35: #{soft_erosion.4} parent=23 // pred_region
          %190 = dma.done [#allocation3], 16
        $region36: #{soft_erosion.4} parent=23 // pred_fallthru
          _
      $region24: #{soft_erosion.4} parent=5 // pred_fallthru
        _
      %p191 = scmp.le.s32.totalorder 2, %s8
      // Predicated region
      $region37: #{soft_erosion.4} parent=5 // pred_check
        %p192 = pneg %p191
      $region38: #{soft_erosion.4} parent=5 // pred_check_branch
        %194 = sbr.rel (%p192) target = $region40
      $region39: #{soft_erosion.4} parent=5 // pred_region
        %s195 = ssub.s32 %s8, 2
      $region40: #{soft_erosion.4} parent=5 // pred_fallthru
        _
    $region6: #{soft_erosion.4} parent=1 // loop_footer
      %s12 = sadd.s32 1, %s8
    $region7: #{soft_erosion.4} parent=1 // loop_footer_branch
      %7 = sbr.rel target = $region3
    $region8: #{soft_erosion.4} parent=1 // loop_exit
      _
    %196 = vsyncpa [#allocation3], 1
    %s197 = scalar_lea.sflag [#allocation3], 1
    %198 = vsyncpa %s197, 1

// kernel: soft_erosion.5
$region0: #{soft_erosion.5}
  #allocation0 [shape = 'u32[]', space=smem, size = 0x4, offset = 0x4, fixed_abs, tag = 'smem constant byte address 0x4 - core index']
  #allocation1 [shape = 'u32[144,128]{1,0:T(1,128)}', space=vmem, size = 0x12000, scoped, tag = 'internal scratch']
  #allocation2 [shape = 'f32[1,1]{1,0:T(1,128)S(1)}', space=vmem, size = 0x200, scoped, tag = 'scoped memory for soft_erosion.5']
  %s0 = inlined_call_operand.vmem [shape: f32[2,16,128], index: 0, kind: input, shape index: {}]
  %s1 = inlined_call_operand.<no memory space> [shape: f32[1,1], index: 1, kind: input, shape index: {}]
  %s2 = inlined_call_operand.vmem [shape: f32[2,16,128], index: 2, kind: output, shape index: {0}]
  %s3 = inlined_call_operand.vmem [shape: s8[2,16,128], index: 3, kind: output, shape index: {1}]
  %4 = xla_tuple %s2, %s3
  %s5 = sld [smem:[#allocation0]]
  $region49: #{soft_erosion.5} parent=0
    _
  %s7 = ssub.s32 1, %s5
  %s8 = scalar_select 0, %s7, %s5
  %v9 = vstv %s1
  %10 = vst [vmem:[#allocation2] sm:$0x1] %v9
  loop: start=0, step=1, limit=4
  $region2: #{soft_erosion.5} parent=0 // loop_pre_header
    _
  $region3: #{soft_erosion.5} parent=0 // loop_header
    %s12 = sphi 0, %s16
    %p13 = scmp.ge.s32.totalorder %s12, 4
    %s19 = sphi 0, %s31
    %s20 = sphi 0, %s27
    %s21 = sphi 0, %s19
    %s22 = sphi 0, %s20
    %s23 = sphi 0, %s21
    %s24 = sphi 0, %s22
    %s36 = sphi 0, %s38
    %s39 = sphi 0, %s36
    %s40 = sphi 0, %s39
    %s56 = sphi 0, %s40
    %s60 = sphi 0, %s60
    %s62 = sphi 0, %s60
    %s63 = sphi 0, %s62
    %s77 = sphi 0, %s63
    %s85 = sphi 0, %s87
    %s88 = sphi 0, %s85
    %s89 = sphi 0, %s88
    %s105 = sphi 0, %s89
    %s113 = sphi 0, %s115
    %s116 = sphi 0, %s113
    %s117 = sphi 0, %s116
    %s133 = sphi 0, %s117
  $region4: #{soft_erosion.5} parent=0 // loop_header_branch
    %15 = sbr.rel (%p13) target = $region8
  $region5: #{soft_erosion.5} parent=0 // loop_body
    %s17 = ssub.s32 %s12, 1
    %s18 = ssub.s32 %s12, 2
    %s25 = sadd.s32 1, %s20
    %p26 = scmp.ge.s32.totalorder %s25, 1
    %s27 = scalar_select %p26, 0, %s25
    %s28 = sadd.s32 1, %s19
    %s29 = scalar_select %p26, %s28, %s19
    %p30 = scmp.ge.s32.totalorder %s29, 2
    %s31 = scalar_select %p30, 0, %s29
    %s32 = ssub.s32 %s19, %s31
    %s33 = ssub.s32 %s20, %s27
    %s34 = sor.u32 %s32, %s33
    %p35 = scmp.eq.s32.totalorder %s34, 0
    %s37 = sadd.s32 %s36, 1
    %s38 = scalar_select %p35, %s36, %s37
    %p41 = pneg %p35
    %p42 = scmp.eq.s32.totalorder %s12, 1
    %p43 = por %p41, %p42
    %p44 = scmp.ne.s32.totalorder %s36, %s39
    %p45 = scmp.eq.s32.totalorder %s12, 0
    %p46 = por %p44, %p45
    %p47 = scmp.ne.s32.totalorder %s36, %s39
    %p48 = scmp.eq.s32.totalorder %s17, 1
    %p49 = por %p47, %p48
    %p50 = scmp.ne.s32.totalorder %s39, %s40
    %p51 = scmp.eq.s32.totalorder %s17, 0
    %p52 = por %p50, %p51
    %p53 = scmp.ne.s32.totalorder %s39, %s40
    %p54 = scmp.eq.s32.totalorder %s18, 1
    %p55 = por %p53, %p54
    %p57 = scmp.ne.s32.totalorder %s40, %s56
    %p58 = scmp.eq.s32.totalorder %s18, 0
    %p59 = por %p57, %p58
    %s61 = sadd.s32 %s60, 1
    %p64 = scmp.eq.s32.totalorder %s12, 1
    %p65 = scmp.ne.s32.totalorder %s60, %s62
    %p66 = scmp.eq.s32.totalorder %s12, 0
    %p67 = por %p65, %p66
    %p68 = scmp.ne.s32.totalorder %s60, %s62
    %p69 = scmp.eq.s32.totalorder %s17, 1
    %p70 = por %p68, %p69
    %p71 = scmp.ne.s32.totalorder %s62, %s63
    %p72 = scmp.eq.s32.totalorder %s17, 0
    %p73 = por %p71, %p72
    %p74 = scmp.ne.s32.totalorder %s62, %s63
    %p75 = scmp.eq.s32.totalorder %s18, 1
    %p76 = por %p74, %p75
    %p78 = scmp.ne.s32.totalorder %s63, %s77
    %p79 = scmp.eq.s32.totalorder %s18, 0
    %p80 = por %p78, %p79
    %s81 = ssub.s32 %s19, %s31
    %s82 = ssub.s32 %s20, %s27
    %s83 = sor.u32 %s81, %s82
    %p84 = scmp.eq.s32.totalorder %s83, 0
    %s86 = sadd.s32 %s85, 1
    %s87 = scalar_select %p84, %s85, %s86
    %p90 = pneg %p84
    %p91 = scmp.eq.s32.totalorder %s12, 1
    %p92 = por %p90, %p91
    %p93 = scmp.ne.s32.totalorder %s85, %s88
    %p94 = scmp.eq.s32.totalorder %s12, 0
    %p95 = por %p93, %p94
    %p96 = scmp.ne.s32.totalorder %s85, %s88
    %p97 = scmp.eq.s32.totalorder %s17, 1
    %p98 = por %p96, %p97
    %p99 = scmp.ne.s32.totalorder %s88, %s89
    %p100 = scmp.eq.s32.totalorder %s17, 0
    %p101 = por %p99, %p100
    %p102 = scmp.ne.s32.totalorder %s88, %s89
    %p103 = scmp.eq.s32.totalorder %s18, 1
    %p104 = por %p102, %p103
    %p106 = scmp.ne.s32.totalorder %s89, %s105
    %p107 = scmp.eq.s32.totalorder %s18, 0
    %p108 = por %p106, %p107
    %s109 = ssub.s32 %s19, %s31
    %s110 = ssub.s32 %s20, %s27
    %s111 = sor.u32 %s109, %s110
    %p112 = scmp.eq.s32.totalorder %s111, 0
    %s114 = sadd.s32 %s113, 1
    %s115 = scalar_select %p112, %s113, %s114
    %p118 = pneg %p112
    %p119 = scmp.eq.s32.totalorder %s12, 1
    %p120 = por %p118, %p119
    %p121 = scmp.ne.s32.totalorder %s113, %s116
    %p122 = scmp.eq.s32.totalorder %s12, 0
    %p123 = por %p121, %p122
    %p124 = scmp.ne.s32.totalorder %s113, %s116
    %p125 = scmp.eq.s32.totalorder %s17, 1
    %p126 = por %p124, %p125
    %p127 = scmp.ne.s32.totalorder %s116, %s117
    %p128 = scmp.eq.s32.totalorder %s17, 0
    %p129 = por %p127, %p128
    %p130 = scmp.ne.s32.totalorder %s116, %s117
    %p131 = scmp.eq.s32.totalorder %s18, 1
    %p132 = por %p130, %p131
    %p134 = scmp.ne.s32.totalorder %s117, %s133
    %p135 = scmp.eq.s32.totalorder %s18, 0
    %p136 = por %p134, %p135
    %p137 = scmp.le.s32.totalorder 1, %s12
    %p138 = scmp.lt.s32.totalorder %s12, 3
    %p139 = pnand %p137, %p138
    %p140 = pneg %p139
    // Predicated region
    $region9: #{soft_erosion.5} parent=5 // pred_check
      _
    $region10: #{soft_erosion.5} parent=5 // pred_check_branch
      %142 = sbr.rel (%p139) target = $region12
    $region11: #{soft_erosion.5} parent=5 // pred_region
      %s143 = ssub.s32 %s12, 1
      // Predicated region
      $region13: #{soft_erosion.5} parent=11 // pred_check
        %p144 = pneg %p73
      $region14: #{soft_erosion.5} parent=11 // pred_check_branch
        %146 = sbr.rel (%p144) target = $region16
      $region15: #{soft_erosion.5} parent=11 // pred_region
        _
      $region16: #{soft_erosion.5} parent=11 // pred_fallthru
        _
    $region12: #{soft_erosion.5} parent=5 // pred_fallthru
      _
    %p147 = scmp.lt.s32.totalorder %s12, 2
    // Predicated region
    $region17: #{soft_erosion.5} parent=5 // pred_check
      %p148 = pneg %p147
    $region18: #{soft_erosion.5} parent=5 // pred_check_branch
      %150 = sbr.rel (%p148) target = $region20
    $region19: #{soft_erosion.5} parent=5 // pred_region
      // Predicated region
      $region21: #{soft_erosion.5} parent=19 // pred_check
        %p151 = pneg %p46
      $region22: #{soft_erosion.5} parent=19 // pred_check_branch
        %153 = sbr.rel (%p151) target = $region24
      $region23: #{soft_erosion.5} parent=19 // pred_region
        %s154 = smul.u32 2, %s20
        %p155 = scmp.lt.s32.totalorder %s19, 1
        %s156 = scalar_select %p155, %s19, 1
        %p157 = scmp.lt.s32.totalorder %s154, 1
        %s158 = scalar_select %p157, %s154, 1
        %s159 = smul.addr %s156, 2
        %s160 = sadd.s32 %s158, %s159
        %s161 = smul.addr %s160, 8
        %s162 = scalar_lea.vmem %s0, %s161
        %s163 = smul.u32 2, %s20
      $region24: #{soft_erosion.5} parent=19 // pred_fallthru
        _
    $region20: #{soft_erosion.5} parent=5 // pred_fallthru
      _
    %p164 = scmp.le.s32.totalorder 1, %s12
    %p165 = scmp.lt.s32.totalorder %s12, 3
    %p166 = pnand %p164, %p165
    %p167 = pneg %p166
    // Predicated region
    $region25: #{soft_erosion.5} parent=5 // pred_check
      _
    $region26: #{soft_erosion.5} parent=5 // pred_check_branch
      %169 = sbr.rel (%p166) target = $region28
    $region27: #{soft_erosion.5} parent=5 // pred_region
      %s170 = ssub.s32 %s12, 1
      %s171 = smul.u32 2, %s22
      %p172 = scmp.lt.s32.totalorder %s21, 1
      %s173 = scalar_select %p172, %s21, 1
      %p174 = scmp.lt.s32.totalorder %s171, 1
      %s175 = scalar_select %p174, %s171, 1
      %s176 = smul.addr %s173, 2
      %s177 = sadd.s32 %s175, %s176
      %s178 = smul.addr %s177, 8
      %s179 = scalar_lea.vmem %s0, %s178
      %p180 = pneg %p52
      %p181 = pneg %p49
      %p182 = pneg %p73
      %p183 = pneg %p70
      %p184 = pneg %p101
      %p185 = pneg %p98
      %s186 = smul.u32 2, %s22
      %p187 = scmp.lt.s32.totalorder %s21, 1
      %s188 = scalar_select %p187, %s21, 1
      %p189 = scmp.lt.s32.totalorder %s186, 1
      %s190 = scalar_select %p189, %s186, 1
      %s191 = smul.addr %s188, 2
      %s192 = sadd.s32 %s190, %s191
      %s193 = smul.addr %s192, 8
      %s194 = scalar_lea.vmem %s2, %s193
      %p195 = pneg %p129
      %p196 = pneg %p126
      %s197 = smul.u32 2, %s22
      %p198 = scmp.lt.s32.totalorder %s21, 1
      %s199 = scalar_select %p198, %s21, 1
      %p200 = scmp.lt.s32.totalorder %s197, 1
      %s201 = scalar_select %p200, %s197, 1
      %s202 = smul.addr %s199, 2
      %s203 = sadd.s32 %s201, %s202
      %s204 = smul.addr %s203, 2
      %s205 = scalar_lea.vmem %s3, %s204
      %s206 = smul.u32 2, %s22
      %p207 = scmp.lt.s32.totalorder %s21, 1
      %s208 = scalar_select %p207, %s21, 1
      %p209 = scmp.lt.s32.totalorder %s206, 1
      %s210 = scalar_select %p209, %s206, 1
      %s211 = smul.addr %s208, 2
      %s212 = sadd.s32 %s210, %s211
      %s213 = smul.addr %s212, 8
      %s214 = scalar_lea.vmem %s0, %s213
      %s215 = smul.u32 2, %s22
      %s216 = smul.u32 2, %s22
      %p217 = scmp.lt.s32.totalorder %s21, 1
      %s218 = scalar_select %p217, %s21, 1
      %p219 = scmp.lt.s32.totalorder %s216, 1
      %s220 = scalar_select %p219, %s216, 1
      %s221 = smul.addr %s218, 2
      %s222 = sadd.s32 %s220, %s221
      %s223 = smul.addr %s222, 8
      %s224 = scalar_lea.vmem %s2, %s223
      %s225 = smul.u32 2, %s22
      %s226 = smul.u32 2, %s22
      %p227 = scmp.lt.s32.totalorder %s21, 1
      %s228 = scalar_select %p227, %s21, 1
      %p229 = scmp.lt.s32.totalorder %s226, 1
      %s230 = scalar_select %p229, %s226, 1
      %s231 = smul.addr %s228, 2
      %s232 = sadd.s32 %s230, %s231
      %s233 = smul.addr %s232, 2
      %s234 = scalar_lea.vmem %s3, %s233
      %s235 = smul.u32 2, %s22
      %v238 = vld [vmem:[%s214] sm:$0xff]
      %v239 = vld [vmem:[%s214 + $0x8] sm:$0xff]
      %vm240 = vcmp.ge.f32.partialorder %v238, 0.6
      %vm241 = vcmp.ge.f32.partialorder %v239, 0.6
      %v242 = vld [vmem:[#allocation2] sm:$0x1]
      %v243 = vrcp.pop %v242
      %v245 = vlaneseq
      %v246 = vshrl.u32 %v245, 7
      %v247 = vsub.s32 0, %v246
      %v248 = vrot.slane %v243, %v247
      %249 = vset.pattern.permute.xlu0 0
      %250 = vperm.xlu0 %249, %v248
      %v251 = vpop.permute.xlu0 %250
      %v253 = vmul.f32 %v238, %v251
      %v254 = vmul.f32 %v239, %v251
      %v255 = vsel %vm240, 1.0, %v253
      %v256 = vsel %vm241, 1.0, %v254
      %257 = vst [vmem:[%s224] sm:$0xff] %v255
      %258 = vst [vmem:[%s224 + $0x8] sm:$0xff] %v256
      %vm259 = vmpackc.low %vm241, %vm240
      %vm260 = vmpackc.even %vm259, %vm259
      %v261 = vsel %vm260, 16843009, 0
      %v262 = vunpack.c.0.s8 %v261
      %v263 = vunpack.c.1.s8 %v261
      %v264 = vpack.c.b16 %v262, %v262
      %v265 = vpack.c.b8 %v264, %v264
      %v266 = vpack.c.b16 %v263, %v263
      %v267 = vpack.c.b8 %v266, %v266
      %268 = vst [vmem:[%s234] sm:$0x3] %v265
      %269 = vst [vmem:[%s234 + $0x2] sm:$0x3] %v267
      %s270 = smul.u32 2, %s22
      %p271 = scmp.lt.s32.totalorder %s21, 1
      %s272 = scalar_select %p271, %s21, 1
      %p273 = scmp.lt.s32.totalorder %s270, 1
      %s274 = scalar_select %p273, %s270, 1
      %s275 = smul.addr %s272, 2
      %s276 = sadd.s32 %s274, %s275
      %s277 = smul.addr %s276, 8
      %s278 = scalar_lea.vmem %s2, %s277
      %s279 = smul.u32 2, %s22
      %p280 = scmp.lt.s32.totalorder %s21, 1
      %s281 = scalar_select %p280, %s21, 1
      %p282 = scmp.lt.s32.totalorder %s279, 1
      %s283 = scalar_select %p282, %s279, 1
      %s284 = smul.addr %s281, 2
      %s285 = sadd.s32 %s283, %s284
      %s286 = smul.addr %s285, 2
      %s287 = scalar_lea.vmem %s3, %s286
      // Predicated region
      $region29: #{soft_erosion.5} parent=27 // pred_check
        %p288 = pneg %p98
      $region30: #{soft_erosion.5} parent=27 // pred_check_branch
        %290 = sbr.rel (%p288) target = $region32
      $region31: #{soft_erosion.5} parent=27 // pred_region
        %s291 = smul.u32 2, %s22
      $region32: #{soft_erosion.5} parent=27 // pred_fallthru
        _
      // Predicated region
      $region33: #{soft_erosion.5} parent=27 // pred_check
        %p292 = pneg %p126
      $region34: #{soft_erosion.5} parent=27 // pred_check_branch
        %294 = sbr.rel (%p292) target = $region36
      $region35: #{soft_erosion.5} parent=27 // pred_region
        %s295 = smul.u32 2, %s22
      $region36: #{soft_erosion.5} parent=27 // pred_fallthru
        _
    $region28: #{soft_erosion.5} parent=5 // pred_fallthru
      _
    %p296 = scmp.le.s32.totalorder 2, %s12
    // Predicated region
    $region37: #{soft_erosion.5} parent=5 // pred_check
      %p297 = pneg %p296
    $region38: #{soft_erosion.5} parent=5 // pred_check_branch
      %299 = sbr.rel (%p297) target = $region40
    $region39: #{soft_erosion.5} parent=5 // pred_region
      %s300 = ssub.s32 %s12, 2
      // Predicated region
      $region41: #{soft_erosion.5} parent=39 // pred_check
        %p301 = pneg %p104
      $region42: #{soft_erosion.5} parent=39 // pred_check_branch
        %303 = sbr.rel (%p301) target = $region44
      $region43: #{soft_erosion.5} parent=39 // pred_region
        %s304 = smul.u32 2, %s24
        %p305 = scmp.lt.s32.totalorder %s23, 1
        %s306 = scalar_select %p305, %s23, 1
        %p307 = scmp.lt.s32.totalorder %s304, 1
        %s308 = scalar_select %p307, %s304, 1
        %s309 = smul.addr %s306, 2
        %s310 = sadd.s32 %s308, %s309
        %s311 = smul.addr %s310, 8
        %s312 = scalar_lea.vmem %s2, %s311
      $region44: #{soft_erosion.5} parent=39 // pred_fallthru
        _
      // Predicated region
      $region45: #{soft_erosion.5} parent=39 // pred_check
        %p313 = pneg %p132
      $region46: #{soft_erosion.5} parent=39 // pred_check_branch
        %315 = sbr.rel (%p313) target = $region48
      $region47: #{soft_erosion.5} parent=39 // pred_region
        %s316 = smul.u32 2, %s24
        %p317 = scmp.lt.s32.totalorder %s23, 1
        %s318 = scalar_select %p317, %s23, 1
        %p319 = scmp.lt.s32.totalorder %s316, 1
        %s320 = scalar_select %p319, %s316, 1
        %s321 = smul.addr %s318, 2
        %s322 = sadd.s32 %s320, %s321
        %s323 = smul.addr %s322, 2
        %s324 = scalar_lea.vmem %s3, %s323
      $region48: #{soft_erosion.5} parent=39 // pred_fallthru
        _
    $region40: #{soft_erosion.5} parent=5 // pred_fallthru
      _
  $region6: #{soft_erosion.5} parent=0 // loop_footer
    %s16 = sadd.s32 1, %s12
  $region7: #{soft_erosion.5} parent=0 // loop_footer_branch
    %11 = sbr.rel target = $region3
  $region8: #{soft_erosion.5} parent=0 // loop_exit
    _

// kernel: soft_erosion.3
$region0: #{soft_erosion.3}
  #allocation0 [shape = 'u32[]', space=smem, size = 0x4, offset = 0x4, fixed_abs, tag = 'smem constant byte address 0x4 - core index']
  #allocation1 [shape = 'u32[144,128]{1,0:T(1,128)}', space=vmem, size = 0x12000, scoped, tag = 'internal scratch']
  #allocation2 [shape = 'f32[30,142]{1,0:T(8,128)}', space=vmem, size = 0x8000, scoped, tag = 'scratch operand']
  #allocation3 [shape = 's32[1]{0}', space=sflag, size = 0x4, scoped, tag = 'scoped memory for soft_erosion.3']
  #allocation4 [shape = 'u8[1024]{0}', space=smem, size = 0x400, scoped, tag = 'prefetched SMEM operand 0']
  %s0 = inlined_call_operand.vmem [shape: f32[225], index: 0, kind: input, shape index: {}]
  %s1 = inlined_call_operand.hbm [shape: f32[2,16,16], index: 1, kind: input, shape index: {}]
  %s2 = inlined_call_operand.vmem [shape: f32[2,16,128], index: 2, kind: output, shape index: {}]
  %s3 = sld [smem:[#allocation0]]
  $region41: #{soft_erosion.3} parent=0
    _
  %s5 = ssub.s32 1, %s3
  %s6 = scalar_select 0, %s5, %s3
  %s7 = sshll.u32 %s0, 4
  %s8 = int_to_ptr.vmem [resolvable:$true] %s7
  %10 = dma.vmem_to_smem %s8, 32, [#allocation4], [#allocation3]
  %11 = dma.done [#allocation3], 32
  %12 = sfence
  $region1: #{soft_erosion.3} parent=0
    #allocation5 [shape = 'u8[16384]{0}', space=vmem, size = 0x4000, scoped, tag = 'input window, operand 1']
    #allocation6 [shape = 's32[2]{0}', space=sflag, size = 0x8, scoped, tag = 'scoped memory for soft_erosion.3']
    %13 = vsyncpa [#allocation6], 0
    %s14 = scalar_lea.sflag [#allocation6], 1
    %15 = vsyncpa %s14, 0
    loop: start=0, step=1, limit=4
    $region2: #{soft_erosion.3} parent=1 // loop_pre_header
      _
    $region3: #{soft_erosion.3} parent=1 // loop_header
      %s17 = sphi 0, %s21
      %p18 = scmp.ge.s32.totalorder %s17, 4
      %s27 = sphi 0, %s29
      %s30 = sphi 0, %s27
      %s31 = sphi 0, %s30
      %s47 = sphi 0, %s31
      %s53 = sphi 0, %s55
      %s56 = sphi 0, %s53
      %s57 = sphi 0, %s56
      %s73 = sphi 0, %s57
    $region4: #{soft_erosion.3} parent=1 // loop_header_branch
      %20 = sbr.rel (%p18) target = $region8
    $region5: #{soft_erosion.3} parent=1 // loop_body
      %s22 = ssub.s32 %s17, 1
      %s23 = ssub.s32 %s17, 2
      %s24 = sadd.s32 %s17, 1
      %s25 = ssub.s32 %s17, %s24
      %p26 = scmp.eq.s32.totalorder %s25, 0
      %s28 = sadd.s32 %s27, 1
      %s29 = scalar_select %p26, %s27, %s28
      %p32 = pneg %p26
      %p33 = scmp.eq.s32.totalorder %s17, 1
      %p34 = por %p32, %p33
      %p35 = scmp.ne.s32.totalorder %s27, %s30
      %p36 = scmp.eq.s32.totalorder %s17, 0
      %p37 = por %p35, %p36
      %p38 = scmp.ne.s32.totalorder %s27, %s30
      %p39 = scmp.eq.s32.totalorder %s22, 1
      %p40 = por %p38, %p39
      %p41 = scmp.ne.s32.totalorder %s30, %s31
      %p42 = scmp.eq.s32.totalorder %s22, 0
      %p43 = por %p41, %p42
      %p44 = scmp.ne.s32.totalorder %s30, %s31
      %p45 = scmp.eq.s32.totalorder %s23, 1
      %p46 = por %p44, %p45
      %p48 = scmp.ne.s32.totalorder %s31, %s47
      %p49 = scmp.eq.s32.totalorder %s23, 0
      %p50 = por %p48, %p49
      %s51 = ssub.s32 %s17, %s24
      %p52 = scmp.eq.s32.totalorder %s51, 0
      %s54 = sadd.s32 %s53, 1
      %s55 = scalar_select %p52, %s53, %s54
      %p58 = pneg %p52
      %p59 = scmp.eq.s32.totalorder %s17, 1
      %p60 = por %p58, %p59
      %p61 = scmp.ne.s32.totalorder %s53, %s56
      %p62 = scmp.eq.s32.totalorder %s17, 0
      %p63 = por %p61, %p62
      %p64 = scmp.ne.s32.totalorder %s53, %s56
      %p65 = scmp.eq.s32.totalorder %s22, 1
      %p66 = por %p64, %p65
      %p67 = scmp.ne.s32.totalorder %s56, %s57
      %p68 = scmp.eq.s32.totalorder %s22, 0
      %p69 = por %p67, %p68
      %p70 = scmp.ne.s32.totalorder %s56, %s57
      %p71 = scmp.eq.s32.totalorder %s23, 1
      %p72 = por %p70, %p71
      %p74 = scmp.ne.s32.totalorder %s57, %s73
      %p75 = scmp.eq.s32.totalorder %s23, 0
      %p76 = por %p74, %p75
      %p77 = scmp.le.s32.totalorder 1, %s17
      %p78 = scmp.lt.s32.totalorder %s17, 3
      %p79 = pnand %p77, %p78
      %p80 = pneg %p79
      // Predicated region
      $region9: #{soft_erosion.3} parent=5 // pred_check
        _
      $region10: #{soft_erosion.3} parent=5 // pred_check_branch
        %82 = sbr.rel (%p79) target = $region12
      $region11: #{soft_erosion.3} parent=5 // pred_region
        %s83 = ssub.s32 %s17, 1
      $region12: #{soft_erosion.3} parent=5 // pred_fallthru
        _
      %p84 = scmp.lt.s32.totalorder %s17, 2
      // Predicated region
      $region13: #{soft_erosion.3} parent=5 // pred_check
        %p85 = pneg %p84
      $region14: #{soft_erosion.3} parent=5 // pred_check_branch
        %87 = sbr.rel (%p85) target = $region16
      $region15: #{soft_erosion.3} parent=5 // pred_region
        // Predicated region
        $region17: #{soft_erosion.3} parent=15 // pred_check
          %p88 = pneg %p37
        $region18: #{soft_erosion.3} parent=15 // pred_check_branch
          %90 = sbr.rel (%p88) target = $region20
        $region19: #{soft_erosion.3} parent=15 // pred_region
          %s91 = sand.u32 %s27, 1
          %s92 = scalar_lea.sflag [#allocation6], %s91
          %s93 = sand.u32 %s27, 1
          %s94 = smul.addr %s93, 16
          %s95 = scalar_lea.vmem [#allocation5], %s94
          %s97 = ssub.s32 256, 256
          %98 = vsyncadd %s92, %s97
          %s99 = smul.addr %s17, 2
          %s100 = smul.addr %s99, 128
          %s101 = scalar_lea.hbm %s1, %s100
          %s102 = sshll.u32 %s95, 4
          %s103 = int_to_ptr.vmem [resolvable:$true] %s102
          %108 = dma.hbm_to_vmem [thread:$0]  %s101, 256, %s103, %s92, 128, 128, 8
        $region20: #{soft_erosion.3} parent=15 // pred_fallthru
          _
      $region16: #{soft_erosion.3} parent=5 // pred_fallthru
        _
      %p109 = scmp.le.s32.totalorder 1, %s17
      %p110 = scmp.lt.s32.totalorder %s17, 3
      %p111 = pnand %p109, %p110
      %p112 = pneg %p111
      // Predicated region
      $region21: #{soft_erosion.3} parent=5 // pred_check
        _
      $region22: #{soft_erosion.3} parent=5 // pred_check_branch
        %114 = sbr.rel (%p111) target = $region24
      $region23: #{soft_erosion.3} parent=5 // pred_region
        %s115 = ssub.s32 %s17, 1
        %s116 = sand.u32 %s30, 1
        %s117 = scalar_lea.sflag [#allocation6], %s116
        %s118 = sand.u32 %s30, 1
        %s119 = smul.addr %s118, 16
        %s120 = scalar_lea.vmem [#allocation5], %s119
        // Predicated region
        $region25: #{soft_erosion.3} parent=23 // pred_check
          %p121 = pneg %p43
        $region26: #{soft_erosion.3} parent=23 // pred_check_branch
          %123 = sbr.rel (%p121) target = $region28
        $region27: #{soft_erosion.3} parent=23 // pred_region
          %124 = dma.done %s117, 256
        $region28: #{soft_erosion.3} parent=23 // pred_fallthru
          _
        %s125 = sand.u32 %s30, 1
        %s126 = scalar_lea.sflag [#allocation6], %s125
        %s127 = sand.u32 %s30, 1
        %s128 = smul.addr %s127, 16
        %s129 = scalar_lea.vmem [#allocation5], %s128
        %p130 = pneg %p43
        %p131 = pneg %p40
        %p132 = pneg %p69
        %p133 = pneg %p66
        %p134 = scmp.lt.s32.totalorder %s22, 1
        %s135 = scalar_select %p134, %s22, 1
        %s136 = smul.addr %s135, 2
        %s137 = smul.addr %s136, 8
        %s138 = scalar_lea.vmem %s2, %s137
        %p139 = scmp.lt.s32.totalorder %s22, 1
        %s140 = scalar_select %p139, %s22, 1
        %s141 = smul.addr %s140, 2
        %s142 = smul.addr %s141, 8
        %s143 = scalar_lea.vmem %s2, %s142
        %144 = vst [vmem:[#allocation2] sm:$0xff] 0.0
        %vm145 = vcmask 113664
        %146 = vst.msk [vmem:[#allocation2 + $0x8] sm:$0xff] %vm145, 0.0
        %147 = vst [vmem:[#allocation2 + $0x10] sm:$0xff] 0.0
        %148 = vst.msk [vmem:[#allocation2 + $0x18] sm:$0xff] %vm145, 0.0
        %149 = vst [vmem:[#allocation2 + $0x20] sm:$0xff] 0.0
        %150 = vst.msk [vmem:[#allocation2 + $0x28] sm:$0xff] %vm145, 0.0
        %151 = vst [vmem:[#allocation2 + $0x30] sm:$0x3f] 0.0
        %vm152 = vcmask 111616
        %153 = vst.msk [vmem:[#allocation2 + $0x38] sm:$0x3f] %vm152, 0.0
        %v154 = vld [vmem:[%s120] sm:$0xff]
        %v155 = vld [vmem:[%s120 + $0x8] sm:$0xff]
        %vm158 = vcmask 1046528
        %v159 = vrot.slane %v154, 1
        %v160 = vrot.slane %v155, 1
        %v161 = vsel %vm158, %v159, %v160
        %162 = vrot.lane.b32.xlu0 %v159, 7
        %v163 = vpop.permute.xlu0 %162
        %164 = vrot.lane.b32.xlu0 %v161, 7
        %v165 = vpop.permute.xlu0 %164
        %166 = vrot.lane.b32.xlu0 %v160, 7
        %v167 = vpop.permute.xlu0 %166
        %vm171 = vcmask 187455
        %172 = vst.msk [vmem:[#allocation2] sm:$0x80] %vm171, %v163
        %vm173 = vcmask 187448
        %174 = vst.msk [vmem:[#allocation2 + $0x10] sm:$0xff] %vm173, %v165
        %vm175 = vcmask 186424
        %176 = vst.msk [vmem:[#allocation2 + $0x20] sm:$0x7f] %vm175, %v167
        %v177 = vld [vmem:[#allocation2] sm:$0xff]
        %v178 = vld [vmem:[#allocation2 + $0x8] sm:$0xff]
        %v179 = vld [vmem:[#allocation2 + $0x10] sm:$0xff]
        %v180 = vld [vmem:[#allocation2 + $0x18] sm:$0xff]
        %v181 = vld [vmem:[#allocation2 + $0x10] sm:$0xc0]
        %v182 = vld [vmem:[#allocation2 + $0x18] sm:$0xc0]
        %v183 = vld [vmem:[#allocation2 + $0x20] sm:$0xff]
        %v184 = vld [vmem:[#allocation2 + $0x28] sm:$0xff]
        %v185 = vld [vmem:[#allocation2 + $0x30] sm:$0x3f]
        %v186 = vld [vmem:[#allocation2 + $0x38] sm:$0x3f]
        %vm193 = vcmask 1041408
        %v194 = vrot.slane %v181, 6
        %v195 = vrot.slane %v183, 6
        %v196 = vsel %vm193, %v194, %v195
        %v197 = vrot.slane %v182, 6
        %v198 = vrot.slane %v184, 6
        %v199 = vsel %vm193, %v197, %v198
        %v200 = vrot.slane %v185, 6
        %v201 = vsel %vm193, %v195, %v200
        %v202 = vrot.slane %v186, 6
        %v203 = vsel %vm193, %v198, %v202
        %v208 = vadd.f32 %v177, %v196
        %v209 = vadd.f32 %v178, %v199
        %v210 = vadd.f32 %v179, %v201
        %v211 = vadd.f32 %v180, %v203
        %216 = vrot.lane.b32.xlu0 %v208, 114
        %v217 = vpop.permute.xlu0 %216
        %218 = vrot.lane.b32.xlu0 %v209, 114
        %v219 = vpop.permute.xlu0 %218
        %220 = vrot.lane.b32.xlu0 %v210, 114
        %v221 = vpop.permute.xlu0 %220
        %222 = vrot.lane.b32.xlu0 %v211, 114
        %v223 = vpop.permute.xlu0 %222
        %vm224 = vcmask 932864
        %v225 = vsel %vm224, %v217, %v219
        %v226 = vsel %vm224, %v221, %v223
        %v229 = vadd.f32 %v208, %v225
        %v230 = vadd.f32 %v210, %v226
        %s231 = sld [smem:[#allocation4]]
        %v232 = vstv %s231
        %v233 = vmul.f32 %v232, %v229
        %v234 = vmul.f32 %v232, %v230
        %v235 = vadd.f32 %v233, 0.0
        %v236 = vadd.f32 %v234, 0.0
        %237 = vrot.lane.b32.xlu0 %v208, 116
        %v238 = vpop.permute.xlu0 %237
        %239 = vrot.lane.b32.xlu0 %v209, 116
        %v240 = vpop.permute.xlu0 %239
        %241 = vrot.lane.b32.xlu0 %v210, 116
        %v242 = vpop.permute.xlu0 %241
        %243 = vrot.lane.b32.xlu0 %v211, 116
        %v244 = vpop.permute.xlu0 %243
        %vm245 = vcmask 949248
        %v246 = vsel %vm245, %v238, %v240
        %v247 = vsel %vm245, %v242, %v244
        %v252 = vadd.f32 %v208, %v246
        %v253 = vadd.f32 %v209, %v240
        %v254 = vadd.f32 %v210, %v247
        %v255 = vadd.f32 %v211, %v244
        %s256 = sld [smem:[#allocation4 + $0x1]]
        %v257 = vstv %s256
        %v258 = vmul.f32 %v257, %v252
        %v259 = vmul.f32 %v257, %v253
        %v260 = vmul.f32 %v257, %v254
        %v261 = vmul.f32 %v257, %v255
        %266 = vrot.lane.b32.xlu0 %v258, 127
        %v267 = vpop.permute.xlu0 %266
        %268 = vrot.lane.b32.xlu0 %v259, 127
        %v269 = vpop.permute.xlu0 %268
        %270 = vrot.lane.b32.xlu0 %v260, 127
        %v271 = vpop.permute.xlu0 %270
        %272 = vrot.lane.b32.xlu0 %v261, 127
        %v273 = vpop.permute.xlu0 %272
        %vm274 = vcmask 1039360
        %v275 = vsel %vm274, %v267, %v269
        %v276 = vsel %vm274, %v271, %v273
        %v279 = vadd.f32 %v235, %v275
        %v280 = vadd.f32 %v236, %v276
        %281 = vrot.lane.b32.xlu0 %v208, 118
        %v282 = vpop.permute.xlu0 %281
        %283 = vrot.lane.b32.xlu0 %v209, 118
        %v284 = vpop.permute.xlu0 %283
        %285 = vrot.lane.b32.xlu0 %v210, 118
        %v286 = vpop.permute.xlu0 %285
        %287 = vrot.lane.b32.xlu0 %v211, 118
        %v288 = vpop.permute.xlu0 %287
        %vm289 = vcmask 965632
        %v290 = vsel %vm289, %v282, %v284
        %v291 = vsel %vm289, %v286, %v288
        %v296 = vadd.f32 %v208, %v290
        %v297 = vadd.f32 %v209, %v284
        %v298 = vadd.f32 %v210, %v291
        %v299 = vadd.f32 %v211, %v288
        %s300 = sld [smem:[#allocation4 + $0x2]]
        %v301 = vstv %s300
        %v302 = vmul.f32 %v301, %v296
        %v303 = vmul.f32 %v301, %v297
        %v304 = vmul.f32 %v301, %v298
        %v305 = vmul.f32 %v301, %v299
        %310 = vrot.lane.b32.xlu0 %v302, 126
        %v311 = vpop.permute.xlu0 %310
        %312 = vrot.lane.b32.xlu0 %v303, 126
        %v313 = vpop.permute.xlu0 %312
        %314 = vrot.lane.b32.xlu0 %v304, 126
        %v315 = vpop.permute.xlu0 %314
        %316 = vrot.lane.b32.xlu0 %v305, 126
        %v317 = vpop.permute.xlu0 %316
        %vm318 = vcmask 1031168
        %v319 = vsel %vm318, %v311, %v313
        %v320 = vsel %vm318, %v315, %v317
        %v323 = vadd.f32 %v279, %v319
        %v324 = vadd.f32 %v280, %v320
        %325 = vrot.lane.b32.xlu0 %v208, 120
        %v326 = vpop.permute.xlu0 %325
        %327 = vrot.lane.b32.xlu0 %v209, 120
        %v328 = vpop.permute.xlu0 %327
        %329 = vrot.lane.b32.xlu0 %v210, 120
        %v330 = vpop.permute.xlu0 %329
        %331 = vrot.lane.b32.xlu0 %v211, 120
        %v332 = vpop.permute.xlu0 %331
        %vm333 = vcmask 982016
        %v334 = vsel %vm333, %v326, %v328
        %v335 = vsel %vm333, %v330, %v332
        %v340 = vadd.f32 %v208, %v334
        %v341 = vadd.f32 %v209, %v328
        %v342 = vadd.f32 %v210, %v335
        %v343 = vadd.f32 %v211, %v332
        %s344 = sld [smem:[#allocation4 + $0x3]]
        %v345 = vstv %s344
        %v346 = vmul.f32 %v345, %v340
        %v347 = vmul.f32 %v345, %v341
        %v348 = vmul.f32 %v345, %v342
        %v349 = vmul.f32 %v345, %v343
        %354 = vrot.lane.b32.xlu0 %v346, 125
        %v355 = vpop.permute.xlu0 %354
        %356 = vrot.lane.b32.xlu0 %v347, 125
        %v357 = vpop.permute.xlu0 %356
        %358 = vrot.lane.b32.xlu0 %v348, 125
        %v359 = vpop.permute.xlu0 %358
        %360 = vrot.lane.b32.xlu0 %v349, 125
        %v361 = vpop.permute.xlu0 %360
        %vm362 = vcmask 1022976
        %v363 = vsel %vm362, %v355, %v357
        %v364 = vsel %vm362, %v359, %v361
        %v367 = vadd.f32 %v323, %v363
        %v368 = vadd.f32 %v324, %v364
        %369 = vrot.lane.b32.xlu0 %v208, 122
        %v370 = vpop.permute.xlu0 %369
        %371 = vrot.lane.b32.xlu0 %v209, 122
        %v372 = vpop.permute.xlu0 %371
        %373 = vrot.lane.b32.xlu0 %v210, 122
        %v374 = vpop.permute.xlu0 %373
        %375 = vrot.lane.b32.xlu0 %v211, 122
        %v376 = vpop.permute.xlu0 %375
        %vm377 = vcmask 998400
        %v378 = vsel %vm377, %v370, %v372
        %v379 = vsel %vm377, %v374, %v376
        %v384 = vadd.f32 %v208, %v378
        %v385 = vadd.f32 %v209, %v372
        %v386 = vadd.f32 %v210, %v379
        %v387 = vadd.f32 %v211, %v376
        %s388 = sld [smem:[#allocation4 + $0x4]]
        %v389 = vstv %s388
        %v390 = vmul.f32 %v389, %v384
        %v391 = vmul.f32 %v389, %v385
        %v392 = vmul.f32 %v389, %v386
        %v393 = vmul.f32 %v389, %v387
        %398 = vrot.lane.b32.xlu0 %v390, 124
        %v399 = vpop.permute.xlu0 %398
        %400 = vrot.lane.b32.xlu0 %v391, 124
        %v401 = vpop.permute.xlu0 %400
        %402 = vrot.lane.b32.xlu0 %v392, 124
        %v403 = vpop.permute.xlu0 %402
        %404 = vrot.lane.b32.xlu0 %v393, 124
        %v405 = vpop.permute.xlu0 %404
        %vm406 = vcmask 1014784
        %v407 = vsel %vm406, %v399, %v401
        %v408 = vsel %vm406, %v403, %v405
        %v411 = vadd.f32 %v367, %v407
        %v412 = vadd.f32 %v368, %v408
        %413 = vrot.lane.b32.xlu0 %v208, 124
        %v414 = vpop.permute.xlu0 %413
        %415 = vrot.lane.b32.xlu0 %v209, 124
        %v416 = vpop.permute.xlu0 %415
        %417 = vrot.lane.b32.xlu0 %v210, 124
        %v418 = vpop.permute.xlu0 %417
        %419 = vrot.lane.b32.xlu0 %v211, 124
        %v420 = vpop.permute.xlu0 %419
        %v421 = vsel %vm406, %v414, %v416
        %v422 = vsel %vm406, %v418, %v420
        %v427 = vadd.f32 %v208, %v421
        %v428 = vadd.f32 %v209, %v416
        %v429 = vadd.f32 %v210, %v422
        %v430 = vadd.f32 %v211, %v420
        %s431 = sld [smem:[#allocation4 + $0x5]]
        %v432 = vstv %s431
        %v433 = vmul.f32 %v432, %v427
        %v434 = vmul.f32 %v432, %v428
        %v435 = vmul.f32 %v432, %v429
        %v436 = vmul.f32 %v432, %v430
        %441 = vrot.lane.b32.xlu0 %v433, 123
        %v442 = vpop.permute.xlu0 %441
        %443 = vrot.lane.b32.xlu0 %v434, 123
        %v444 = vpop.permute.xlu0 %443
        %445 = vrot.lane.b32.xlu0 %v435, 123
        %v446 = vpop.permute.xlu0 %445
        %447 = vrot.lane.b32.xlu0 %v436, 123
        %v448 = vpop.permute.xlu0 %447
        %vm449 = vcmask 1006592
        %v450 = vsel %vm449, %v442, %v444
        %v451 = vsel %vm449, %v446, %v448
        %v454 = vadd.f32 %v411, %v450
        %v455 = vadd.f32 %v412, %v451
        %456 = vrot.lane.b32.xlu0 %v208, 126
        %v457 = vpop.permute.xlu0 %456
        %458 = vrot.lane.b32.xlu0 %v209, 126
        %v459 = vpop.permute.xlu0 %458
        %460 = vrot.lane.b32.xlu0 %v210, 126
        %v461 = vpop.permute.xlu0 %460
        %462 = vrot.lane.b32.xlu0 %v211, 126
        %v463 = vpop.permute.xlu0 %462
        %v464 = vsel %vm318, %v457, %v459
        %v465 = vsel %vm318, %v461, %v463
        %v470 = vadd.f32 %v208, %v464
        %v471 = vadd.f32 %v209, %v459
        %v472 = vadd.f32 %v210, %v465
        %v473 = vadd.f32 %v211, %v463
        %s474 = sld [smem:[#allocation4 + $0x6]]
        %v475 = vstv %s474
        %v476 = vmul.f32 %v475, %v470
        %v477 = vmul.f32 %v475, %v471
        %v478 = vmul.f32 %v475, %v472
        %v479 = vmul.f32 %v475, %v473
        %484 = vrot.lane.b32.xlu0 %v476, 122
        %v485 = vpop.permute.xlu0 %484
        %486 = vrot.lane.b32.xlu0 %v477, 122
        %v487 = vpop.permute.xlu0 %486
        %488 = vrot.lane.b32.xlu0 %v478, 122
        %v489 = vpop.permute.xlu0 %488
        %490 = vrot.lane.b32.xlu0 %v479, 122
        %v491 = vpop.permute.xlu0 %490
        %v492 = vsel %vm377, %v485, %v487
        %v493 = vsel %vm377, %v489, %v491
        %v496 = vadd.f32 %v454, %v492
        %v497 = vadd.f32 %v455, %v493
        %s498 = sld [smem:[#allocation4 + $0x7]]
        %v499 = vstv %s498
        %v500 = vmul.f32 %v499, %v208
        %v501 = vmul.f32 %v499, %v209
        %v502 = vmul.f32 %v499, %v210
        %v503 = vmul.f32 %v499, %v211
        %508 = vrot.lane.b32.xlu0 %v500, 121
        %v509 = vpop.permute.xlu0 %508
        %510 = vrot.lane.b32.xlu0 %v501, 121
        %v511 = vpop.permute.xlu0 %510
        %512 = vrot.lane.b32.xlu0 %v502, 121
        %v513 = vpop.permute.xlu0 %512
        %514 = vrot.lane.b32.xlu0 %v503, 121
        %v515 = vpop.permute.xlu0 %514
        %vm516 = vcmask 990208
        %v517 = vsel %vm516, %v509, %v511
        %v518 = vsel %vm516, %v513, %v515
        %v521 = vadd.f32 %v496, %v517
        %v522 = vadd.f32 %v497, %v518
        %v523 = vld [vmem:[#allocation2] sm:$0xfe]
        %v524 = vld [vmem:[#allocation2 + $0x8] sm:$0xfe]
        %v525 = vld [vmem:[#allocation2 + $0x10] sm:$0xff]
        %v526 = vld [vmem:[#allocation2 + $0x18] sm:$0xff]
        %v527 = vld [vmem:[#allocation2 + $0x20] sm:$0x1]
        %v528 = vld [vmem:[#allocation2 + $0x28] sm:$0x1]
        %v529 = vld [vmem:[#allocation2 + $0x10] sm:$0xe0]
        %v530 = vld [vmem:[#allocation2 + $0x18] sm:$0xe0]
        %v531 = vld [vmem:[#allocation2 + $0x30] sm:$0x1f]
        %v532 = vld [vmem:[#allocation2 + $0x38] sm:$0x1f]
        %vm537 = vcmask 1043456
        %v538 = vrot.slane %v529, 4
        %v539 = vrot.slane %v183, 4
        %v540 = vsel %vm537, %v538, %v539
        %v541 = vrot.slane %v530, 4
        %v542 = vrot.slane %v184, 4
        %v543 = vsel %vm537, %v541, %v542
        %v544 = vrot.slane %v531, 4
        %v545 = vsel %vm537, %v539, %v544
        %v546 = vrot.slane %v532, 4
        %v547 = vsel %vm537, %v542, %v546
        %v554 = vadd.f32 %v523, %v540
        %v555 = vadd.f32 %v524, %v543
        %v556 = vadd.f32 %v525, %v545
        %v557 = vadd.f32 %v526, %v547
        %v558 = vadd.f32 %v527, %v544
        %v559 = vadd.f32 %v528, %v546
        %566 = vrot.lane.b32.xlu0 %v554, 114
        %v567 = vpop.permute.xlu0 %566
        %568 = vrot.lane.b32.xlu0 %v555, 114
        %v569 = vpop.permute.xlu0 %568
        %570 = vrot.lane.b32.xlu0 %v556, 114
        %v571 = vpop.permute.xlu0 %570
        %572 = vrot.lane.b32.xlu0 %v557, 114
        %v573 = vpop.permute.xlu0 %572
        %574 = vrot.lane.b32.xlu0 %v558, 114
        %v575 = vpop.permute.xlu0 %574
        %576 = vrot.lane.b32.xlu0 %v559, 114
        %v577 = vpop.permute.xlu0 %576
        %v578 = vsel %vm224, %v567, %v569
        %v579 = vsel %vm224, %v571, %v573
        %v580 = vsel %vm224, %v575, %v577
        %v584 = vadd.f32 %v554, %v578
        %v585 = vadd.f32 %v556, %v579
        %v586 = vadd.f32 %v558, %v580
        %s587 = sld [smem:[#allocation4 + $0xf]]
        %v588 = vstv %s587
        %v589 = vmul.f32 %v588, %v584
        %v590 = vmul.f32 %v588, %v585
        %v591 = vmul.f32 %v588, %v586
        %v595 = vrot.slane %v589, 1
        %v596 = vrot.slane %v590, 1
        %v597 = vsel %vm158, %v595, %v596
        %v598 = vrot.slane %v591, 1
        %v599 = vsel %vm158, %v596, %v598
        %v602 = vadd.f32 %v521, %v597
        %v603 = vadd.f32 %v522, %v599
        %604 = vrot.lane.b32.xlu0 %v554, 116
        %v605 = vpop.permute.xlu0 %604
        %606 = vrot.lane.b32.xlu0 %v555, 116
        %v607 = vpop.permute.xlu0 %606
        %608 = vrot.lane.b32.xlu0 %v556, 116
        %v609 = vpop.permute.xlu0 %608
        %610 = vrot.lane.b32.xlu0 %v557, 116
        %v611 = vpop.permute.xlu0 %610
        %612 = vrot.lane.b32.xlu0 %v558, 116
        %v613 = vpop.permute.xlu0 %612
        %614 = vrot.lane.b32.xlu0 %v559, 116
        %v615 = vpop.permute.xlu0 %614
        %v616 = vsel %vm245, %v605, %v607
        %v617 = vsel %vm245, %v609, %v611
        %v618 = vsel %vm245, %v613, %v615
        %v625 = vadd.f32 %v554, %v616
        %v626 = vadd.f32 %v555, %v607
        %v627 = vadd.f32 %v556, %v617
        %v628 = vadd.f32 %v557, %v611
        %v629 = vadd.f32 %v558, %v618
        %v630 = vadd.f32 %v559, %v615
        %s631 = sld [smem:[#allocation4 + $0x10]]
        %v632 = vstv %s631
        %v633 = vmul.f32 %v632, %v625
        %v634 = vmul.f32 %v632, %v626
        %v635 = vmul.f32 %v632, %v627
        %v636 = vmul.f32 %v632, %v628
        %v637 = vmul.f32 %v632, %v629
        %v638 = vmul.f32 %v632, %v630
        %v645 = vrot.slane %v633, 1
        %v646 = vrot.slane %v635, 1
        %v647 = vsel %vm158, %v645, %v646
        %v648 = vrot.slane %v634, 1
        %v649 = vrot.slane %v636, 1
        %v650 = vsel %vm158, %v648, %v649
        %v651 = vrot.slane %v637, 1
        %v652 = vsel %vm158, %v646, %v651
        %v653 = vrot.slane %v638, 1
        %v654 = vsel %vm158, %v649, %v653
        %655 = vrot.lane.b32.xlu0 %v647, 127
        %v656 = vpop.permute.xlu0 %655
        %657 = vrot.lane.b32.xlu0 %v650, 127
        %v658 = vpop.permute.xlu0 %657
        %659 = vrot.lane.b32.xlu0 %v652, 127
        %v660 = vpop.permute.xlu0 %659
        %661 = vrot.lane.b32.xlu0 %v654, 127
        %v662 = vpop.permute.xlu0 %661
        %v663 = vsel %vm274, %v656, %v658
        %v664 = vsel %vm274, %v660, %v662
        %v667 = vadd.f32 %v602, %v663
        %v668 = vadd.f32 %v603, %v664
        %669 = vrot.lane.b32.xlu0 %v554, 118
        %v670 = vpop.permute.xlu0 %669
        %671 = vrot.lane.b32.xlu0 %v555, 118
        %v672 = vpop.permute.xlu0 %671
        %673 = vrot.lane.b32.xlu0 %v556, 118
        %v674 = vpop.permute.xlu0 %673
        %675 = vrot.lane.b32.xlu0 %v557, 118
        %v676 = vpop.permute.xlu0 %675
        %677 = vrot.lane.b32.xlu0 %v558, 118
        %v678 = vpop.permute.xlu0 %677
        %679 = vrot.lane.b32.xlu0 %v559, 118
        %v680 = vpop.permute.xlu0 %679
        %v681 = vsel %vm289, %v670, %v672
        %v682 = vsel %vm289, %v674, %v676
        %v683 = vsel %vm289, %v678, %v680
        %v690 = vadd.f32 %v554, %v681
        %v691 = vadd.f32 %v555, %v672
        %v692 = vadd.f32 %v556, %v682
        %v693 = vadd.f32 %v557, %v676
        %v694 = vadd.f32 %v558, %v683
        %v695 = vadd.f32 %v559, %v680
        %s696 = sld [smem:[#allocation4 + $0x11]]
        %v697 = vstv %s696
        %v698 = vmul.f32 %v697, %v690
        %v699 = vmul.f32 %v697, %v691
        %v700 = vmul.f32 %v697, %v692
        %v701 = vmul.f32 %v697, %v693
        %v702 = vmul.f32 %v697, %v694
        %v703 = vmul.f32 %v697, %v695
        %v710 = vrot.slane %v698, 1
        %v711 = vrot.slane %v700, 1
        %v712 = vsel %vm158, %v710, %v711
        %v713 = vrot.slane %v699, 1
        %v714 = vrot.slane %v701, 1
        %v715 = vsel %vm158, %v713, %v714
        %v716 = vrot.slane %v702, 1
        %v717 = vsel %vm158, %v711, %v716
        %v718 = vrot.slane %v703, 1
        %v719 = vsel %vm158, %v714, %v718
        %720 = vrot.lane.b32.xlu0 %v712, 126
        %v721 = vpop.permute.xlu0 %720
        %722 = vrot.lane.b32.xlu0 %v715, 126
        %v723 = vpop.permute.xlu0 %722
        %724 = vrot.lane.b32.xlu0 %v717, 126
        %v725 = vpop.permute.xlu0 %724
        %726 = vrot.lane.b32.xlu0 %v719, 126
        %v727 = vpop.permute.xlu0 %726
        %v728 = vsel %vm318, %v721, %v723
        %v729 = vsel %vm318, %v725, %v727
        %v732 = vadd.f32 %v667, %v728
        %v733 = vadd.f32 %v668, %v729
        %734 = vrot.lane.b32.xlu0 %v554, 120
        %v735 = vpop.permute.xlu0 %734
        %736 = vrot.lane.b32.xlu0 %v555, 120
        %v737 = vpop.permute.xlu0 %736
        %738 = vrot.lane.b32.xlu0 %v556, 120
        %v739 = vpop.permute.xlu0 %738
        %740 = vrot.lane.b32.xlu0 %v557, 120
        %v741 = vpop.permute.xlu0 %740
        %742 = vrot.lane.b32.xlu0 %v558, 120
        %v743 = vpop.permute.xlu0 %742
        %744 = vrot.lane.b32.xlu0 %v559, 120
        %v745 = vpop.permute.xlu0 %744
        %v746 = vsel %vm333, %v735, %v737
        %v747 = vsel %vm333, %v739, %v741
        %v748 = vsel %vm333, %v743, %v745
        %v755 = vadd.f32 %v554, %v746
        %v756 = vadd.f32 %v555, %v737
        %v757 = vadd.f32 %v556, %v747
        %v758 = vadd.f32 %v557, %v741
        %v759 = vadd.f32 %v558, %v748
        %v760 = vadd.f32 %v559, %v745
        %s761 = sld [smem:[#allocation4 + $0x12]]
        %v762 = vstv %s761
        %v763 = vmul.f32 %v762, %v755
        %v764 = vmul.f32 %v762, %v756
        %v765 = vmul.f32 %v762, %v757
        %v766 = vmul.f32 %v762, %v758
        %v767 = vmul.f32 %v762, %v759
        %v768 = vmul.f32 %v762, %v760
        %v775 = vrot.slane %v763, 1
        %v776 = vrot.slane %v765, 1
        %v777 = vsel %vm158, %v775, %v776
        %v778 = vrot.slane %v764, 1
        %v779 = vrot.slane %v766, 1
        %v780 = vsel %vm158, %v778, %v779
        %v781 = vrot.slane %v767, 1
        %v782 = vsel %vm158, %v776, %v781
        %v783 = vrot.slane %v768, 1
        %v784 = vsel %vm158, %v779, %v783
        %785 = vrot.lane.b32.xlu0 %v777, 125
        %v786 = vpop.permute.xlu0 %785
        %787 = vrot.lane.b32.xlu0 %v780, 125
        %v788 = vpop.permute.xlu0 %787
        %789 = vrot.lane.b32.xlu0 %v782, 125
        %v790 = vpop.permute.xlu0 %789
        %791 = vrot.lane.b32.xlu0 %v784, 125
        %v792 = vpop.permute.xlu0 %791
        %v793 = vsel %vm362, %v786, %v788
        %v794 = vsel %vm362, %v790, %v792
        %v797 = vadd.f32 %v732, %v793
        %v798 = vadd.f32 %v733, %v794
        %799 = vrot.lane.b32.xlu0 %v554, 122
        %v800 = vpop.permute.xlu0 %799
        %801 = vrot.lane.b32.xlu0 %v555, 122
        %v802 = vpop.permute.xlu0 %801
        %803 = vrot.lane.b32.xlu0 %v556, 122
        %v804 = vpop.permute.xlu0 %803
        %805 = vrot.lane.b32.xlu0 %v557, 122
        %v806 = vpop.permute.xlu0 %805
        %807 = vrot.lane.b32.xlu0 %v558, 122
        %v808 = vpop.permute.xlu0 %807
        %809 = vrot.lane.b32.xlu0 %v559, 122
        %v810 = vpop.permute.xlu0 %809
        %v811 = vsel %vm377, %v800, %v802
        %v812 = vsel %vm377, %v804, %v806
        %v813 = vsel %vm377, %v808, %v810
        %v820 = vadd.f32 %v554, %v811
        %v821 = vadd.f32 %v555, %v802
        %v822 = vadd.f32 %v556, %v812
        %v823 = vadd.f32 %v557, %v806
        %v824 = vadd.f32 %v558, %v813
        %v825 = vadd.f32 %v559, %v810
        %s826 = sld [smem:[#allocation4 + $0x13]]
        %v827 = vstv %s826
        %v828 = vmul.f32 %v827, %v820
        %v829 = vmul.f32 %v827, %v821
        %v830 = vmul.f32 %v827, %v822
        %v831 = vmul.f32 %v827, %v823
        %v832 = vmul.f32 %v827, %v824
        %v833 = vmul.f32 %v827, %v825
        %v840 = vrot.slane %v828, 1
        %v841 = vrot.slane %v830, 1
        %v842 = vsel %vm158, %v840, %v841
        %v843 = vrot.slane %v829, 1
        %v844 = vrot.slane %v831, 1
        %v845 = vsel %vm158, %v843, %v844
        %v846 = vrot.slane %v832, 1
        %v847 = vsel %vm158, %v841, %v846
        %v848 = vrot.slane %v833, 1
        %v849 = vsel %vm158, %v844, %v848
        %850 = vrot.lane.b32.xlu0 %v842, 124
        %v851 = vpop.permute.xlu0 %850
        %852 = vrot.lane.b32.xlu0 %v845, 124
        %v853 = vpop.permute.xlu0 %852
        %854 = vrot.lane.b32.xlu0 %v847, 124
        %v855 = vpop.permute.xlu0 %854
        %856 = vrot.lane.b32.xlu0 %v849, 124
        %v857 = vpop.permute.xlu0 %856
        %v858 = vsel %vm406, %v851, %v853
        %v859 = vsel %vm406, %v855, %v857
        %v862 = vadd.f32 %v797, %v858
        %v863 = vadd.f32 %v798, %v859
        %864 = vrot.lane.b32.xlu0 %v554, 124
        %v865 = vpop.permute.xlu0 %864
        %866 = vrot.lane.b32.xlu0 %v555, 124
        %v867 = vpop.permute.xlu0 %866
        %868 = vrot.lane.b32.xlu0 %v556, 124
        %v869 = vpop.permute.xlu0 %868
        %870 = vrot.lane.b32.xlu0 %v557, 124
        %v871 = vpop.permute.xlu0 %870
        %872 = vrot.lane.b32.xlu0 %v558, 124
        %v873 = vpop.permute.xlu0 %872
        %874 = vrot.lane.b32.xlu0 %v559, 124
        %v875 = vpop.permute.xlu0 %874
        %v876 = vsel %vm406, %v865, %v867
        %v877 = vsel %vm406, %v869, %v871
        %v878 = vsel %vm406, %v873, %v875
        %v885 = vadd.f32 %v554, %v876
        %v886 = vadd.f32 %v555, %v867
        %v887 = vadd.f32 %v556, %v877
        %v888 = vadd.f32 %v557, %v871
        %v889 = vadd.f32 %v558, %v878
        %v890 = vadd.f32 %v559, %v875
        %s891 = sld [smem:[#allocation4 + $0x14]]
        %v892 = vstv %s891
        %v893 = vmul.f32 %v892, %v885
        %v894 = vmul.f32 %v892, %v886
        %v895 = vmul.f32 %v892, %v887
        %v896 = vmul.f32 %v892, %v888
        %v897 = vmul.f32 %v892, %v889
        %v898 = vmul.f32 %v892, %v890
        %v905 = vrot.slane %v893, 1
        %v906 = vrot.slane %v895, 1
        %v907 = vsel %vm158, %v905, %v906
        %v908 = vrot.slane %v894, 1
        %v909 = vrot.slane %v896, 1
        %v910 = vsel %vm158, %v908, %v909
        %v911 = vrot.slane %v897, 1
        %v912 = vsel %vm158, %v906, %v911
        %v913 = vrot.slane %v898, 1
        %v914 = vsel %vm158, %v909, %v913
        %915 = vrot.lane.b32.xlu0 %v907, 123
        %v916 = vpop.permute.xlu0 %915
        %917 = vrot.lane.b32.xlu0 %v910, 123
        %v918 = vpop.permute.xlu0 %917
        %919 = vrot.lane.b32.xlu0 %v912, 123
        %v920 = vpop.permute.xlu0 %919
        %921 = vrot.lane.b32.xlu0 %v914, 123
        %v922 = vpop.permute.xlu0 %921
        %v923 = vsel %vm449, %v916, %v918
        %v924 = vsel %vm449, %v920, %v922
        %v927 = vadd.f32 %v862, %v923
        %v928 = vadd.f32 %v863, %v924
        %929 = vrot.lane.b32.xlu0 %v554, 126
        %v930 = vpop.permute.xlu0 %929
        %931 = vrot.lane.b32.xlu0 %v555, 126
        %v932 = vpop.permute.xlu0 %931
        %933 = vrot.lane.b32.xlu0 %v556, 126
        %v934 = vpop.permute.xlu0 %933
        %935 = vrot.lane.b32.xlu0 %v557, 126
        %v936 = vpop.permute.xlu0 %935
        %937 = vrot.lane.b32.xlu0 %v558, 126
        %v938 = vpop.permute.xlu0 %937
        %939 = vrot.lane.b32.xlu0 %v559, 126
        %v940 = vpop.permute.xlu0 %939
        %v941 = vsel %vm318, %v930, %v932
        %v942 = vsel %vm318, %v934, %v936
        %v943 = vsel %vm318, %v938, %v940
        %v950 = vadd.f32 %v554, %v941
        %v951 = vadd.f32 %v555, %v932
        %v952 = vadd.f32 %v556, %v942
        %v953 = vadd.f32 %v557, %v936
        %v954 = vadd.f32 %v558, %v943
        %v955 = vadd.f32 %v559, %v940
        %s956 = sld [smem:[#allocation4 + $0x15]]
        %v957 = vstv %s956
        %v958 = vmul.f32 %v957, %v950
        %v959 = vmul.f32 %v957, %v951
        %v960 = vmul.f32 %v957, %v952
        %v961 = vmul.f32 %v957, %v953
        %v962 = vmul.f32 %v957, %v954
        %v963 = vmul.f32 %v957, %v955
        %v970 = vrot.slane %v958, 1
        %v971 = vrot.slane %v960, 1
        %v972 = vsel %vm158, %v970, %v971
        %v973 = vrot.slane %v959, 1
        %v974 = vrot.slane %v961, 1
        %v975 = vsel %vm158, %v973, %v974
        %v976 = vrot.slane %v962, 1
        %v977 = vsel %vm158, %v971, %v976
        %v978 = vrot.slane %v963, 1
        %v979 = vsel %vm158, %v974, %v978
        %980 = vrot.lane.b32.xlu0 %v972, 122
        %v981 = vpop.permute.xlu0 %980
        %982 = vrot.lane.b32.xlu0 %v975, 122
        %v983 = vpop.permute.xlu0 %982
        %984 = vrot.lane.b32.xlu0 %v977, 122
        %v985 = vpop.permute.xlu0 %984
        %986 = vrot.lane.b32.xlu0 %v979, 122
        %v987 = vpop.permute.xlu0 %986
        %v988 = vsel %vm377, %v981, %v983
        %v989 = vsel %vm377, %v985, %v987
        %v992 = vadd.f32 %v927, %v988
        %v993 = vadd.f32 %v928, %v989
        %s994 = sld [smem:[#allocation4 + $0x16]]
        %v995 = vstv %s994
        %v996 = vmul.f32 %v995, %v554
        %v997 = vmul.f32 %v995, %v555
        %v998 = vmul.f32 %v995, %v556
        %v999 = vmul.f32 %v995, %v557
        %v1000 = vmul.f32 %v995, %v558
        %v1001 = vmul.f32 %v995, %v559
        %v1008 = vrot.slane %v996, 1
        %v1009 = vrot.slane %v998, 1
        %v1010 = vsel %vm158, %v1008, %v1009
        %v1011 = vrot.slane %v997, 1
        %v1012 = vrot.slane %v999, 1
        %v1013 = vsel %vm158, %v1011, %v1012
        %v1014 = vrot.slane %v1000, 1
        %v1015 = vsel %vm158, %v1009, %v1014
        %v1016 = vrot.slane %v1001, 1
        %v1017 = vsel %vm158, %v1012, %v1016
        %1018 = vrot.lane.b32.xlu0 %v1010, 121
        %v1019 = vpop.permute.xlu0 %1018
        %1020 = vrot.lane.b32.xlu0 %v1013, 121
        %v1021 = vpop.permute.xlu0 %1020
        %1022 = vrot.lane.b32.xlu0 %v1015, 121
        %v1023 = vpop.permute.xlu0 %1022
        %1024 = vrot.lane.b32.xlu0 %v1017, 121
        %v1025 = vpop.permute.xlu0 %1024
        %v1026 = vsel %vm516, %v1019, %v1021
        %v1027 = vsel %vm516, %v1023, %v1025
        %v1030 = vadd.f32 %v992, %v1026
        %v1031 = vadd.f32 %v993, %v1027
        %v1032 = vld [vmem:[#allocation2] sm:$0xfc]
        %v1033 = vld [vmem:[#allocation2 + $0x8] sm:$0xfc]
        %v1034 = vld [vmem:[#allocation2 + $0x20] sm:$0x3]
        %v1035 = vld [vmem:[#allocation2 + $0x28] sm:$0x3]
        %v1036 = vld [vmem:[#allocation2 + $0x10] sm:$0xf0]
        %v1037 = vld [vmem:[#allocation2 + $0x18] sm:$0xf0]
        %v1038 = vld [vmem:[#allocation2 + $0x30] sm:$0xf]
        %v1039 = vld [vmem:[#allocation2 + $0x38] sm:$0xf]
        %vm1044 = vcmask 1045504
        %v1045 = vrot.slane %v1036, 2
        %v1046 = vrot.slane %v183, 2
        %v1047 = vsel %vm1044, %v1045, %v1046
        %v1048 = vrot.slane %v1037, 2
        %v1049 = vrot.slane %v184, 2
        %v1050 = vsel %vm1044, %v1048, %v1049
        %v1051 = vrot.slane %v1038, 2
        %v1052 = vsel %vm1044, %v1046, %v1051
        %v1053 = vrot.slane %v1039, 2
        %v1054 = vsel %vm1044, %v1049, %v1053
        %v1061 = vadd.f32 %v1032, %v1047
        %v1062 = vadd.f32 %v1033, %v1050
        %v1063 = vadd.f32 %v525, %v1052
        %v1064 = vadd.f32 %v526, %v1054
        %v1065 = vadd.f32 %v1034, %v1051
        %v1066 = vadd.f32 %v1035, %v1053
        %1073 = vrot.lane.b32.xlu0 %v1061, 114
        %v1074 = vpop.permute.xlu0 %1073
        %1075 = vrot.lane.b32.xlu0 %v1062, 114
        %v1076 = vpop.permute.xlu0 %1075
        %1077 = vrot.lane.b32.xlu0 %v1063, 114
        %v1078 = vpop.permute.xlu0 %1077
        %1079 = vrot.lane.b32.xlu0 %v1064, 114
        %v1080 = vpop.permute.xlu0 %1079
        %1081 = vrot.lane.b32.xlu0 %v1065, 114
        %v1082 = vpop.permute.xlu0 %1081
        %1083 = vrot.lane.b32.xlu0 %v1066, 114
        %v1084 = vpop.permute.xlu0 %1083
        %v1085 = vsel %vm224, %v1074, %v1076
        %v1086 = vsel %vm224, %v1078, %v1080
        %v1087 = vsel %vm224, %v1082, %v1084
        %v1091 = vadd.f32 %v1061, %v1085
        %v1092 = vadd.f32 %v1063, %v1086
        %v1093 = vadd.f32 %v1065, %v1087
        %s1094 = sld [smem:[#allocation4 + $0x1e]]
        %v1095 = vstv %s1094
        %v1096 = vmul.f32 %v1095, %v1091
        %v1097 = vmul.f32 %v1095, %v1092
        %v1098 = vmul.f32 %v1095, %v1093
        %v1102 = vrot.slane %v1096, 2
        %v1103 = vrot.slane %v1097, 2
        %v1104 = vsel %vm1044, %v1102, %v1103
        %v1105 = vrot.slane %v1098, 2
        %v1106 = vsel %vm1044, %v1103, %v1105
        %v1109 = vadd.f32 %v1030, %v1104
        %v1110 = vadd.f32 %v1031, %v1106
        %1111 = vrot.lane.b32.xlu0 %v1061, 116
        %v1112 = vpop.permute.xlu0 %1111
        %1113 = vrot.lane.b32.xlu0 %v1062, 116
        %v1114 = vpop.permute.xlu0 %1113
        %1115 = vrot.lane.b32.xlu0 %v1063, 116
        %v1116 = vpop.permute.xlu0 %1115
        %1117 = vrot.lane.b32.xlu0 %v1064, 116
        %v1118 = vpop.permute.xlu0 %1117
        %1119 = vrot.lane.b32.xlu0 %v1065, 116
        %v1120 = vpop.permute.xlu0 %1119
        %1121 = vrot.lane.b32.xlu0 %v1066, 116
        %v1122 = vpop.permute.xlu0 %1121
        %v1123 = vsel %vm245, %v1112, %v1114
        %v1124 = vsel %vm245, %v1116, %v1118
        %v1125 = vsel %vm245, %v1120, %v1122
        %v1132 = vadd.f32 %v1061, %v1123
        %v1133 = vadd.f32 %v1062, %v1114
        %v1134 = vadd.f32 %v1063, %v1124
        %v1135 = vadd.f32 %v1064, %v1118
        %v1136 = vadd.f32 %v1065, %v1125
        %v1137 = vadd.f32 %v1066, %v1122
        %s1138 = sld [smem:[#allocation4 + $0x1f]]
        %v1139 = vstv %s1138
        %v1140 = vmul.f32 %v1139, %v1132
        %v1141 = vmul.f32 %v1139, %v1133
        %v1142 = vmul.f32 %v1139, %v1134
        %v1143 = vmul.f32 %v1139, %v1135
        %v1144 = vmul.f32 %v1139, %v1136
        %v1145 = vmul.f32 %v1139, %v1137
        %v1152 = vrot.slane %v1140, 2
        %v1153 = vrot.slane %v1142, 2
        %v1154 = vsel %vm1044, %v1152, %v1153
        %v1155 = vrot.slane %v1141, 2
        %v1156 = vrot.slane %v1143, 2
        %v1157 = vsel %vm1044, %v1155, %v1156
        %v1158 = vrot.slane %v1144, 2
        %v1159 = vsel %vm1044, %v1153, %v1158
        %v1160 = vrot.slane %v1145, 2
        %v1161 = vsel %vm1044, %v1156, %v1160
        %1162 = vrot.lane.b32.xlu0 %v1154, 127
        %v1163 = vpop.permute.xlu0 %1162
        %1164 = vrot.lane.b32.xlu0 %v1157, 127
        %v1165 = vpop.permute.xlu0 %1164
        %1166 = vrot.lane.b32.xlu0 %v1159, 127
        %v1167 = vpop.permute.xlu0 %1166
        %1168 = vrot.lane.b32.xlu0 %v1161, 127
        %v1169 = vpop.permute.xlu0 %1168
        %v1170 = vsel %vm274, %v1163, %v1165
        %v1171 = vsel %vm274, %v1167, %v1169
        %v1174 = vadd.f32 %v1109, %v1170
        %v1175 = vadd.f32 %v1110, %v1171
        %1176 = vrot.lane.b32.xlu0 %v1061, 118
        %v1177 = vpop.permute.xlu0 %1176
        %1178 = vrot.lane.b32.xlu0 %v1062, 118
        %v1179 = vpop.permute.xlu0 %1178
        %1180 = vrot.lane.b32.xlu0 %v1063, 118
        %v1181 = vpop.permute.xlu0 %1180
        %1182 = vrot.lane.b32.xlu0 %v1064, 118
        %v1183 = vpop.permute.xlu0 %1182
        %1184 = vrot.lane.b32.xlu0 %v1065, 118
        %v1185 = vpop.permute.xlu0 %1184
        %1186 = vrot.lane.b32.xlu0 %v1066, 118
        %v1187 = vpop.permute.xlu0 %1186
        %v1188 = vsel %vm289, %v1177, %v1179
        %v1189 = vsel %vm289, %v1181, %v1183
        %v1190 = vsel %vm289, %v1185, %v1187
        %v1197 = vadd.f32 %v1061, %v1188
        %v1198 = vadd.f32 %v1062, %v1179
        %v1199 = vadd.f32 %v1063, %v1189
        %v1200 = vadd.f32 %v1064, %v1183
        %v1201 = vadd.f32 %v1065, %v1190
        %v1202 = vadd.f32 %v1066, %v1187
        %s1203 = sld [smem:[#allocation4 + $0x20]]
        %v1204 = vstv %s1203
        %v1205 = vmul.f32 %v1204, %v1197
        %v1206 = vmul.f32 %v1204, %v1198
        %v1207 = vmul.f32 %v1204, %v1199
        %v1208 = vmul.f32 %v1204, %v1200
        %v1209 = vmul.f32 %v1204, %v1201
        %v1210 = vmul.f32 %v1204, %v1202
        %v1217 = vrot.slane %v1205, 2
        %v1218 = vrot.slane %v1207, 2
        %v1219 = vsel %vm1044, %v1217, %v1218
        %v1220 = vrot.slane %v1206, 2
        %v1221 = vrot.slane %v1208, 2
        %v1222 = vsel %vm1044, %v1220, %v1221
        %v1223 = vrot.slane %v1209, 2
        %v1224 = vsel %vm1044, %v1218, %v1223
        %v1225 = vrot.slane %v1210, 2
        %v1226 = vsel %vm1044, %v1221, %v1225
        %1227 = vrot.lane.b32.xlu0 %v1219, 126
        %v1228 = vpop.permute.xlu0 %1227
        %1229 = vrot.lane.b32.xlu0 %v1222, 126
        %v1230 = vpop.permute.xlu0 %1229
        %1231 = vrot.lane.b32.xlu0 %v1224, 126
        %v1232 = vpop.permute.xlu0 %1231
        %1233 = vrot.lane.b32.xlu0 %v1226, 126
        %v1234 = vpop.permute.xlu0 %1233
        %v1235 = vsel %vm318, %v1228, %v1230
        %v1236 = vsel %vm318, %v1232, %v1234
        %v1239 = vadd.f32 %v1174, %v1235
        %v1240 = vadd.f32 %v1175, %v1236
        %1241 = vrot.lane.b32.xlu0 %v1061, 120
        %v1242 = vpop.permute.xlu0 %1241
        %1243 = vrot.lane.b32.xlu0 %v1062, 120
        %v1244 = vpop.permute.xlu0 %1243
        %1245 = vrot.lane.b32.xlu0 %v1063, 120
        %v1246 = vpop.permute.xlu0 %1245
        %1247 = vrot.lane.b32.xlu0 %v1064, 120
        %v1248 = vpop.permute.xlu0 %1247
        %1249 = vrot.lane.b32.xlu0 %v1065, 120
        %v1250 = vpop.permute.xlu0 %1249
        %1251 = vrot.lane.b32.xlu0 %v1066, 120
        %v1252 = vpop.permute.xlu0 %1251
        %v1253 = vsel %vm333, %v1242, %v1244
        %v1254 = vsel %vm333, %v1246, %v1248
        %v1255 = vsel %vm333, %v1250, %v1252
        %v1262 = vadd.f32 %v1061, %v1253
        %v1263 = vadd.f32 %v1062, %v1244
        %v1264 = vadd.f32 %v1063, %v1254
        %v1265 = vadd.f32 %v1064, %v1248
        %v1266 = vadd.f32 %v1065, %v1255
        %v1267 = vadd.f32 %v1066, %v1252
        %s1268 = sld [smem:[#allocation4 + $0x21]]
        %v1269 = vstv %s1268
        %v1270 = vmul.f32 %v1269, %v1262
        %v1271 = vmul.f32 %v1269, %v1263
        %v1272 = vmul.f32 %v1269, %v1264
        %v1273 = vmul.f32 %v1269, %v1265
        %v1274 = vmul.f32 %v1269, %v1266
        %v1275 = vmul.f32 %v1269, %v1267
        %v1282 = vrot.slane %v1270, 2
        %v1283 = vrot.slane %v1272, 2
        %v1284 = vsel %vm1044, %v1282, %v1283
        %v1285 = vrot.slane %v1271, 2
        %v1286 = vrot.slane %v1273, 2
        %v1287 = vsel %vm1044, %v1285, %v1286
        %v1288 = vrot.slane %v1274, 2
        %v1289 = vsel %vm1044, %v1283, %v1288
        %v1290 = vrot.slane %v1275, 2
        %v1291 = vsel %vm1044, %v1286, %v1290
        %1292 = vrot.lane.b32.xlu0 %v1284, 125
        %v1293 = vpop.permute.xlu0 %1292
        %1294 = vrot.lane.b32.xlu0 %v1287, 125
        %v1295 = vpop.permute.xlu0 %1294
        %1296 = vrot.lane.b32.xlu0 %v1289, 125
        %v1297 = vpop.permute.xlu0 %1296
        %1298 = vrot.lane.b32.xlu0 %v1291, 125
        %v1299 = vpop.permute.xlu0 %1298
        %v1300 = vsel %vm362, %v1293, %v1295
        %v1301 = vsel %vm362, %v1297, %v1299
        %v1304 = vadd.f32 %v1239, %v1300
        %v1305 = vadd.f32 %v1240, %v1301
        %1306 = vrot.lane.b32.xlu0 %v1061, 122
        %v1307 = vpop.permute.xlu0 %1306
        %1308 = vrot.lane.b32.xlu0 %v1062, 122
        %v1309 = vpop.permute.xlu0 %1308
        %1310 = vrot.lane.b32.xlu0 %v1063, 122
        %v1311 = vpop.permute.xlu0 %1310
        %1312 = vrot.lane.b32.xlu0 %v1064, 122
        %v1313 = vpop.permute.xlu0 %1312
        %1314 = vrot.lane.b32.xlu0 %v1065, 122
        %v1315 = vpop.permute.xlu0 %1314
        %1316 = vrot.lane.b32.xlu0 %v1066, 122
        %v1317 = vpop.permute.xlu0 %1316
        %v1318 = vsel %vm377, %v1307, %v1309
        %v1319 = vsel %vm377, %v1311, %v1313
        %v1320 = vsel %vm377, %v1315, %v1317
        %v1327 = vadd.f32 %v1061, %v1318
        %v1328 = vadd.f32 %v1062, %v1309
        %v1329 = vadd.f32 %v1063, %v1319
        %v1330 = vadd.f32 %v1064, %v1313
        %v1331 = vadd.f32 %v1065, %v1320
        %v1332 = vadd.f32 %v1066, %v1317
        %s1333 = sld [smem:[#allocation4 + $0x22]]
        %v1334 = vstv %s1333
        %v1335 = vmul.f32 %v1334, %v1327
        %v1336 = vmul.f32 %v1334, %v1328
        %v1337 = vmul.f32 %v1334, %v1329
        %v1338 = vmul.f32 %v1334, %v1330
        %v1339 = vmul.f32 %v1334, %v1331
        %v1340 = vmul.f32 %v1334, %v1332
        %v1347 = vrot.slane %v1335, 2
        %v1348 = vrot.slane %v1337, 2
        %v1349 = vsel %vm1044, %v1347, %v1348
        %v1350 = vrot.slane %v1336, 2
        %v1351 = vrot.slane %v1338, 2
        %v1352 = vsel %vm1044, %v1350, %v1351
        %v1353 = vrot.slane %v1339, 2
        %v1354 = vsel %vm1044, %v1348, %v1353
        %v1355 = vrot.slane %v1340, 2
        %v1356 = vsel %vm1044, %v1351, %v1355
        %1357 = vrot.lane.b32.xlu0 %v1349, 124
        %v1358 = vpop.permute.xlu0 %1357
        %1359 = vrot.lane.b32.xlu0 %v1352, 124
        %v1360 = vpop.permute.xlu0 %1359
        %1361 = vrot.lane.b32.xlu0 %v1354, 124
        %v1362 = vpop.permute.xlu0 %1361
        %1363 = vrot.lane.b32.xlu0 %v1356, 124
        %v1364 = vpop.permute.xlu0 %1363
        %v1365 = vsel %vm406, %v1358, %v1360
        %v1366 = vsel %vm406, %v1362, %v1364
        %v1369 = vadd.f32 %v1304, %v1365
        %v1370 = vadd.f32 %v1305, %v1366
        %1371 = vrot.lane.b32.xlu0 %v1061, 124
        %v1372 = vpop.permute.xlu0 %1371
        %1373 = vrot.lane.b32.xlu0 %v1062, 124
        %v1374 = vpop.permute.xlu0 %1373
        %1375 = vrot.lane.b32.xlu0 %v1063, 124
        %v1376 = vpop.permute.xlu0 %1375
        %1377 = vrot.lane.b32.xlu0 %v1064, 124
        %v1378 = vpop.permute.xlu0 %1377
        %1379 = vrot.lane.b32.xlu0 %v1065, 124
        %v1380 = vpop.permute.xlu0 %1379
        %1381 = vrot.lane.b32.xlu0 %v1066, 124
        %v1382 = vpop.permute.xlu0 %1381
        %v1383 = vsel %vm406, %v1372, %v1374
        %v1384 = vsel %vm406, %v1376, %v1378
        %v1385 = vsel %vm406, %v1380, %v1382
        %v1392 = vadd.f32 %v1061, %v1383
        %v1393 = vadd.f32 %v1062, %v1374
        %v1394 = vadd.f32 %v1063, %v1384
        %v1395 = vadd.f32 %v1064, %v1378
        %v1396 = vadd.f32 %v1065, %v1385
        %v1397 = vadd.f32 %v1066, %v1382
        %s1398 = sld [smem:[#allocation4 + $0x23]]
        %v1399 = vstv %s1398
        %v1400 = vmul.f32 %v1399, %v1392
        %v1401 = vmul.f32 %v1399, %v1393
        %v1402 = vmul.f32 %v1399, %v1394
        %v1403 = vmul.f32 %v1399, %v1395
        %v1404 = vmul.f32 %v1399, %v1396
        %v1405 = vmul.f32 %v1399, %v1397
        %v1412 = vrot.slane %v1400, 2
        %v1413 = vrot.slane %v1402, 2
        %v1414 = vsel %vm1044, %v1412, %v1413
        %v1415 = vrot.slane %v1401, 2
        %v1416 = vrot.slane %v1403, 2
        %v1417 = vsel %vm1044, %v1415, %v1416
        %v1418 = vrot.slane %v1404, 2
        %v1419 = vsel %vm1044, %v1413, %v1418
        %v1420 = vrot.slane %v1405, 2
        %v1421 = vsel %vm1044, %v1416, %v1420
        %1422 = vrot.lane.b32.xlu0 %v1414, 123
        %v1423 = vpop.permute.xlu0 %1422
        %1424 = vrot.lane.b32.xlu0 %v1417, 123
        %v1425 = vpop.permute.xlu0 %1424
        %1426 = vrot.lane.b32.xlu0 %v1419, 123
        %v1427 = vpop.permute.xlu0 %1426
        %1428 = vrot.lane.b32.xlu0 %v1421, 123
        %v1429 = vpop.permute.xlu0 %1428
        %v1430 = vsel %vm449, %v1423, %v1425
        %v1431 = vsel %vm449, %v1427, %v1429
        %v1434 = vadd.f32 %v1369, %v1430
        %v1435 = vadd.f32 %v1370, %v1431
        %1436 = vrot.lane.b32.xlu0 %v1061, 126
        %v1437 = vpop.permute.xlu0 %1436
        %1438 = vrot.lane.b32.xlu0 %v1062, 126
        %v1439 = vpop.permute.xlu0 %1438
        %1440 = vrot.lane.b32.xlu0 %v1063, 126
        %v1441 = vpop.permute.xlu0 %1440
        %1442 = vrot.lane.b32.xlu0 %v1064, 126
        %v1443 = vpop.permute.xlu0 %1442
        %1444 = vrot.lane.b32.xlu0 %v1065, 126
        %v1445 = vpop.permute.xlu0 %1444
        %1446 = vrot.lane.b32.xlu0 %v1066, 126
        %v1447 = vpop.permute.xlu0 %1446
        %v1448 = vsel %vm318, %v1437, %v1439
        %v1449 = vsel %vm318, %v1441, %v1443
        %v1450 = vsel %vm318, %v1445, %v1447
        %v1457 = vadd.f32 %v1061, %v1448
        %v1458 = vadd.f32 %v1062, %v1439
        %v1459 = vadd.f32 %v1063, %v1449
        %v1460 = vadd.f32 %v1064, %v1443
        %v1461 = vadd.f32 %v1065, %v1450
        %v1462 = vadd.f32 %v1066, %v1447
        %s1463 = sld [smem:[#allocation4 + $0x24]]
        %v1464 = vstv %s1463
        %v1465 = vmul.f32 %v1464, %v1457
        %v1466 = vmul.f32 %v1464, %v1458
        %v1467 = vmul.f32 %v1464, %v1459
        %v1468 = vmul.f32 %v1464, %v1460
        %v1469 = vmul.f32 %v1464, %v1461
        %v1470 = vmul.f32 %v1464, %v1462
        %v1477 = vrot.slane %v1465, 2
        %v1478 = vrot.slane %v1467, 2
        %v1479 = vsel %vm1044, %v1477, %v1478
        %v1480 = vrot.slane %v1466, 2
        %v1481 = vrot.slane %v1468, 2
        %v1482 = vsel %vm1044, %v1480, %v1481
        %v1483 = vrot.slane %v1469, 2
        %v1484 = vsel %vm1044, %v1478, %v1483
        %v1485 = vrot.slane %v1470, 2
        %v1486 = vsel %vm1044, %v1481, %v1485
        %1487 = vrot.lane.b32.xlu0 %v1479, 122
        %v1488 = vpop.permute.xlu0 %1487
        %1489 = vrot.lane.b32.xlu0 %v1482, 122
        %v1490 = vpop.permute.xlu0 %1489
        %1491 = vrot.lane.b32.xlu0 %v1484, 122
        %v1492 = vpop.permute.xlu0 %1491
        %1493 = vrot.lane.b32.xlu0 %v1486, 122
        %v1494 = vpop.permute.xlu0 %1493
        %v1495 = vsel %vm377, %v1488, %v1490
        %v1496 = vsel %vm377, %v1492, %v1494
        %v1499 = vadd.f32 %v1434, %v1495
        %v1500 = vadd.f32 %v1435, %v1496
        %s1501 = sld [smem:[#allocation4 + $0x25]]
        %v1502 = vstv %s1501
        %v1503 = vmul.f32 %v1502, %v1061
        %v1504 = vmul.f32 %v1502, %v1062
        %v1505 = vmul.f32 %v1502, %v1063
        %v1506 = vmul.f32 %v1502, %v1064
        %v1507 = vmul.f32 %v1502, %v1065
        %v1508 = vmul.f32 %v1502, %v1066
        %v1515 = vrot.slane %v1503, 2
        %v1516 = vrot.slane %v1505, 2
        %v1517 = vsel %vm1044, %v1515, %v1516
        %v1518 = vrot.slane %v1504, 2
        %v1519 = vrot.slane %v1506, 2
        %v1520 = vsel %vm1044, %v1518, %v1519
        %v1521 = vrot.slane %v1507, 2
        %v1522 = vsel %vm1044, %v1516, %v1521
        %v1523 = vrot.slane %v1508, 2
        %v1524 = vsel %vm1044, %v1519, %v1523
        %1525 = vrot.lane.b32.xlu0 %v1517, 121
        %v1526 = vpop.permute.xlu0 %1525
        %1527 = vrot.lane.b32.xlu0 %v1520, 121
        %v1528 = vpop.permute.xlu0 %1527
        %1529 = vrot.lane.b32.xlu0 %v1522, 121
        %v1530 = vpop.permute.xlu0 %1529
        %1531 = vrot.lane.b32.xlu0 %v1524, 121
        %v1532 = vpop.permute.xlu0 %1531
        %v1533 = vsel %vm516, %v1526, %v1528
        %v1534 = vsel %vm516, %v1530, %v1532
        %v1537 = vadd.f32 %v1499, %v1533
        %v1538 = vadd.f32 %v1500, %v1534
        %v1539 = vld [vmem:[#allocation2] sm:$0xf8]
        %v1540 = vld [vmem:[#allocation2 + $0x8] sm:$0xf8]
        %v1541 = vld [vmem:[#allocation2 + $0x20] sm:$0x7]
        %v1542 = vld [vmem:[#allocation2 + $0x28] sm:$0x7]
        %v1543 = vld [vmem:[#allocation2 + $0x10] sm:$0xf8]
        %v1544 = vld [vmem:[#allocation2 + $0x18] sm:$0xf8]
        %v1545 = vld [vmem:[#allocation2 + $0x30] sm:$0x7]
        %v1546 = vld [vmem:[#allocation2 + $0x38] sm:$0x7]
        %v1547 = vadd.f32 %v1539, %v1543
        %v1548 = vadd.f32 %v1540, %v1544
        %v1549 = vadd.f32 %v525, %v183
        %v1550 = vadd.f32 %v526, %v184
        %v1551 = vadd.f32 %v1541, %v1545
        %v1552 = vadd.f32 %v1542, %v1546
        %1559 = vrot.lane.b32.xlu0 %v1547, 114
        %v1560 = vpop.permute.xlu0 %1559
        %1561 = vrot.lane.b32.xlu0 %v1548, 114
        %v1562 = vpop.permute.xlu0 %1561
        %1563 = vrot.lane.b32.xlu0 %v1549, 114
        %v1564 = vpop.permute.xlu0 %1563
        %1565 = vrot.lane.b32.xlu0 %v1550, 114
        %v1566 = vpop.permute.xlu0 %1565
        %1567 = vrot.lane.b32.xlu0 %v1551, 114
        %v1568 = vpop.permute.xlu0 %1567
        %1569 = vrot.lane.b32.xlu0 %v1552, 114
        %v1570 = vpop.permute.xlu0 %1569
        %v1571 = vsel %vm224, %v1560, %v1562
        %v1572 = vsel %vm224, %v1564, %v1566
        %v1573 = vsel %vm224, %v1568, %v1570
        %v1577 = vadd.f32 %v1547, %v1571
        %v1578 = vadd.f32 %v1549, %v1572
        %v1579 = vadd.f32 %v1551, %v1573
        %s1580 = sld [smem:[#allocation4 + $0x2d]]
        %v1581 = vstv %s1580
        %v1582 = vmul.f32 %v1581, %v1577
        %v1583 = vmul.f32 %v1581, %v1578
        %v1584 = vmul.f32 %v1581, %v1579
        %vm1588 = vcmask 1044480
        %v1589 = vrot.slane %v1582, 3
        %v1590 = vrot.slane %v1583, 3
        %v1591 = vsel %vm1588, %v1589, %v1590
        %v1592 = vrot.slane %v1584, 3
        %v1593 = vsel %vm1588, %v1590, %v1592
        %v1596 = vadd.f32 %v1537, %v1591
        %v1597 = vadd.f32 %v1538, %v1593
        %1598 = vrot.lane.b32.xlu0 %v1547, 116
        %v1599 = vpop.permute.xlu0 %1598
        %1600 = vrot.lane.b32.xlu0 %v1548, 116
        %v1601 = vpop.permute.xlu0 %1600
        %1602 = vrot.lane.b32.xlu0 %v1549, 116
        %v1603 = vpop.permute.xlu0 %1602
        %1604 = vrot.lane.b32.xlu0 %v1550, 116
        %v1605 = vpop.permute.xlu0 %1604
        %1606 = vrot.lane.b32.xlu0 %v1551, 116
        %v1607 = vpop.permute.xlu0 %1606
        %1608 = vrot.lane.b32.xlu0 %v1552, 116
        %v1609 = vpop.permute.xlu0 %1608
        %v1610 = vsel %vm245, %v1599, %v1601
        %v1611 = vsel %vm245, %v1603, %v1605
        %v1612 = vsel %vm245, %v1607, %v1609
        %v1619 = vadd.f32 %v1547, %v1610
        %v1620 = vadd.f32 %v1548, %v1601
        %v1621 = vadd.f32 %v1549, %v1611
        %v1622 = vadd.f32 %v1550, %v1605
        %v1623 = vadd.f32 %v1551, %v1612
        %v1624 = vadd.f32 %v1552, %v1609
        %s1625 = sld [smem:[#allocation4 + $0x2e]]
        %v1626 = vstv %s1625
        %v1627 = vmul.f32 %v1626, %v1619
        %v1628 = vmul.f32 %v1626, %v1620
        %v1629 = vmul.f32 %v1626, %v1621
        %v1630 = vmul.f32 %v1626, %v1622
        %v1631 = vmul.f32 %v1626, %v1623
        %v1632 = vmul.f32 %v1626, %v1624
        %v1639 = vrot.slane %v1627, 3
        %v1640 = vrot.slane %v1629, 3
        %v1641 = vsel %vm1588, %v1639, %v1640
        %v1642 = vrot.slane %v1628, 3
        %v1643 = vrot.slane %v1630, 3
        %v1644 = vsel %vm1588, %v1642, %v1643
        %v1645 = vrot.slane %v1631, 3
        %v1646 = vsel %vm1588, %v1640, %v1645
        %v1647 = vrot.slane %v1632, 3
        %v1648 = vsel %vm1588, %v1643, %v1647
        %1649 = vrot.lane.b32.xlu0 %v1641, 127
        %v1650 = vpop.permute.xlu0 %1649
        %1651 = vrot.lane.b32.xlu0 %v1644, 127
        %v1652 = vpop.permute.xlu0 %1651
        %1653 = vrot.lane.b32.xlu0 %v1646, 127
        %v1654 = vpop.permute.xlu0 %1653
        %1655 = vrot.lane.b32.xlu0 %v1648, 127
        %v1656 = vpop.permute.xlu0 %1655
        %v1657 = vsel %vm274, %v1650, %v1652
        %v1658 = vsel %vm274, %v1654, %v1656
        %v1661 = vadd.f32 %v1596, %v1657
        %v1662 = vadd.f32 %v1597, %v1658
        %1663 = vrot.lane.b32.xlu0 %v1547, 118
        %v1664 = vpop.permute.xlu0 %1663
        %1665 = vrot.lane.b32.xlu0 %v1548, 118
        %v1666 = vpop.permute.xlu0 %1665
        %1667 = vrot.lane.b32.xlu0 %v1549, 118
        %v1668 = vpop.permute.xlu0 %1667
        %1669 = vrot.lane.b32.xlu0 %v1550, 118
        %v1670 = vpop.permute.xlu0 %1669
        %1671 = vrot.lane.b32.xlu0 %v1551, 118
        %v1672 = vpop.permute.xlu0 %1671
        %1673 = vrot.lane.b32.xlu0 %v1552, 118
        %v1674 = vpop.permute.xlu0 %1673
        %v1675 = vsel %vm289, %v1664, %v1666
        %v1676 = vsel %vm289, %v1668, %v1670
        %v1677 = vsel %vm289, %v1672, %v1674
        %v1684 = vadd.f32 %v1547, %v1675
        %v1685 = vadd.f32 %v1548, %v1666
        %v1686 = vadd.f32 %v1549, %v1676
        %v1687 = vadd.f32 %v1550, %v1670
        %v1688 = vadd.f32 %v1551, %v1677
        %v1689 = vadd.f32 %v1552, %v1674
        %s1690 = sld [smem:[#allocation4 + $0x2f]]
        %v1691 = vstv %s1690
        %v1692 = vmul.f32 %v1691, %v1684
        %v1693 = vmul.f32 %v1691, %v1685
        %v1694 = vmul.f32 %v1691, %v1686
        %v1695 = vmul.f32 %v1691, %v1687
        %v1696 = vmul.f32 %v1691, %v1688
        %v1697 = vmul.f32 %v1691, %v1689
        %v1704 = vrot.slane %v1692, 3
        %v1705 = vrot.slane %v1694, 3
        %v1706 = vsel %vm1588, %v1704, %v1705
        %v1707 = vrot.slane %v1693, 3
        %v1708 = vrot.slane %v1695, 3
        %v1709 = vsel %vm1588, %v1707, %v1708
        %v1710 = vrot.slane %v1696, 3
        %v1711 = vsel %vm1588, %v1705, %v1710
        %v1712 = vrot.slane %v1697, 3
        %v1713 = vsel %vm1588, %v1708, %v1712
        %1714 = vrot.lane.b32.xlu0 %v1706, 126
        %v1715 = vpop.permute.xlu0 %1714
        %1716 = vrot.lane.b32.xlu0 %v1709, 126
        %v1717 = vpop.permute.xlu0 %1716
        %1718 = vrot.lane.b32.xlu0 %v1711, 126
        %v1719 = vpop.permute.xlu0 %1718
        %1720 = vrot.lane.b32.xlu0 %v1713, 126
        %v1721 = vpop.permute.xlu0 %1720
        %v1722 = vsel %vm318, %v1715, %v1717
        %v1723 = vsel %vm318, %v1719, %v1721
        %v1726 = vadd.f32 %v1661, %v1722
        %v1727 = vadd.f32 %v1662, %v1723
        %1728 = vrot.lane.b32.xlu0 %v1547, 120
        %v1729 = vpop.permute.xlu0 %1728
        %1730 = vrot.lane.b32.xlu0 %v1548, 120
        %v1731 = vpop.permute.xlu0 %1730
        %1732 = vrot.lane.b32.xlu0 %v1549, 120
        %v1733 = vpop.permute.xlu0 %1732
        %1734 = vrot.lane.b32.xlu0 %v1550, 120
        %v1735 = vpop.permute.xlu0 %1734
        %1736 = vrot.lane.b32.xlu0 %v1551, 120
        %v1737 = vpop.permute.xlu0 %1736
        %1738 = vrot.lane.b32.xlu0 %v1552, 120
        %v1739 = vpop.permute.xlu0 %1738
        %v1740 = vsel %vm333, %v1729, %v1731
        %v1741 = vsel %vm333, %v1733, %v1735
        %v1742 = vsel %vm333, %v1737, %v1739
        %v1749 = vadd.f32 %v1547, %v1740
        %v1750 = vadd.f32 %v1548, %v1731
        %v1751 = vadd.f32 %v1549, %v1741
        %v1752 = vadd.f32 %v1550, %v1735
        %v1753 = vadd.f32 %v1551, %v1742
        %v1754 = vadd.f32 %v1552, %v1739
        %s1755 = sld [smem:[#allocation4 + $0x30]]
        %v1756 = vstv %s1755
        %v1757 = vmul.f32 %v1756, %v1749
        %v1758 = vmul.f32 %v1756, %v1750
        %v1759 = vmul.f32 %v1756, %v1751
        %v1760 = vmul.f32 %v1756, %v1752
        %v1761 = vmul.f32 %v1756, %v1753
        %v1762 = vmul.f32 %v1756, %v1754
        %v1769 = vrot.slane %v1757, 3
        %v1770 = vrot.slane %v1759, 3
        %v1771 = vsel %vm1588, %v1769, %v1770
        %v1772 = vrot.slane %v1758, 3
        %v1773 = vrot.slane %v1760, 3
        %v1774 = vsel %vm1588, %v1772, %v1773
        %v1775 = vrot.slane %v1761, 3
        %v1776 = vsel %vm1588, %v1770, %v1775
        %v1777 = vrot.slane %v1762, 3
        %v1778 = vsel %vm1588, %v1773, %v1777
        %1779 = vrot.lane.b32.xlu0 %v1771, 125
        %v1780 = vpop.permute.xlu0 %1779
        %1781 = vrot.lane.b32.xlu0 %v1774, 125
        %v1782 = vpop.permute.xlu0 %1781
        %1783 = vrot.lane.b32.xlu0 %v1776, 125
        %v1784 = vpop.permute.xlu0 %1783
        %1785 = vrot.lane.b32.xlu0 %v1778, 125
        %v1786 = vpop.permute.xlu0 %1785
        %v1787 = vsel %vm362, %v1780, %v1782
        %v1788 = vsel %vm362, %v1784, %v1786
        %v1791 = vadd.f32 %v1726, %v1787
        %v1792 = vadd.f32 %v1727, %v1788
        %1793 = vrot.lane.b32.xlu0 %v1547, 122
        %v1794 = vpop.permute.xlu0 %1793
        %1795 = vrot.lane.b32.xlu0 %v1548, 122
        %v1796 = vpop.permute.xlu0 %1795
        %1797 = vrot.lane.b32.xlu0 %v1549, 122
        %v1798 = vpop.permute.xlu0 %1797
        %1799 = vrot.lane.b32.xlu0 %v1550, 122
        %v1800 = vpop.permute.xlu0 %1799
        %1801 = vrot.lane.b32.xlu0 %v1551, 122
        %v1802 = vpop.permute.xlu0 %1801
        %1803 = vrot.lane.b32.xlu0 %v1552, 122
        %v1804 = vpop.permute.xlu0 %1803
        %v1805 = vsel %vm377, %v1794, %v1796
        %v1806 = vsel %vm377, %v1798, %v1800
        %v1807 = vsel %vm377, %v1802, %v1804
        %v1814 = vadd.f32 %v1547, %v1805
        %v1815 = vadd.f32 %v1548, %v1796
        %v1816 = vadd.f32 %v1549, %v1806
        %v1817 = vadd.f32 %v1550, %v1800
        %v1818 = vadd.f32 %v1551, %v1807
        %v1819 = vadd.f32 %v1552, %v1804
        %s1820 = sld [smem:[#allocation4 + $0x31]]
        %v1821 = vstv %s1820
        %v1822 = vmul.f32 %v1821, %v1814
        %v1823 = vmul.f32 %v1821, %v1815
        %v1824 = vmul.f32 %v1821, %v1816
        %v1825 = vmul.f32 %v1821, %v1817
        %v1826 = vmul.f32 %v1821, %v1818
        %v1827 = vmul.f32 %v1821, %v1819
        %v1834 = vrot.slane %v1822, 3
        %v1835 = vrot.slane %v1824, 3
        %v1836 = vsel %vm1588, %v1834, %v1835
        %v1837 = vrot.slane %v1823, 3
        %v1838 = vrot.slane %v1825, 3
        %v1839 = vsel %vm1588, %v1837, %v1838
        %v1840 = vrot.slane %v1826, 3
        %v1841 = vsel %vm1588, %v1835, %v1840
        %v1842 = vrot.slane %v1827, 3
        %v1843 = vsel %vm1588, %v1838, %v1842
        %1844 = vrot.lane.b32.xlu0 %v1836, 124
        %v1845 = vpop.permute.xlu0 %1844
        %1846 = vrot.lane.b32.xlu0 %v1839, 124
        %v1847 = vpop.permute.xlu0 %1846
        %1848 = vrot.lane.b32.xlu0 %v1841, 124
        %v1849 = vpop.permute.xlu0 %1848
        %1850 = vrot.lane.b32.xlu0 %v1843, 124
        %v1851 = vpop.permute.xlu0 %1850
        %v1852 = vsel %vm406, %v1845, %v1847
        %v1853 = vsel %vm406, %v1849, %v1851
        %v1856 = vadd.f32 %v1791, %v1852
        %v1857 = vadd.f32 %v1792, %v1853
        %1858 = vrot.lane.b32.xlu0 %v1547, 124
        %v1859 = vpop.permute.xlu0 %1858
        %1860 = vrot.lane.b32.xlu0 %v1548, 124
        %v1861 = vpop.permute.xlu0 %1860
        %1862 = vrot.lane.b32.xlu0 %v1549, 124
        %v1863 = vpop.permute.xlu0 %1862
        %1864 = vrot.lane.b32.xlu0 %v1550, 124
        %v1865 = vpop.permute.xlu0 %1864
        %1866 = vrot.lane.b32.xlu0 %v1551, 124
        %v1867 = vpop.permute.xlu0 %1866
        %1868 = vrot.lane.b32.xlu0 %v1552, 124
        %v1869 = vpop.permute.xlu0 %1868
        %v1870 = vsel %vm406, %v1859, %v1861
        %v1871 = vsel %vm406, %v1863, %v1865
        %v1872 = vsel %vm406, %v1867, %v1869
        %v1879 = vadd.f32 %v1547, %v1870
        %v1880 = vadd.f32 %v1548, %v1861
        %v1881 = vadd.f32 %v1549, %v1871
        %v1882 = vadd.f32 %v1550, %v1865
        %v1883 = vadd.f32 %v1551, %v1872
        %v1884 = vadd.f32 %v1552, %v1869
        %s1885 = sld [smem:[#allocation4 + $0x32]]
        %v1886 = vstv %s1885
        %v1887 = vmul.f32 %v1886, %v1879
        %v1888 = vmul.f32 %v1886, %v1880
        %v1889 = vmul.f32 %v1886, %v1881
        %v1890 = vmul.f32 %v1886, %v1882
        %v1891 = vmul.f32 %v1886, %v1883
        %v1892 = vmul.f32 %v1886, %v1884
        %v1899 = vrot.slane %v1887, 3
        %v1900 = vrot.slane %v1889, 3
        %v1901 = vsel %vm1588, %v1899, %v1900
        %v1902 = vrot.slane %v1888, 3
        %v1903 = vrot.slane %v1890, 3
        %v1904 = vsel %vm1588, %v1902, %v1903
        %v1905 = vrot.slane %v1891, 3
        %v1906 = vsel %vm1588, %v1900, %v1905
        %v1907 = vrot.slane %v1892, 3
        %v1908 = vsel %vm1588, %v1903, %v1907
        %1909 = vrot.lane.b32.xlu0 %v1901, 123
        %v1910 = vpop.permute.xlu0 %1909
        %1911 = vrot.lane.b32.xlu0 %v1904, 123
        %v1912 = vpop.permute.xlu0 %1911
        %1913 = vrot.lane.b32.xlu0 %v1906, 123
        %v1914 = vpop.permute.xlu0 %1913
        %1915 = vrot.lane.b32.xlu0 %v1908, 123
        %v1916 = vpop.permute.xlu0 %1915
        %v1917 = vsel %vm449, %v1910, %v1912
        %v1918 = vsel %vm449, %v1914, %v1916
        %v1921 = vadd.f32 %v1856, %v1917
        %v1922 = vadd.f32 %v1857, %v1918
        %1923 = vrot.lane.b32.xlu0 %v1547, 126
        %v1924 = vpop.permute.xlu0 %1923
        %1925 = vrot.lane.b32.xlu0 %v1548, 126
        %v1926 = vpop.permute.xlu0 %1925
        %1927 = vrot.lane.b32.xlu0 %v1549, 126
        %v1928 = vpop.permute.xlu0 %1927
        %1929 = vrot.lane.b32.xlu0 %v1550, 126
        %v1930 = vpop.permute.xlu0 %1929
        %1931 = vrot.lane.b32.xlu0 %v1551, 126
        %v1932 = vpop.permute.xlu0 %1931
        %1933 = vrot.lane.b32.xlu0 %v1552, 126
        %v1934 = vpop.permute.xlu0 %1933
        %v1935 = vsel %vm318, %v1924, %v1926
        %v1936 = vsel %vm318, %v1928, %v1930
        %v1937 = vsel %vm318, %v1932, %v1934
        %v1944 = vadd.f32 %v1547, %v1935
        %v1945 = vadd.f32 %v1548, %v1926
        %v1946 = vadd.f32 %v1549, %v1936
        %v1947 = vadd.f32 %v1550, %v1930
        %v1948 = vadd.f32 %v1551, %v1937
        %v1949 = vadd.f32 %v1552, %v1934
        %s1950 = sld [smem:[#allocation4 + $0x33]]
        %v1951 = vstv %s1950
        %v1952 = vmul.f32 %v1951, %v1944
        %v1953 = vmul.f32 %v1951, %v1945
        %v1954 = vmul.f32 %v1951, %v1946
        %v1955 = vmul.f32 %v1951, %v1947
        %v1956 = vmul.f32 %v1951, %v1948
        %v1957 = vmul.f32 %v1951, %v1949
        %v1964 = vrot.slane %v1952, 3
        %v1965 = vrot.slane %v1954, 3
        %v1966 = vsel %vm1588, %v1964, %v1965
        %v1967 = vrot.slane %v1953, 3
        %v1968 = vrot.slane %v1955, 3
        %v1969 = vsel %vm1588, %v1967, %v1968
        %v1970 = vrot.slane %v1956, 3
        %v1971 = vsel %vm1588, %v1965, %v1970
        %v1972 = vrot.slane %v1957, 3
        %v1973 = vsel %vm1588, %v1968, %v1972
        %1974 = vrot.lane.b32.xlu0 %v1966, 122
        %v1975 = vpop.permute.xlu0 %1974
        %1976 = vrot.lane.b32.xlu0 %v1969, 122
        %v1977 = vpop.permute.xlu0 %1976
        %1978 = vrot.lane.b32.xlu0 %v1971, 122
        %v1979 = vpop.permute.xlu0 %1978
        %1980 = vrot.lane.b32.xlu0 %v1973, 122
        %v1981 = vpop.permute.xlu0 %1980
        %v1982 = vsel %vm377, %v1975, %v1977
        %v1983 = vsel %vm377, %v1979, %v1981
        %v1986 = vadd.f32 %v1921, %v1982
        %v1987 = vadd.f32 %v1922, %v1983
        %s1988 = sld [smem:[#allocation4 + $0x34]]
        %v1989 = vstv %s1988
        %v1990 = vmul.f32 %v1989, %v1547
        %v1991 = vmul.f32 %v1989, %v1548
        %v1992 = vmul.f32 %v1989, %v1549
        %v1993 = vmul.f32 %v1989, %v1550
        %v1994 = vmul.f32 %v1989, %v1551
        %v1995 = vmul.f32 %v1989, %v1552
        %v2002 = vrot.slane %v1990, 3
        %v2003 = vrot.slane %v1992, 3
        %v2004 = vsel %vm1588, %v2002, %v2003
        %v2005 = vrot.slane %v1991, 3
        %v2006 = vrot.slane %v1993, 3
        %v2007 = vsel %vm1588, %v2005, %v2006
        %v2008 = vrot.slane %v1994, 3
        %v2009 = vsel %vm1588, %v2003, %v2008
        %v2010 = vrot.slane %v1995, 3
        %v2011 = vsel %vm1588, %v2006, %v2010
        %2012 = vrot.lane.b32.xlu0 %v2004, 121
        %v2013 = vpop.permute.xlu0 %2012
        %2014 = vrot.lane.b32.xlu0 %v2007, 121
        %v2015 = vpop.permute.xlu0 %2014
        %2016 = vrot.lane.b32.xlu0 %v2009, 121
        %v2017 = vpop.permute.xlu0 %2016
        %2018 = vrot.lane.b32.xlu0 %v2011, 121
        %v2019 = vpop.permute.xlu0 %2018
        %v2020 = vsel %vm516, %v2013, %v2015
        %v2021 = vsel %vm516, %v2017, %v2019
        %v2024 = vadd.f32 %v1986, %v2020
        %v2025 = vadd.f32 %v1987, %v2021
        %v2026 = vld [vmem:[#allocation2] sm:$0xf0]
        %v2027 = vld [vmem:[#allocation2 + $0x8] sm:$0xf0]
        %v2028 = vld [vmem:[#allocation2 + $0x20] sm:$0xf]
        %v2029 = vld [vmem:[#allocation2 + $0x28] sm:$0xf]
        %v2030 = vld [vmem:[#allocation2 + $0x10] sm:$0xfc]
        %v2031 = vld [vmem:[#allocation2 + $0x18] sm:$0xfc]
        %v2032 = vld [vmem:[#allocation2 + $0x30] sm:$0x3]
        %v2033 = vld [vmem:[#allocation2 + $0x38] sm:$0x3]
        %v2038 = vrot.slane %v2030, 6
        %v2039 = vrot.slane %v2031, 6
        %v2040 = vsel %vm193, %v2038, %v195
        %v2041 = vsel %vm193, %v2039, %v198
        %v2042 = vrot.slane %v2032, 6
        %v2043 = vsel %vm193, %v195, %v2042
        %v2044 = vrot.slane %v2033, 6
        %v2045 = vsel %vm193, %v198, %v2044
        %v2052 = vadd.f32 %v2026, %v2038
        %v2053 = vadd.f32 %v2027, %v2039
        %v2054 = vadd.f32 %v525, %v2040
        %v2055 = vadd.f32 %v526, %v2041
        %v2056 = vadd.f32 %v2028, %v2043
        %v2057 = vadd.f32 %v2029, %v2045
        %2064 = vrot.lane.b32.xlu0 %v2052, 114
        %v2065 = vpop.permute.xlu0 %2064
        %2066 = vrot.lane.b32.xlu0 %v2053, 114
        %v2067 = vpop.permute.xlu0 %2066
        %2068 = vrot.lane.b32.xlu0 %v2054, 114
        %v2069 = vpop.permute.xlu0 %2068
        %2070 = vrot.lane.b32.xlu0 %v2055, 114
        %v2071 = vpop.permute.xlu0 %2070
        %2072 = vrot.lane.b32.xlu0 %v2056, 114
        %v2073 = vpop.permute.xlu0 %2072
        %2074 = vrot.lane.b32.xlu0 %v2057, 114
        %v2075 = vpop.permute.xlu0 %2074
        %v2076 = vsel %vm224, %v2065, %v2067
        %v2077 = vsel %vm224, %v2069, %v2071
        %v2078 = vsel %vm224, %v2073, %v2075
        %v2082 = vadd.f32 %v2052, %v2076
        %v2083 = vadd.f32 %v2054, %v2077
        %v2084 = vadd.f32 %v2056, %v2078
        %s2085 = sld [smem:[#allocation4 + $0x3c]]
        %v2086 = vstv %s2085
        %v2087 = vmul.f32 %v2086, %v2082
        %v2088 = vmul.f32 %v2086, %v2083
        %v2089 = vmul.f32 %v2086, %v2084
        %v2093 = vrot.slane %v2087, 4
        %v2094 = vrot.slane %v2088, 4
        %v2095 = vsel %vm537, %v2093, %v2094
        %v2096 = vrot.slane %v2089, 4
        %v2097 = vsel %vm537, %v2094, %v2096
        %v2100 = vadd.f32 %v2024, %v2095
        %v2101 = vadd.f32 %v2025, %v2097
        %2102 = vrot.lane.b32.xlu0 %v2052, 116
        %v2103 = vpop.permute.xlu0 %2102
        %2104 = vrot.lane.b32.xlu0 %v2053, 116
        %v2105 = vpop.permute.xlu0 %2104
        %2106 = vrot.lane.b32.xlu0 %v2054, 116
        %v2107 = vpop.permute.xlu0 %2106
        %2108 = vrot.lane.b32.xlu0 %v2055, 116
        %v2109 = vpop.permute.xlu0 %2108
        %2110 = vrot.lane.b32.xlu0 %v2056, 116
        %v2111 = vpop.permute.xlu0 %2110
        %2112 = vrot.lane.b32.xlu0 %v2057, 116
        %v2113 = vpop.permute.xlu0 %2112
        %v2114 = vsel %vm245, %v2103, %v2105
        %v2115 = vsel %vm245, %v2107, %v2109
        %v2116 = vsel %vm245, %v2111, %v2113
        %v2123 = vadd.f32 %v2052, %v2114
        %v2124 = vadd.f32 %v2053, %v2105
        %v2125 = vadd.f32 %v2054, %v2115
        %v2126 = vadd.f32 %v2055, %v2109
        %v2127 = vadd.f32 %v2056, %v2116
        %v2128 = vadd.f32 %v2057, %v2113
        %s2129 = sld [smem:[#allocation4 + $0x3d]]
        %v2130 = vstv %s2129
        %v2131 = vmul.f32 %v2130, %v2123
        %v2132 = vmul.f32 %v2130, %v2124
        %v2133 = vmul.f32 %v2130, %v2125
        %v2134 = vmul.f32 %v2130, %v2126
        %v2135 = vmul.f32 %v2130, %v2127
        %v2136 = vmul.f32 %v2130, %v2128
        %v2143 = vrot.slane %v2131, 4
        %v2144 = vrot.slane %v2133, 4
        %v2145 = vsel %vm537, %v2143, %v2144
        %v2146 = vrot.slane %v2132, 4
        %v2147 = vrot.slane %v2134, 4
        %v2148 = vsel %vm537, %v2146, %v2147
        %v2149 = vrot.slane %v2135, 4
        %v2150 = vsel %vm537, %v2144, %v2149
        %v2151 = vrot.slane %v2136, 4
        %v2152 = vsel %vm537, %v2147, %v2151
        %2153 = vrot.lane.b32.xlu0 %v2145, 127
        %v2154 = vpop.permute.xlu0 %2153
        %2155 = vrot.lane.b32.xlu0 %v2148, 127
        %v2156 = vpop.permute.xlu0 %2155
        %2157 = vrot.lane.b32.xlu0 %v2150, 127
        %v2158 = vpop.permute.xlu0 %2157
        %2159 = vrot.lane.b32.xlu0 %v2152, 127
        %v2160 = vpop.permute.xlu0 %2159
        %v2161 = vsel %vm274, %v2154, %v2156
        %v2162 = vsel %vm274, %v2158, %v2160
        %v2165 = vadd.f32 %v2100, %v2161
        %v2166 = vadd.f32 %v2101, %v2162
        %2167 = vrot.lane.b32.xlu0 %v2052, 118
        %v2168 = vpop.permute.xlu0 %2167
        %2169 = vrot.lane.b32.xlu0 %v2053, 118
        %v2170 = vpop.permute.xlu0 %2169
        %2171 = vrot.lane.b32.xlu0 %v2054, 118
        %v2172 = vpop.permute.xlu0 %2171
        %2173 = vrot.lane.b32.xlu0 %v2055, 118
        %v2174 = vpop.permute.xlu0 %2173
        %2175 = vrot.lane.b32.xlu0 %v2056, 118
        %v2176 = vpop.permute.xlu0 %2175
        %2177 = vrot.lane.b32.xlu0 %v2057, 118
        %v2178 = vpop.permute.xlu0 %2177
        %v2179 = vsel %vm289, %v2168, %v2170
        %v2180 = vsel %vm289, %v2172, %v2174
        %v2181 = vsel %vm289, %v2176, %v2178
        %v2188 = vadd.f32 %v2052, %v2179
        %v2189 = vadd.f32 %v2053, %v2170
        %v2190 = vadd.f32 %v2054, %v2180
        %v2191 = vadd.f32 %v2055, %v2174
        %v2192 = vadd.f32 %v2056, %v2181
        %v2193 = vadd.f32 %v2057, %v2178
        %s2194 = sld [smem:[#allocation4 + $0x3e]]
        %v2195 = vstv %s2194
        %v2196 = vmul.f32 %v2195, %v2188
        %v2197 = vmul.f32 %v2195, %v2189
        %v2198 = vmul.f32 %v2195, %v2190
        %v2199 = vmul.f32 %v2195, %v2191
        %v2200 = vmul.f32 %v2195, %v2192
        %v2201 = vmul.f32 %v2195, %v2193
        %v2208 = vrot.slane %v2196, 4
        %v2209 = vrot.slane %v2198, 4
        %v2210 = vsel %vm537, %v2208, %v2209
        %v2211 = vrot.slane %v2197, 4
        %v2212 = vrot.slane %v2199, 4
        %v2213 = vsel %vm537, %v2211, %v2212
        %v2214 = vrot.slane %v2200, 4
        %v2215 = vsel %vm537, %v2209, %v2214
        %v2216 = vrot.slane %v2201, 4
        %v2217 = vsel %vm537, %v2212, %v2216
        %2218 = vrot.lane.b32.xlu0 %v2210, 126
        %v2219 = vpop.permute.xlu0 %2218
        %2220 = vrot.lane.b32.xlu0 %v2213, 126
        %v2221 = vpop.permute.xlu0 %2220
        %2222 = vrot.lane.b32.xlu0 %v2215, 126
        %v2223 = vpop.permute.xlu0 %2222
        %2224 = vrot.lane.b32.xlu0 %v2217, 126
        %v2225 = vpop.permute.xlu0 %2224
        %v2226 = vsel %vm318, %v2219, %v2221
        %v2227 = vsel %vm318, %v2223, %v2225
        %v2230 = vadd.f32 %v2165, %v2226
        %v2231 = vadd.f32 %v2166, %v2227
        %2232 = vrot.lane.b32.xlu0 %v2052, 120
        %v2233 = vpop.permute.xlu0 %2232
        %2234 = vrot.lane.b32.xlu0 %v2053, 120
        %v2235 = vpop.permute.xlu0 %2234
        %2236 = vrot.lane.b32.xlu0 %v2054, 120
        %v2237 = vpop.permute.xlu0 %2236
        %2238 = vrot.lane.b32.xlu0 %v2055, 120
        %v2239 = vpop.permute.xlu0 %2238
        %2240 = vrot.lane.b32.xlu0 %v2056, 120
        %v2241 = vpop.permute.xlu0 %2240
        %2242 = vrot.lane.b32.xlu0 %v2057, 120
        %v2243 = vpop.permute.xlu0 %2242
        %v2244 = vsel %vm333, %v2233, %v2235
        %v2245 = vsel %vm333, %v2237, %v2239
        %v2246 = vsel %vm333, %v2241, %v2243
        %v2253 = vadd.f32 %v2052, %v2244
        %v2254 = vadd.f32 %v2053, %v2235
        %v2255 = vadd.f32 %v2054, %v2245
        %v2256 = vadd.f32 %v2055, %v2239
        %v2257 = vadd.f32 %v2056, %v2246
        %v2258 = vadd.f32 %v2057, %v2243
        %s2259 = sld [smem:[#allocation4 + $0x3f]]
        %v2260 = vstv %s2259
        %v2261 = vmul.f32 %v2260, %v2253
        %v2262 = vmul.f32 %v2260, %v2254
        %v2263 = vmul.f32 %v2260, %v2255
        %v2264 = vmul.f32 %v2260, %v2256
        %v2265 = vmul.f32 %v2260, %v2257
        %v2266 = vmul.f32 %v2260, %v2258
        %v2273 = vrot.slane %v2261, 4
        %v2274 = vrot.slane %v2263, 4
        %v2275 = vsel %vm537, %v2273, %v2274
        %v2276 = vrot.slane %v2262, 4
        %v2277 = vrot.slane %v2264, 4
        %v2278 = vsel %vm537, %v2276, %v2277
        %v2279 = vrot.slane %v2265, 4
        %v2280 = vsel %vm537, %v2274, %v2279
        %v2281 = vrot.slane %v2266, 4
        %v2282 = vsel %vm537, %v2277, %v2281
        %2283 = vrot.lane.b32.xlu0 %v2275, 125
        %v2284 = vpop.permute.xlu0 %2283
        %2285 = vrot.lane.b32.xlu0 %v2278, 125
        %v2286 = vpop.permute.xlu0 %2285
        %2287 = vrot.lane.b32.xlu0 %v2280, 125
        %v2288 = vpop.permute.xlu0 %2287
        %2289 = vrot.lane.b32.xlu0 %v2282, 125
        %v2290 = vpop.permute.xlu0 %2289
        %v2291 = vsel %vm362, %v2284, %v2286
        %v2292 = vsel %vm362, %v2288, %v2290
        %v2295 = vadd.f32 %v2230, %v2291
        %v2296 = vadd.f32 %v2231, %v2292
        %2297 = vrot.lane.b32.xlu0 %v2052, 122
        %v2298 = vpop.permute.xlu0 %2297
        %2299 = vrot.lane.b32.xlu0 %v2053, 122
        %v2300 = vpop.permute.xlu0 %2299
        %2301 = vrot.lane.b32.xlu0 %v2054, 122
        %v2302 = vpop.permute.xlu0 %2301
        %2303 = vrot.lane.b32.xlu0 %v2055, 122
        %v2304 = vpop.permute.xlu0 %2303
        %2305 = vrot.lane.b32.xlu0 %v2056, 122
        %v2306 = vpop.permute.xlu0 %2305
        %2307 = vrot.lane.b32.xlu0 %v2057, 122
        %v2308 = vpop.permute.xlu0 %2307
        %v2309 = vsel %vm377, %v2298, %v2300
        %v2310 = vsel %vm377, %v2302, %v2304
        %v2311 = vsel %vm377, %v2306, %v2308
        %v2318 = vadd.f32 %v2052, %v2309
        %v2319 = vadd.f32 %v2053, %v2300
        %v2320 = vadd.f32 %v2054, %v2310
        %v2321 = vadd.f32 %v2055, %v2304
        %v2322 = vadd.f32 %v2056, %v2311
        %v2323 = vadd.f32 %v2057, %v2308
        %s2324 = sld [smem:[#allocation4 + $0x40]]
        %v2325 = vstv %s2324
        %v2326 = vmul.f32 %v2325, %v2318
        %v2327 = vmul.f32 %v2325, %v2319
        %v2328 = vmul.f32 %v2325, %v2320
        %v2329 = vmul.f32 %v2325, %v2321
        %v2330 = vmul.f32 %v2325, %v2322
        %v2331 = vmul.f32 %v2325, %v2323
        %v2338 = vrot.slane %v2326, 4
        %v2339 = vrot.slane %v2328, 4
        %v2340 = vsel %vm537, %v2338, %v2339
        %v2341 = vrot.slane %v2327, 4
        %v2342 = vrot.slane %v2329, 4
        %v2343 = vsel %vm537, %v2341, %v2342
        %v2344 = vrot.slane %v2330, 4
        %v2345 = vsel %vm537, %v2339, %v2344
        %v2346 = vrot.slane %v2331, 4
        %v2347 = vsel %vm537, %v2342, %v2346
        %2348 = vrot.lane.b32.xlu0 %v2340, 124
        %v2349 = vpop.permute.xlu0 %2348
        %2350 = vrot.lane.b32.xlu0 %v2343, 124
        %v2351 = vpop.permute.xlu0 %2350
        %2352 = vrot.lane.b32.xlu0 %v2345, 124
        %v2353 = vpop.permute.xlu0 %2352
        %2354 = vrot.lane.b32.xlu0 %v2347, 124
        %v2355 = vpop.permute.xlu0 %2354
        %v2356 = vsel %vm406, %v2349, %v2351
        %v2357 = vsel %vm406, %v2353, %v2355
        %v2360 = vadd.f32 %v2295, %v2356
        %v2361 = vadd.f32 %v2296, %v2357
        %2362 = vrot.lane.b32.xlu0 %v2052, 124
        %v2363 = vpop.permute.xlu0 %2362
        %2364 = vrot.lane.b32.xlu0 %v2053, 124
        %v2365 = vpop.permute.xlu0 %2364
        %2366 = vrot.lane.b32.xlu0 %v2054, 124
        %v2367 = vpop.permute.xlu0 %2366
        %2368 = vrot.lane.b32.xlu0 %v2055, 124
        %v2369 = vpop.permute.xlu0 %2368
        %2370 = vrot.lane.b32.xlu0 %v2056, 124
        %v2371 = vpop.permute.xlu0 %2370
        %2372 = vrot.lane.b32.xlu0 %v2057, 124
        %v2373 = vpop.permute.xlu0 %2372
        %v2374 = vsel %vm406, %v2363, %v2365
        %v2375 = vsel %vm406, %v2367, %v2369
        %v2376 = vsel %vm406, %v2371, %v2373
        %v2383 = vadd.f32 %v2052, %v2374
        %v2384 = vadd.f32 %v2053, %v2365
        %v2385 = vadd.f32 %v2054, %v2375
        %v2386 = vadd.f32 %v2055, %v2369
        %v2387 = vadd.f32 %v2056, %v2376
        %v2388 = vadd.f32 %v2057, %v2373
        %s2389 = sld [smem:[#allocation4 + $0x41]]
        %v2390 = vstv %s2389
        %v2391 = vmul.f32 %v2390, %v2383
        %v2392 = vmul.f32 %v2390, %v2384
        %v2393 = vmul.f32 %v2390, %v2385
        %v2394 = vmul.f32 %v2390, %v2386
        %v2395 = vmul.f32 %v2390, %v2387
        %v2396 = vmul.f32 %v2390, %v2388
        %v2403 = vrot.slane %v2391, 4
        %v2404 = vrot.slane %v2393, 4
        %v2405 = vsel %vm537, %v2403, %v2404
        %v2406 = vrot.slane %v2392, 4
        %v2407 = vrot.slane %v2394, 4
        %v2408 = vsel %vm537, %v2406, %v2407
        %v2409 = vrot.slane %v2395, 4
        %v2410 = vsel %vm537, %v2404, %v2409
        %v2411 = vrot.slane %v2396, 4
        %v2412 = vsel %vm537, %v2407, %v2411
        %2413 = vrot.lane.b32.xlu0 %v2405, 123
        %v2414 = vpop.permute.xlu0 %2413
        %2415 = vrot.lane.b32.xlu0 %v2408, 123
        %v2416 = vpop.permute.xlu0 %2415
        %2417 = vrot.lane.b32.xlu0 %v2410, 123
        %v2418 = vpop.permute.xlu0 %2417
        %2419 = vrot.lane.b32.xlu0 %v2412, 123
        %v2420 = vpop.permute.xlu0 %2419
        %v2421 = vsel %vm449, %v2414, %v2416
        %v2422 = vsel %vm449, %v2418, %v2420
        %v2425 = vadd.f32 %v2360, %v2421
        %v2426 = vadd.f32 %v2361, %v2422
        %2427 = vrot.lane.b32.xlu0 %v2052, 126
        %v2428 = vpop.permute.xlu0 %2427
        %2429 = vrot.lane.b32.xlu0 %v2053, 126
        %v2430 = vpop.permute.xlu0 %2429
        %2431 = vrot.lane.b32.xlu0 %v2054, 126
        %v2432 = vpop.permute.xlu0 %2431
        %2433 = vrot.lane.b32.xlu0 %v2055, 126
        %v2434 = vpop.permute.xlu0 %2433
        %2435 = vrot.lane.b32.xlu0 %v2056, 126
        %v2436 = vpop.permute.xlu0 %2435
        %2437 = vrot.lane.b32.xlu0 %v2057, 126
        %v2438 = vpop.permute.xlu0 %2437
        %v2439 = vsel %vm318, %v2428, %v2430
        %v2440 = vsel %vm318, %v2432, %v2434
        %v2441 = vsel %vm318, %v2436, %v2438
        %v2448 = vadd.f32 %v2052, %v2439
        %v2449 = vadd.f32 %v2053, %v2430
        %v2450 = vadd.f32 %v2054, %v2440
        %v2451 = vadd.f32 %v2055, %v2434
        %v2452 = vadd.f32 %v2056, %v2441
        %v2453 = vadd.f32 %v2057, %v2438
        %s2454 = sld [smem:[#allocation4 + $0x42]]
        %v2455 = vstv %s2454
        %v2456 = vmul.f32 %v2455, %v2448
        %v2457 = vmul.f32 %v2455, %v2449
        %v2458 = vmul.f32 %v2455, %v2450
        %v2459 = vmul.f32 %v2455, %v2451
        %v2460 = vmul.f32 %v2455, %v2452
        %v2461 = vmul.f32 %v2455, %v2453
        %v2468 = vrot.slane %v2456, 4
        %v2469 = vrot.slane %v2458, 4
        %v2470 = vsel %vm537, %v2468, %v2469
        %v2471 = vrot.slane %v2457, 4
        %v2472 = vrot.slane %v2459, 4
        %v2473 = vsel %vm537, %v2471, %v2472
        %v2474 = vrot.slane %v2460, 4
        %v2475 = vsel %vm537, %v2469, %v2474
        %v2476 = vrot.slane %v2461, 4
        %v2477 = vsel %vm537, %v2472, %v2476
        %2478 = vrot.lane.b32.xlu0 %v2470, 122
        %v2479 = vpop.permute.xlu0 %2478
        %2480 = vrot.lane.b32.xlu0 %v2473, 122
        %v2481 = vpop.permute.xlu0 %2480
        %2482 = vrot.lane.b32.xlu0 %v2475, 122
        %v2483 = vpop.permute.xlu0 %2482
        %2484 = vrot.lane.b32.xlu0 %v2477, 122
        %v2485 = vpop.permute.xlu0 %2484
        %v2486 = vsel %vm377, %v2479, %v2481
        %v2487 = vsel %vm377, %v2483, %v2485
        %v2490 = vadd.f32 %v2425, %v2486
        %v2491 = vadd.f32 %v2426, %v2487
        %s2492 = sld [smem:[#allocation4 + $0x43]]
        %v2493 = vstv %s2492
        %v2494 = vmul.f32 %v2493, %v2052
        %v2495 = vmul.f32 %v2493, %v2053
        %v2496 = vmul.f32 %v2493, %v2054
        %v2497 = vmul.f32 %v2493, %v2055
        %v2498 = vmul.f32 %v2493, %v2056
        %v2499 = vmul.f32 %v2493, %v2057
        %v2506 = vrot.slane %v2494, 4
        %v2507 = vrot.slane %v2496, 4
        %v2508 = vsel %vm537, %v2506, %v2507
        %v2509 = vrot.slane %v2495, 4
        %v2510 = vrot.slane %v2497, 4
        %v2511 = vsel %vm537, %v2509, %v2510
        %v2512 = vrot.slane %v2498, 4
        %v2513 = vsel %vm537, %v2507, %v2512
        %v2514 = vrot.slane %v2499, 4
        %v2515 = vsel %vm537, %v2510, %v2514
        %2516 = vrot.lane.b32.xlu0 %v2508, 121
        %v2517 = vpop.permute.xlu0 %2516
        %2518 = vrot.lane.b32.xlu0 %v2511, 121
        %v2519 = vpop.permute.xlu0 %2518
        %2520 = vrot.lane.b32.xlu0 %v2513, 121
        %v2521 = vpop.permute.xlu0 %2520
        %2522 = vrot.lane.b32.xlu0 %v2515, 121
        %v2523 = vpop.permute.xlu0 %2522
        %v2524 = vsel %vm516, %v2517, %v2519
        %v2525 = vsel %vm516, %v2521, %v2523
        %v2528 = vadd.f32 %v2490, %v2524
        %v2529 = vadd.f32 %v2491, %v2525
        %v2530 = vld [vmem:[#allocation2] sm:$0xe0]
        %v2531 = vld [vmem:[#allocation2 + $0x8] sm:$0xe0]
        %v2532 = vld [vmem:[#allocation2 + $0x20] sm:$0x1f]
        %v2533 = vld [vmem:[#allocation2 + $0x28] sm:$0x1f]
        %v2534 = vld [vmem:[#allocation2 + $0x10] sm:$0xfe]
        %v2535 = vld [vmem:[#allocation2 + $0x18] sm:$0xfe]
        %v2536 = vld [vmem:[#allocation2 + $0x30] sm:$0x1]
        %v2537 = vld [vmem:[#allocation2 + $0x38] sm:$0x1]
        %v2542 = vrot.slane %v2534, 4
        %v2543 = vrot.slane %v2535, 4
        %v2544 = vsel %vm537, %v2542, %v539
        %v2545 = vsel %vm537, %v2543, %v542
        %v2546 = vrot.slane %v2536, 4
        %v2547 = vsel %vm537, %v539, %v2546
        %v2548 = vrot.slane %v2537, 4
        %v2549 = vsel %vm537, %v542, %v2548
        %v2556 = vadd.f32 %v2530, %v2542
        %v2557 = vadd.f32 %v2531, %v2543
        %v2558 = vadd.f32 %v525, %v2544
        %v2559 = vadd.f32 %v526, %v2545
        %v2560 = vadd.f32 %v2532, %v2547
        %v2561 = vadd.f32 %v2533, %v2549
        %2568 = vrot.lane.b32.xlu0 %v2556, 114
        %v2569 = vpop.permute.xlu0 %2568
        %2570 = vrot.lane.b32.xlu0 %v2557, 114
        %v2571 = vpop.permute.xlu0 %2570
        %2572 = vrot.lane.b32.xlu0 %v2558, 114
        %v2573 = vpop.permute.xlu0 %2572
        %2574 = vrot.lane.b32.xlu0 %v2559, 114
        %v2575 = vpop.permute.xlu0 %2574
        %2576 = vrot.lane.b32.xlu0 %v2560, 114
        %v2577 = vpop.permute.xlu0 %2576
        %2578 = vrot.lane.b32.xlu0 %v2561, 114
        %v2579 = vpop.permute.xlu0 %2578
        %v2580 = vsel %vm224, %v2569, %v2571
        %v2581 = vsel %vm224, %v2573, %v2575
        %v2582 = vsel %vm224, %v2577, %v2579
        %v2586 = vadd.f32 %v2556, %v2580
        %v2587 = vadd.f32 %v2558, %v2581
        %v2588 = vadd.f32 %v2560, %v2582
        %s2589 = sld [smem:[#allocation4 + $0x4b]]
        %v2590 = vstv %s2589
        %v2591 = vmul.f32 %v2590, %v2586
        %v2592 = vmul.f32 %v2590, %v2587
        %v2593 = vmul.f32 %v2590, %v2588
        %vm2597 = vcmask 1042432
        %v2598 = vrot.slane %v2591, 5
        %v2599 = vrot.slane %v2592, 5
        %v2600 = vsel %vm2597, %v2598, %v2599
        %v2601 = vrot.slane %v2593, 5
        %v2602 = vsel %vm2597, %v2599, %v2601
        %v2605 = vadd.f32 %v2528, %v2600
        %v2606 = vadd.f32 %v2529, %v2602
        %2607 = vrot.lane.b32.xlu0 %v2556, 116
        %v2608 = vpop.permute.xlu0 %2607
        %2609 = vrot.lane.b32.xlu0 %v2557, 116
        %v2610 = vpop.permute.xlu0 %2609
        %2611 = vrot.lane.b32.xlu0 %v2558, 116
        %v2612 = vpop.permute.xlu0 %2611
        %2613 = vrot.lane.b32.xlu0 %v2559, 116
        %v2614 = vpop.permute.xlu0 %2613
        %2615 = vrot.lane.b32.xlu0 %v2560, 116
        %v2616 = vpop.permute.xlu0 %2615
        %2617 = vrot.lane.b32.xlu0 %v2561, 116
        %v2618 = vpop.permute.xlu0 %2617
        %v2619 = vsel %vm245, %v2608, %v2610
        %v2620 = vsel %vm245, %v2612, %v2614
        %v2621 = vsel %vm245, %v2616, %v2618
        %v2628 = vadd.f32 %v2556, %v2619
        %v2629 = vadd.f32 %v2557, %v2610
        %v2630 = vadd.f32 %v2558, %v2620
        %v2631 = vadd.f32 %v2559, %v2614
        %v2632 = vadd.f32 %v2560, %v2621
        %v2633 = vadd.f32 %v2561, %v2618
        %s2634 = sld [smem:[#allocation4 + $0x4c]]
        %v2635 = vstv %s2634
        %v2636 = vmul.f32 %v2635, %v2628
        %v2637 = vmul.f32 %v2635, %v2629
        %v2638 = vmul.f32 %v2635, %v2630
        %v2639 = vmul.f32 %v2635, %v2631
        %v2640 = vmul.f32 %v2635, %v2632
        %v2641 = vmul.f32 %v2635, %v2633
        %v2648 = vrot.slane %v2636, 5
        %v2649 = vrot.slane %v2638, 5
        %v2650 = vsel %vm2597, %v2648, %v2649
        %v2651 = vrot.slane %v2637, 5
        %v2652 = vrot.slane %v2639, 5
        %v2653 = vsel %vm2597, %v2651, %v2652
        %v2654 = vrot.slane %v2640, 5
        %v2655 = vsel %vm2597, %v2649, %v2654
        %v2656 = vrot.slane %v2641, 5
        %v2657 = vsel %vm2597, %v2652, %v2656
        %2658 = vrot.lane.b32.xlu0 %v2650, 127
        %v2659 = vpop.permute.xlu0 %2658
        %2660 = vrot.lane.b32.xlu0 %v2653, 127
        %v2661 = vpop.permute.xlu0 %2660
        %2662 = vrot.lane.b32.xlu0 %v2655, 127
        %v2663 = vpop.permute.xlu0 %2662
        %2664 = vrot.lane.b32.xlu0 %v2657, 127
        %v2665 = vpop.permute.xlu0 %2664
        %v2666 = vsel %vm274, %v2659, %v2661
        %v2667 = vsel %vm274, %v2663, %v2665
        %v2670 = vadd.f32 %v2605, %v2666
        %v2671 = vadd.f32 %v2606, %v2667
        %2672 = vrot.lane.b32.xlu0 %v2556, 118
        %v2673 = vpop.permute.xlu0 %2672
        %2674 = vrot.lane.b32.xlu0 %v2557, 118
        %v2675 = vpop.permute.xlu0 %2674
        %2676 = vrot.lane.b32.xlu0 %v2558, 118
        %v2677 = vpop.permute.xlu0 %2676
        %2678 = vrot.lane.b32.xlu0 %v2559, 118
        %v2679 = vpop.permute.xlu0 %2678
        %2680 = vrot.lane.b32.xlu0 %v2560, 118
        %v2681 = vpop.permute.xlu0 %2680
        %2682 = vrot.lane.b32.xlu0 %v2561, 118
        %v2683 = vpop.permute.xlu0 %2682
        %v2684 = vsel %vm289, %v2673, %v2675
        %v2685 = vsel %vm289, %v2677, %v2679
        %v2686 = vsel %vm289, %v2681, %v2683
        %v2693 = vadd.f32 %v2556, %v2684
        %v2694 = vadd.f32 %v2557, %v2675
        %v2695 = vadd.f32 %v2558, %v2685
        %v2696 = vadd.f32 %v2559, %v2679
        %v2697 = vadd.f32 %v2560, %v2686
        %v2698 = vadd.f32 %v2561, %v2683
        %s2699 = sld [smem:[#allocation4 + $0x4d]]
        %v2700 = vstv %s2699
        %v2701 = vmul.f32 %v2700, %v2693
        %v2702 = vmul.f32 %v2700, %v2694
        %v2703 = vmul.f32 %v2700, %v2695
        %v2704 = vmul.f32 %v2700, %v2696
        %v2705 = vmul.f32 %v2700, %v2697
        %v2706 = vmul.f32 %v2700, %v2698
        %v2713 = vrot.slane %v2701, 5
        %v2714 = vrot.slane %v2703, 5
        %v2715 = vsel %vm2597, %v2713, %v2714
        %v2716 = vrot.slane %v2702, 5
        %v2717 = vrot.slane %v2704, 5
        %v2718 = vsel %vm2597, %v2716, %v2717
        %v2719 = vrot.slane %v2705, 5
        %v2720 = vsel %vm2597, %v2714, %v2719
        %v2721 = vrot.slane %v2706, 5
        %v2722 = vsel %vm2597, %v2717, %v2721
        %2723 = vrot.lane.b32.xlu0 %v2715, 126
        %v2724 = vpop.permute.xlu0 %2723
        %2725 = vrot.lane.b32.xlu0 %v2718, 126
        %v2726 = vpop.permute.xlu0 %2725
        %2727 = vrot.lane.b32.xlu0 %v2720, 126
        %v2728 = vpop.permute.xlu0 %2727
        %2729 = vrot.lane.b32.xlu0 %v2722, 126
        %v2730 = vpop.permute.xlu0 %2729
        %v2731 = vsel %vm318, %v2724, %v2726
        %v2732 = vsel %vm318, %v2728, %v2730
        %v2735 = vadd.f32 %v2670, %v2731
        %v2736 = vadd.f32 %v2671, %v2732
        %2737 = vrot.lane.b32.xlu0 %v2556, 120
        %v2738 = vpop.permute.xlu0 %2737
        %2739 = vrot.lane.b32.xlu0 %v2557, 120
        %v2740 = vpop.permute.xlu0 %2739
        %2741 = vrot.lane.b32.xlu0 %v2558, 120
        %v2742 = vpop.permute.xlu0 %2741
        %2743 = vrot.lane.b32.xlu0 %v2559, 120
        %v2744 = vpop.permute.xlu0 %2743
        %2745 = vrot.lane.b32.xlu0 %v2560, 120
        %v2746 = vpop.permute.xlu0 %2745
        %2747 = vrot.lane.b32.xlu0 %v2561, 120
        %v2748 = vpop.permute.xlu0 %2747
        %v2749 = vsel %vm333, %v2738, %v2740
        %v2750 = vsel %vm333, %v2742, %v2744
        %v2751 = vsel %vm333, %v2746, %v2748
        %v2758 = vadd.f32 %v2556, %v2749
        %v2759 = vadd.f32 %v2557, %v2740
        %v2760 = vadd.f32 %v2558, %v2750
        %v2761 = vadd.f32 %v2559, %v2744
        %v2762 = vadd.f32 %v2560, %v2751
        %v2763 = vadd.f32 %v2561, %v2748
        %s2764 = sld [smem:[#allocation4 + $0x4e]]
        %v2765 = vstv %s2764
        %v2766 = vmul.f32 %v2765, %v2758
        %v2767 = vmul.f32 %v2765, %v2759
        %v2768 = vmul.f32 %v2765, %v2760
        %v2769 = vmul.f32 %v2765, %v2761
        %v2770 = vmul.f32 %v2765, %v2762
        %v2771 = vmul.f32 %v2765, %v2763
        %v2778 = vrot.slane %v2766, 5
        %v2779 = vrot.slane %v2768, 5
        %v2780 = vsel %vm2597, %v2778, %v2779
        %v2781 = vrot.slane %v2767, 5
        %v2782 = vrot.slane %v2769, 5
        %v2783 = vsel %vm2597, %v2781, %v2782
        %v2784 = vrot.slane %v2770, 5
        %v2785 = vsel %vm2597, %v2779, %v2784
        %v2786 = vrot.slane %v2771, 5
        %v2787 = vsel %vm2597, %v2782, %v2786
        %2788 = vrot.lane.b32.xlu0 %v2780, 125
        %v2789 = vpop.permute.xlu0 %2788
        %2790 = vrot.lane.b32.xlu0 %v2783, 125
        %v2791 = vpop.permute.xlu0 %2790
        %2792 = vrot.lane.b32.xlu0 %v2785, 125
        %v2793 = vpop.permute.xlu0 %2792
        %2794 = vrot.lane.b32.xlu0 %v2787, 125
        %v2795 = vpop.permute.xlu0 %2794
        %v2796 = vsel %vm362, %v2789, %v2791
        %v2797 = vsel %vm362, %v2793, %v2795
        %v2800 = vadd.f32 %v2735, %v2796
        %v2801 = vadd.f32 %v2736, %v2797
        %2802 = vrot.lane.b32.xlu0 %v2556, 122
        %v2803 = vpop.permute.xlu0 %2802
        %2804 = vrot.lane.b32.xlu0 %v2557, 122
        %v2805 = vpop.permute.xlu0 %2804
        %2806 = vrot.lane.b32.xlu0 %v2558, 122
        %v2807 = vpop.permute.xlu0 %2806
        %2808 = vrot.lane.b32.xlu0 %v2559, 122
        %v2809 = vpop.permute.xlu0 %2808
        %2810 = vrot.lane.b32.xlu0 %v2560, 122
        %v2811 = vpop.permute.xlu0 %2810
        %2812 = vrot.lane.b32.xlu0 %v2561, 122
        %v2813 = vpop.permute.xlu0 %2812
        %v2814 = vsel %vm377, %v2803, %v2805
        %v2815 = vsel %vm377, %v2807, %v2809
        %v2816 = vsel %vm377, %v2811, %v2813
        %v2823 = vadd.f32 %v2556, %v2814
        %v2824 = vadd.f32 %v2557, %v2805
        %v2825 = vadd.f32 %v2558, %v2815
        %v2826 = vadd.f32 %v2559, %v2809
        %v2827 = vadd.f32 %v2560, %v2816
        %v2828 = vadd.f32 %v2561, %v2813
        %s2829 = sld [smem:[#allocation4 + $0x4f]]
        %v2830 = vstv %s2829
        %v2831 = vmul.f32 %v2830, %v2823
        %v2832 = vmul.f32 %v2830, %v2824
        %v2833 = vmul.f32 %v2830, %v2825
        %v2834 = vmul.f32 %v2830, %v2826
        %v2835 = vmul.f32 %v2830, %v2827
        %v2836 = vmul.f32 %v2830, %v2828
        %v2843 = vrot.slane %v2831, 5
        %v2844 = vrot.slane %v2833, 5
        %v2845 = vsel %vm2597, %v2843, %v2844
        %v2846 = vrot.slane %v2832, 5
        %v2847 = vrot.slane %v2834, 5
        %v2848 = vsel %vm2597, %v2846, %v2847
        %v2849 = vrot.slane %v2835, 5
        %v2850 = vsel %vm2597, %v2844, %v2849
        %v2851 = vrot.slane %v2836, 5
        %v2852 = vsel %vm2597, %v2847, %v2851
        %2853 = vrot.lane.b32.xlu0 %v2845, 124
        %v2854 = vpop.permute.xlu0 %2853
        %2855 = vrot.lane.b32.xlu0 %v2848, 124
        %v2856 = vpop.permute.xlu0 %2855
        %2857 = vrot.lane.b32.xlu0 %v2850, 124
        %v2858 = vpop.permute.xlu0 %2857
        %2859 = vrot.lane.b32.xlu0 %v2852, 124
        %v2860 = vpop.permute.xlu0 %2859
        %v2861 = vsel %vm406, %v2854, %v2856
        %v2862 = vsel %vm406, %v2858, %v2860
        %v2865 = vadd.f32 %v2800, %v2861
        %v2866 = vadd.f32 %v2801, %v2862
        %2867 = vrot.lane.b32.xlu0 %v2556, 124
        %v2868 = vpop.permute.xlu0 %2867
        %2869 = vrot.lane.b32.xlu0 %v2557, 124
        %v2870 = vpop.permute.xlu0 %2869
        %2871 = vrot.lane.b32.xlu0 %v2558, 124
        %v2872 = vpop.permute.xlu0 %2871
        %2873 = vrot.lane.b32.xlu0 %v2559, 124
        %v2874 = vpop.permute.xlu0 %2873
        %2875 = vrot.lane.b32.xlu0 %v2560, 124
        %v2876 = vpop.permute.xlu0 %2875
        %2877 = vrot.lane.b32.xlu0 %v2561, 124
        %v2878 = vpop.permute.xlu0 %2877
        %v2879 = vsel %vm406, %v2868, %v2870
        %v2880 = vsel %vm406, %v2872, %v2874
        %v2881 = vsel %vm406, %v2876, %v2878
        %v2888 = vadd.f32 %v2556, %v2879
        %v2889 = vadd.f32 %v2557, %v2870
        %v2890 = vadd.f32 %v2558, %v2880
        %v2891 = vadd.f32 %v2559, %v2874
        %v2892 = vadd.f32 %v2560, %v2881
        %v2893 = vadd.f32 %v2561, %v2878
        %s2894 = sld [smem:[#allocation4 + $0x50]]
        %v2895 = vstv %s2894
        %v2896 = vmul.f32 %v2895, %v2888
        %v2897 = vmul.f32 %v2895, %v2889
        %v2898 = vmul.f32 %v2895, %v2890
        %v2899 = vmul.f32 %v2895, %v2891
        %v2900 = vmul.f32 %v2895, %v2892
        %v2901 = vmul.f32 %v2895, %v2893
        %v2908 = vrot.slane %v2896, 5
        %v2909 = vrot.slane %v2898, 5
        %v2910 = vsel %vm2597, %v2908, %v2909
        %v2911 = vrot.slane %v2897, 5
        %v2912 = vrot.slane %v2899, 5
        %v2913 = vsel %vm2597, %v2911, %v2912
        %v2914 = vrot.slane %v2900, 5
        %v2915 = vsel %vm2597, %v2909, %v2914
        %v2916 = vrot.slane %v2901, 5
        %v2917 = vsel %vm2597, %v2912, %v2916
        %2918 = vrot.lane.b32.xlu0 %v2910, 123
        %v2919 = vpop.permute.xlu0 %2918
        %2920 = vrot.lane.b32.xlu0 %v2913, 123
        %v2921 = vpop.permute.xlu0 %2920
        %2922 = vrot.lane.b32.xlu0 %v2915, 123
        %v2923 = vpop.permute.xlu0 %2922
        %2924 = vrot.lane.b32.xlu0 %v2917, 123
        %v2925 = vpop.permute.xlu0 %2924
        %v2926 = vsel %vm449, %v2919, %v2921
        %v2927 = vsel %vm449, %v2923, %v2925
        %v2930 = vadd.f32 %v2865, %v2926
        %v2931 = vadd.f32 %v2866, %v2927
        %2932 = vrot.lane.b32.xlu0 %v2556, 126
        %v2933 = vpop.permute.xlu0 %2932
        %2934 = vrot.lane.b32.xlu0 %v2557, 126
        %v2935 = vpop.permute.xlu0 %2934
        %2936 = vrot.lane.b32.xlu0 %v2558, 126
        %v2937 = vpop.permute.xlu0 %2936
        %2938 = vrot.lane.b32.xlu0 %v2559, 126
        %v2939 = vpop.permute.xlu0 %2938
        %2940 = vrot.lane.b32.xlu0 %v2560, 126
        %v2941 = vpop.permute.xlu0 %2940
        %2942 = vrot.lane.b32.xlu0 %v2561, 126
        %v2943 = vpop.permute.xlu0 %2942
        %v2944 = vsel %vm318, %v2933, %v2935
        %v2945 = vsel %vm318, %v2937, %v2939
        %v2946 = vsel %vm318, %v2941, %v2943
        %v2953 = vadd.f32 %v2556, %v2944
        %v2954 = vadd.f32 %v2557, %v2935
        %v2955 = vadd.f32 %v2558, %v2945
        %v2956 = vadd.f32 %v2559, %v2939
        %v2957 = vadd.f32 %v2560, %v2946
        %v2958 = vadd.f32 %v2561, %v2943
        %s2959 = sld [smem:[#allocation4 + $0x51]]
        %v2960 = vstv %s2959
        %v2961 = vmul.f32 %v2960, %v2953
        %v2962 = vmul.f32 %v2960, %v2954
        %v2963 = vmul.f32 %v2960, %v2955
        %v2964 = vmul.f32 %v2960, %v2956
        %v2965 = vmul.f32 %v2960, %v2957
        %v2966 = vmul.f32 %v2960, %v2958
        %v2973 = vrot.slane %v2961, 5
        %v2974 = vrot.slane %v2963, 5
        %v2975 = vsel %vm2597, %v2973, %v2974
        %v2976 = vrot.slane %v2962, 5
        %v2977 = vrot.slane %v2964, 5
        %v2978 = vsel %vm2597, %v2976, %v2977
        %v2979 = vrot.slane %v2965, 5
        %v2980 = vsel %vm2597, %v2974, %v2979
        %v2981 = vrot.slane %v2966, 5
        %v2982 = vsel %vm2597, %v2977, %v2981
        %2983 = vrot.lane.b32.xlu0 %v2975, 122
        %v2984 = vpop.permute.xlu0 %2983
        %2985 = vrot.lane.b32.xlu0 %v2978, 122
        %v2986 = vpop.permute.xlu0 %2985
        %2987 = vrot.lane.b32.xlu0 %v2980, 122
        %v2988 = vpop.permute.xlu0 %2987
        %2989 = vrot.lane.b32.xlu0 %v2982, 122
        %v2990 = vpop.permute.xlu0 %2989
        %v2991 = vsel %vm377, %v2984, %v2986
        %v2992 = vsel %vm377, %v2988, %v2990
        %v2995 = vadd.f32 %v2930, %v2991
        %v2996 = vadd.f32 %v2931, %v2992
        %s2997 = sld [smem:[#allocation4 + $0x52]]
        %v2998 = vstv %s2997
        %v2999 = vmul.f32 %v2998, %v2556
        %v3000 = vmul.f32 %v2998, %v2557
        %v3001 = vmul.f32 %v2998, %v2558
        %v3002 = vmul.f32 %v2998, %v2559
        %v3003 = vmul.f32 %v2998, %v2560
        %v3004 = vmul.f32 %v2998, %v2561
        %v3011 = vrot.slane %v2999, 5
        %v3012 = vrot.slane %v3001, 5
        %v3013 = vsel %vm2597, %v3011, %v3012
        %v3014 = vrot.slane %v3000, 5
        %v3015 = vrot.slane %v3002, 5
        %v3016 = vsel %vm2597, %v3014, %v3015
        %v3017 = vrot.slane %v3003, 5
        %v3018 = vsel %vm2597, %v3012, %v3017
        %v3019 = vrot.slane %v3004, 5
        %v3020 = vsel %vm2597, %v3015, %v3019
        %3021 = vrot.lane.b32.xlu0 %v3013, 121
        %v3022 = vpop.permute.xlu0 %3021
        %3023 = vrot.lane.b32.xlu0 %v3016, 121
        %v3024 = vpop.permute.xlu0 %3023
        %3025 = vrot.lane.b32.xlu0 %v3018, 121
        %v3026 = vpop.permute.xlu0 %3025
        %3027 = vrot.lane.b32.xlu0 %v3020, 121
        %v3028 = vpop.permute.xlu0 %3027
        %v3029 = vsel %vm516, %v3022, %v3024
        %v3030 = vsel %vm516, %v3026, %v3028
        %v3033 = vadd.f32 %v2995, %v3029
        %v3034 = vadd.f32 %v2996, %v3030
        %v3035 = vld [vmem:[#allocation2] sm:$0xc0]
        %v3036 = vld [vmem:[#allocation2 + $0x8] sm:$0xc0]
        %v3037 = vld [vmem:[#allocation2 + $0x20] sm:$0x3f]
        %v3038 = vld [vmem:[#allocation2 + $0x28] sm:$0x3f]
        %v3039 = vld [vmem:[#allocation2 + $0x20] sm:$0xff]
        %v3040 = vld [vmem:[#allocation2 + $0x28] sm:$0xff]
        %v3045 = vrot.slane %v525, 2
        %v3046 = vrot.slane %v526, 2
        %v3047 = vrot.slane %v3039, 2
        %v3048 = vsel %vm1044, %v3045, %v3047
        %v3049 = vrot.slane %v3040, 2
        %v3050 = vsel %vm1044, %v3046, %v3049
        %v3057 = vadd.f32 %v3035, %v3045
        %v3058 = vadd.f32 %v3036, %v3046
        %v3059 = vadd.f32 %v525, %v3048
        %v3060 = vadd.f32 %v526, %v3050
        %v3061 = vadd.f32 %v3037, %v3047
        %v3062 = vadd.f32 %v3038, %v3049
        %3069 = vrot.lane.b32.xlu0 %v3057, 114
        %v3070 = vpop.permute.xlu0 %3069
        %3071 = vrot.lane.b32.xlu0 %v3058, 114
        %v3072 = vpop.permute.xlu0 %3071
        %3073 = vrot.lane.b32.xlu0 %v3059, 114
        %v3074 = vpop.permute.xlu0 %3073
        %3075 = vrot.lane.b32.xlu0 %v3060, 114
        %v3076 = vpop.permute.xlu0 %3075
        %3077 = vrot.lane.b32.xlu0 %v3061, 114
        %v3078 = vpop.permute.xlu0 %3077
        %3079 = vrot.lane.b32.xlu0 %v3062, 114
        %v3080 = vpop.permute.xlu0 %3079
        %v3081 = vsel %vm224, %v3070, %v3072
        %v3082 = vsel %vm224, %v3074, %v3076
        %v3083 = vsel %vm224, %v3078, %v3080
        %v3087 = vadd.f32 %v3057, %v3081
        %v3088 = vadd.f32 %v3059, %v3082
        %v3089 = vadd.f32 %v3061, %v3083
        %s3090 = sld [smem:[#allocation4 + $0x5a]]
        %v3091 = vstv %s3090
        %v3092 = vmul.f32 %v3091, %v3087
        %v3093 = vmul.f32 %v3091, %v3088
        %v3094 = vmul.f32 %v3091, %v3089
        %v3098 = vrot.slane %v3092, 6
        %v3099 = vrot.slane %v3093, 6
        %v3100 = vsel %vm193, %v3098, %v3099
        %v3101 = vrot.slane %v3094, 6
        %v3102 = vsel %vm193, %v3099, %v3101
        %v3105 = vadd.f32 %v3033, %v3100
        %v3106 = vadd.f32 %v3034, %v3102
        %3107 = vrot.lane.b32.xlu0 %v3057, 116
        %v3108 = vpop.permute.xlu0 %3107
        %3109 = vrot.lane.b32.xlu0 %v3058, 116
        %v3110 = vpop.permute.xlu0 %3109
        %3111 = vrot.lane.b32.xlu0 %v3059, 116
        %v3112 = vpop.permute.xlu0 %3111
        %3113 = vrot.lane.b32.xlu0 %v3060, 116
        %v3114 = vpop.permute.xlu0 %3113
        %3115 = vrot.lane.b32.xlu0 %v3061, 116
        %v3116 = vpop.permute.xlu0 %3115
        %3117 = vrot.lane.b32.xlu0 %v3062, 116
        %v3118 = vpop.permute.xlu0 %3117
        %v3119 = vsel %vm245, %v3108, %v3110
        %v3120 = vsel %vm245, %v3112, %v3114
        %v3121 = vsel %vm245, %v3116, %v3118
        %v3128 = vadd.f32 %v3057, %v3119
        %v3129 = vadd.f32 %v3058, %v3110
        %v3130 = vadd.f32 %v3059, %v3120
        %v3131 = vadd.f32 %v3060, %v3114
        %v3132 = vadd.f32 %v3061, %v3121
        %v3133 = vadd.f32 %v3062, %v3118
        %s3134 = sld [smem:[#allocation4 + $0x5b]]
        %v3135 = vstv %s3134
        %v3136 = vmul.f32 %v3135, %v3128
        %v3137 = vmul.f32 %v3135, %v3129
        %v3138 = vmul.f32 %v3135, %v3130
        %v3139 = vmul.f32 %v3135, %v3131
        %v3140 = vmul.f32 %v3135, %v3132
        %v3141 = vmul.f32 %v3135, %v3133
        %v3148 = vrot.slane %v3136, 6
        %v3149 = vrot.slane %v3138, 6
        %v3150 = vsel %vm193, %v3148, %v3149
        %v3151 = vrot.slane %v3137, 6
        %v3152 = vrot.slane %v3139, 6
        %v3153 = vsel %vm193, %v3151, %v3152
        %v3154 = vrot.slane %v3140, 6
        %v3155 = vsel %vm193, %v3149, %v3154
        %v3156 = vrot.slane %v3141, 6
        %v3157 = vsel %vm193, %v3152, %v3156
        %3158 = vrot.lane.b32.xlu0 %v3150, 127
        %v3159 = vpop.permute.xlu0 %3158
        %3160 = vrot.lane.b32.xlu0 %v3153, 127
        %v3161 = vpop.permute.xlu0 %3160
        %3162 = vrot.lane.b32.xlu0 %v3155, 127
        %v3163 = vpop.permute.xlu0 %3162
        %3164 = vrot.lane.b32.xlu0 %v3157, 127
        %v3165 = vpop.permute.xlu0 %3164
        %v3166 = vsel %vm274, %v3159, %v3161
        %v3167 = vsel %vm274, %v3163, %v3165
        %v3170 = vadd.f32 %v3105, %v3166
        %v3171 = vadd.f32 %v3106, %v3167
        %3172 = vrot.lane.b32.xlu0 %v3057, 118
        %v3173 = vpop.permute.xlu0 %3172
        %3174 = vrot.lane.b32.xlu0 %v3058, 118
        %v3175 = vpop.permute.xlu0 %3174
        %3176 = vrot.lane.b32.xlu0 %v3059, 118
        %v3177 = vpop.permute.xlu0 %3176
        %3178 = vrot.lane.b32.xlu0 %v3060, 118
        %v3179 = vpop.permute.xlu0 %3178
        %3180 = vrot.lane.b32.xlu0 %v3061, 118
        %v3181 = vpop.permute.xlu0 %3180
        %3182 = vrot.lane.b32.xlu0 %v3062, 118
        %v3183 = vpop.permute.xlu0 %3182
        %v3184 = vsel %vm289, %v3173, %v3175
        %v3185 = vsel %vm289, %v3177, %v3179
        %v3186 = vsel %vm289, %v3181, %v3183
        %v3193 = vadd.f32 %v3057, %v3184
        %v3194 = vadd.f32 %v3058, %v3175
        %v3195 = vadd.f32 %v3059, %v3185
        %v3196 = vadd.f32 %v3060, %v3179
        %v3197 = vadd.f32 %v3061, %v3186
        %v3198 = vadd.f32 %v3062, %v3183
        %s3199 = sld [smem:[#allocation4 + $0x5c]]
        %v3200 = vstv %s3199
        %v3201 = vmul.f32 %v3200, %v3193
        %v3202 = vmul.f32 %v3200, %v3194
        %v3203 = vmul.f32 %v3200, %v3195
        %v3204 = vmul.f32 %v3200, %v3196
        %v3205 = vmul.f32 %v3200, %v3197
        %v3206 = vmul.f32 %v3200, %v3198
        %v3213 = vrot.slane %v3201, 6
        %v3214 = vrot.slane %v3203, 6
        %v3215 = vsel %vm193, %v3213, %v3214
        %v3216 = vrot.slane %v3202, 6
        %v3217 = vrot.slane %v3204, 6
        %v3218 = vsel %vm193, %v3216, %v3217
        %v3219 = vrot.slane %v3205, 6
        %v3220 = vsel %vm193, %v3214, %v3219
        %v3221 = vrot.slane %v3206, 6
        %v3222 = vsel %vm193, %v3217, %v3221
        %3223 = vrot.lane.b32.xlu0 %v3215, 126
        %v3224 = vpop.permute.xlu0 %3223
        %3225 = vrot.lane.b32.xlu0 %v3218, 126
        %v3226 = vpop.permute.xlu0 %3225
        %3227 = vrot.lane.b32.xlu0 %v3220, 126
        %v3228 = vpop.permute.xlu0 %3227
        %3229 = vrot.lane.b32.xlu0 %v3222, 126
        %v3230 = vpop.permute.xlu0 %3229
        %v3231 = vsel %vm318, %v3224, %v3226
        %v3232 = vsel %vm318, %v3228, %v3230
        %v3235 = vadd.f32 %v3170, %v3231
        %v3236 = vadd.f32 %v3171, %v3232
        %3237 = vrot.lane.b32.xlu0 %v3057, 120
        %v3238 = vpop.permute.xlu0 %3237
        %3239 = vrot.lane.b32.xlu0 %v3058, 120
        %v3240 = vpop.permute.xlu0 %3239
        %3241 = vrot.lane.b32.xlu0 %v3059, 120
        %v3242 = vpop.permute.xlu0 %3241
        %3243 = vrot.lane.b32.xlu0 %v3060, 120
        %v3244 = vpop.permute.xlu0 %3243
        %3245 = vrot.lane.b32.xlu0 %v3061, 120
        %v3246 = vpop.permute.xlu0 %3245
        %3247 = vrot.lane.b32.xlu0 %v3062, 120
        %v3248 = vpop.permute.xlu0 %3247
        %v3249 = vsel %vm333, %v3238, %v3240
        %v3250 = vsel %vm333, %v3242, %v3244
        %v3251 = vsel %vm333, %v3246, %v3248
        %v3258 = vadd.f32 %v3057, %v3249
        %v3259 = vadd.f32 %v3058, %v3240
        %v3260 = vadd.f32 %v3059, %v3250
        %v3261 = vadd.f32 %v3060, %v3244
        %v3262 = vadd.f32 %v3061, %v3251
        %v3263 = vadd.f32 %v3062, %v3248
        %s3264 = sld [smem:[#allocation4 + $0x5d]]
        %v3265 = vstv %s3264
        %v3266 = vmul.f32 %v3265, %v3258
        %v3267 = vmul.f32 %v3265, %v3259
        %v3268 = vmul.f32 %v3265, %v3260
        %v3269 = vmul.f32 %v3265, %v3261
        %v3270 = vmul.f32 %v3265, %v3262
        %v3271 = vmul.f32 %v3265, %v3263
        %v3278 = vrot.slane %v3266, 6
        %v3279 = vrot.slane %v3268, 6
        %v3280 = vsel %vm193, %v3278, %v3279
        %v3281 = vrot.slane %v3267, 6
        %v3282 = vrot.slane %v3269, 6
        %v3283 = vsel %vm193, %v3281, %v3282
        %v3284 = vrot.slane %v3270, 6
        %v3285 = vsel %vm193, %v3279, %v3284
        %v3286 = vrot.slane %v3271, 6
        %v3287 = vsel %vm193, %v3282, %v3286
        %3288 = vrot.lane.b32.xlu0 %v3280, 125
        %v3289 = vpop.permute.xlu0 %3288
        %3290 = vrot.lane.b32.xlu0 %v3283, 125
        %v3291 = vpop.permute.xlu0 %3290
        %3292 = vrot.lane.b32.xlu0 %v3285, 125
        %v3293 = vpop.permute.xlu0 %3292
        %3294 = vrot.lane.b32.xlu0 %v3287, 125
        %v3295 = vpop.permute.xlu0 %3294
        %v3296 = vsel %vm362, %v3289, %v3291
        %v3297 = vsel %vm362, %v3293, %v3295
        %v3300 = vadd.f32 %v3235, %v3296
        %v3301 = vadd.f32 %v3236, %v3297
        %3302 = vrot.lane.b32.xlu0 %v3057, 122
        %v3303 = vpop.permute.xlu0 %3302
        %3304 = vrot.lane.b32.xlu0 %v3058, 122
        %v3305 = vpop.permute.xlu0 %3304
        %3306 = vrot.lane.b32.xlu0 %v3059, 122
        %v3307 = vpop.permute.xlu0 %3306
        %3308 = vrot.lane.b32.xlu0 %v3060, 122
        %v3309 = vpop.permute.xlu0 %3308
        %3310 = vrot.lane.b32.xlu0 %v3061, 122
        %v3311 = vpop.permute.xlu0 %3310
        %3312 = vrot.lane.b32.xlu0 %v3062, 122
        %v3313 = vpop.permute.xlu0 %3312
        %v3314 = vsel %vm377, %v3303, %v3305
        %v3315 = vsel %vm377, %v3307, %v3309
        %v3316 = vsel %vm377, %v3311, %v3313
        %v3323 = vadd.f32 %v3057, %v3314
        %v3324 = vadd.f32 %v3058, %v3305
        %v3325 = vadd.f32 %v3059, %v3315
        %v3326 = vadd.f32 %v3060, %v3309
        %v3327 = vadd.f32 %v3061, %v3316
        %v3328 = vadd.f32 %v3062, %v3313
        %s3329 = sld [smem:[#allocation4 + $0x5e]]
        %v3330 = vstv %s3329
        %v3331 = vmul.f32 %v3330, %v3323
        %v3332 = vmul.f32 %v3330, %v3324
        %v3333 = vmul.f32 %v3330, %v3325
        %v3334 = vmul.f32 %v3330, %v3326
        %v3335 = vmul.f32 %v3330, %v3327
        %v3336 = vmul.f32 %v3330, %v3328
        %v3343 = vrot.slane %v3331, 6
        %v3344 = vrot.slane %v3333, 6
        %v3345 = vsel %vm193, %v3343, %v3344
        %v3346 = vrot.slane %v3332, 6
        %v3347 = vrot.slane %v3334, 6
        %v3348 = vsel %vm193, %v3346, %v3347
        %v3349 = vrot.slane %v3335, 6
        %v3350 = vsel %vm193, %v3344, %v3349
        %v3351 = vrot.slane %v3336, 6
        %v3352 = vsel %vm193, %v3347, %v3351
        %3353 = vrot.lane.b32.xlu0 %v3345, 124
        %v3354 = vpop.permute.xlu0 %3353
        %3355 = vrot.lane.b32.xlu0 %v3348, 124
        %v3356 = vpop.permute.xlu0 %3355
        %3357 = vrot.lane.b32.xlu0 %v3350, 124
        %v3358 = vpop.permute.xlu0 %3357
        %3359 = vrot.lane.b32.xlu0 %v3352, 124
        %v3360 = vpop.permute.xlu0 %3359
        %v3361 = vsel %vm406, %v3354, %v3356
        %v3362 = vsel %vm406, %v3358, %v3360
        %v3365 = vadd.f32 %v3300, %v3361
        %v3366 = vadd.f32 %v3301, %v3362
        %3367 = vrot.lane.b32.xlu0 %v3057, 124
        %v3368 = vpop.permute.xlu0 %3367
        %3369 = vrot.lane.b32.xlu0 %v3058, 124
        %v3370 = vpop.permute.xlu0 %3369
        %3371 = vrot.lane.b32.xlu0 %v3059, 124
        %v3372 = vpop.permute.xlu0 %3371
        %3373 = vrot.lane.b32.xlu0 %v3060, 124
        %v3374 = vpop.permute.xlu0 %3373
        %3375 = vrot.lane.b32.xlu0 %v3061, 124
        %v3376 = vpop.permute.xlu0 %3375
        %3377 = vrot.lane.b32.xlu0 %v3062, 124
        %v3378 = vpop.permute.xlu0 %3377
        %v3379 = vsel %vm406, %v3368, %v3370
        %v3380 = vsel %vm406, %v3372, %v3374
        %v3381 = vsel %vm406, %v3376, %v3378
        %v3388 = vadd.f32 %v3057, %v3379
        %v3389 = vadd.f32 %v3058, %v3370
        %v3390 = vadd.f32 %v3059, %v3380
        %v3391 = vadd.f32 %v3060, %v3374
        %v3392 = vadd.f32 %v3061, %v3381
        %v3393 = vadd.f32 %v3062, %v3378
        %s3394 = sld [smem:[#allocation4 + $0x5f]]
        %v3395 = vstv %s3394
        %v3396 = vmul.f32 %v3395, %v3388
        %v3397 = vmul.f32 %v3395, %v3389
        %v3398 = vmul.f32 %v3395, %v3390
        %v3399 = vmul.f32 %v3395, %v3391
        %v3400 = vmul.f32 %v3395, %v3392
        %v3401 = vmul.f32 %v3395, %v3393
        %v3408 = vrot.slane %v3396, 6
        %v3409 = vrot.slane %v3398, 6
        %v3410 = vsel %vm193, %v3408, %v3409
        %v3411 = vrot.slane %v3397, 6
        %v3412 = vrot.slane %v3399, 6
        %v3413 = vsel %vm193, %v3411, %v3412
        %v3414 = vrot.slane %v3400, 6
        %v3415 = vsel %vm193, %v3409, %v3414
        %v3416 = vrot.slane %v3401, 6
        %v3417 = vsel %vm193, %v3412, %v3416
        %3418 = vrot.lane.b32.xlu0 %v3410, 123
        %v3419 = vpop.permute.xlu0 %3418
        %3420 = vrot.lane.b32.xlu0 %v3413, 123
        %v3421 = vpop.permute.xlu0 %3420
        %3422 = vrot.lane.b32.xlu0 %v3415, 123
        %v3423 = vpop.permute.xlu0 %3422
        %3424 = vrot.lane.b32.xlu0 %v3417, 123
        %v3425 = vpop.permute.xlu0 %3424
        %v3426 = vsel %vm449, %v3419, %v3421
        %v3427 = vsel %vm449, %v3423, %v3425
        %v3430 = vadd.f32 %v3365, %v3426
        %v3431 = vadd.f32 %v3366, %v3427
        %3432 = vrot.lane.b32.xlu0 %v3057, 126
        %v3433 = vpop.permute.xlu0 %3432
        %3434 = vrot.lane.b32.xlu0 %v3058, 126
        %v3435 = vpop.permute.xlu0 %3434
        %3436 = vrot.lane.b32.xlu0 %v3059, 126
        %v3437 = vpop.permute.xlu0 %3436
        %3438 = vrot.lane.b32.xlu0 %v3060, 126
        %v3439 = vpop.permute.xlu0 %3438
        %3440 = vrot.lane.b32.xlu0 %v3061, 126
        %v3441 = vpop.permute.xlu0 %3440
        %3442 = vrot.lane.b32.xlu0 %v3062, 126
        %v3443 = vpop.permute.xlu0 %3442
        %v3444 = vsel %vm318, %v3433, %v3435
        %v3445 = vsel %vm318, %v3437, %v3439
        %v3446 = vsel %vm318, %v3441, %v3443
        %v3453 = vadd.f32 %v3057, %v3444
        %v3454 = vadd.f32 %v3058, %v3435
        %v3455 = vadd.f32 %v3059, %v3445
        %v3456 = vadd.f32 %v3060, %v3439
        %v3457 = vadd.f32 %v3061, %v3446
        %v3458 = vadd.f32 %v3062, %v3443
        %s3459 = sld [smem:[#allocation4 + $0x60]]
        %v3460 = vstv %s3459
        %v3461 = vmul.f32 %v3460, %v3453
        %v3462 = vmul.f32 %v3460, %v3454
        %v3463 = vmul.f32 %v3460, %v3455
        %v3464 = vmul.f32 %v3460, %v3456
        %v3465 = vmul.f32 %v3460, %v3457
        %v3466 = vmul.f32 %v3460, %v3458
        %v3473 = vrot.slane %v3461, 6
        %v3474 = vrot.slane %v3463, 6
        %v3475 = vsel %vm193, %v3473, %v3474
        %v3476 = vrot.slane %v3462, 6
        %v3477 = vrot.slane %v3464, 6
        %v3478 = vsel %vm193, %v3476, %v3477
        %v3479 = vrot.slane %v3465, 6
        %v3480 = vsel %vm193, %v3474, %v3479
        %v3481 = vrot.slane %v3466, 6
        %v3482 = vsel %vm193, %v3477, %v3481
        %3483 = vrot.lane.b32.xlu0 %v3475, 122
        %v3484 = vpop.permute.xlu0 %3483
        %3485 = vrot.lane.b32.xlu0 %v3478, 122
        %v3486 = vpop.permute.xlu0 %3485
        %3487 = vrot.lane.b32.xlu0 %v3480, 122
        %v3488 = vpop.permute.xlu0 %3487
        %3489 = vrot.lane.b32.xlu0 %v3482, 122
        %v3490 = vpop.permute.xlu0 %3489
        %v3491 = vsel %vm377, %v3484, %v3486
        %v3492 = vsel %vm377, %v3488, %v3490
        %v3495 = vadd.f32 %v3430, %v3491
        %v3496 = vadd.f32 %v3431, %v3492
        %s3497 = sld [smem:[#allocation4 + $0x61]]
        %v3498 = vstv %s3497
        %v3499 = vmul.f32 %v3498, %v3057
        %v3500 = vmul.f32 %v3498, %v3058
        %v3501 = vmul.f32 %v3498, %v3059
        %v3502 = vmul.f32 %v3498, %v3060
        %v3503 = vmul.f32 %v3498, %v3061
        %v3504 = vmul.f32 %v3498, %v3062
        %v3511 = vrot.slane %v3499, 6
        %v3512 = vrot.slane %v3501, 6
        %v3513 = vsel %vm193, %v3511, %v3512
        %v3514 = vrot.slane %v3500, 6
        %v3515 = vrot.slane %v3502, 6
        %v3516 = vsel %vm193, %v3514, %v3515
        %v3517 = vrot.slane %v3503, 6
        %v3518 = vsel %vm193, %v3512, %v3517
        %v3519 = vrot.slane %v3504, 6
        %v3520 = vsel %vm193, %v3515, %v3519
        %3521 = vrot.lane.b32.xlu0 %v3513, 121
        %v3522 = vpop.permute.xlu0 %3521
        %3523 = vrot.lane.b32.xlu0 %v3516, 121
        %v3524 = vpop.permute.xlu0 %3523
        %3525 = vrot.lane.b32.xlu0 %v3518, 121
        %v3526 = vpop.permute.xlu0 %3525
        %3527 = vrot.lane.b32.xlu0 %v3520, 121
        %v3528 = vpop.permute.xlu0 %3527
        %v3529 = vsel %vm516, %v3522, %v3524
        %v3530 = vsel %vm516, %v3526, %v3528
        %v3533 = vadd.f32 %v3495, %v3529
        %v3534 = vadd.f32 %v3496, %v3530
        %v3535 = vld [vmem:[#allocation2] sm:$0x80]
        %v3536 = vld [vmem:[#allocation2 + $0x8] sm:$0x80]
        %v3537 = vld [vmem:[#allocation2 + $0x20] sm:$0x7f]
        %v3538 = vld [vmem:[#allocation2 + $0x28] sm:$0x7f]
        %3543 = vrot.lane.b32.xlu0 %v3535, 114
        %v3544 = vpop.permute.xlu0 %3543
        %3545 = vrot.lane.b32.xlu0 %v3536, 114
        %v3546 = vpop.permute.xlu0 %3545
        %3547 = vrot.lane.b32.xlu0 %v525, 114
        %v3548 = vpop.permute.xlu0 %3547
        %3549 = vrot.lane.b32.xlu0 %v526, 114
        %v3550 = vpop.permute.xlu0 %3549
        %3551 = vrot.lane.b32.xlu0 %v3537, 114
        %v3552 = vpop.permute.xlu0 %3551
        %3553 = vrot.lane.b32.xlu0 %v3538, 114
        %v3554 = vpop.permute.xlu0 %3553
        %v3555 = vsel %vm224, %v3544, %v3546
        %v3556 = vsel %vm224, %v3548, %v3550
        %v3557 = vsel %vm224, %v3552, %v3554
        %v3561 = vadd.f32 %v3535, %v3555
        %v3562 = vadd.f32 %v525, %v3556
        %v3563 = vadd.f32 %v3537, %v3557
        %s3564 = sld [smem:[#allocation4 + $0x69]]
        %v3565 = vstv %s3564
        %v3566 = vmul.f32 %v3565, %v3561
        %v3567 = vmul.f32 %v3565, %v3562
        %v3568 = vmul.f32 %v3565, %v3563
        %vm3572 = vcmask 1040384
        %v3573 = vrot.slane %v3566, 7
        %v3574 = vrot.slane %v3567, 7
        %v3575 = vsel %vm3572, %v3573, %v3574
        %v3576 = vrot.slane %v3568, 7
        %v3577 = vsel %vm3572, %v3574, %v3576
        %v3580 = vadd.f32 %v3533, %v3575
        %v3581 = vadd.f32 %v3534, %v3577
        %3582 = vrot.lane.b32.xlu0 %v3535, 116
        %v3583 = vpop.permute.xlu0 %3582
        %3584 = vrot.lane.b32.xlu0 %v3536, 116
        %v3585 = vpop.permute.xlu0 %3584
        %3586 = vrot.lane.b32.xlu0 %v525, 116
        %v3587 = vpop.permute.xlu0 %3586
        %3588 = vrot.lane.b32.xlu0 %v526, 116
        %v3589 = vpop.permute.xlu0 %3588
        %3590 = vrot.lane.b32.xlu0 %v3537, 116
        %v3591 = vpop.permute.xlu0 %3590
        %3592 = vrot.lane.b32.xlu0 %v3538, 116
        %v3593 = vpop.permute.xlu0 %3592
        %v3594 = vsel %vm245, %v3583, %v3585
        %v3595 = vsel %vm245, %v3587, %v3589
        %v3596 = vsel %vm245, %v3591, %v3593
        %v3603 = vadd.f32 %v3535, %v3594
        %v3604 = vadd.f32 %v3536, %v3585
        %v3605 = vadd.f32 %v525, %v3595
        %v3606 = vadd.f32 %v526, %v3589
        %v3607 = vadd.f32 %v3537, %v3596
        %v3608 = vadd.f32 %v3538, %v3593
        %s3609 = sld [smem:[#allocation4 + $0x6a]]
        %v3610 = vstv %s3609
        %v3611 = vmul.f32 %v3610, %v3603
        %v3612 = vmul.f32 %v3610, %v3604
        %v3613 = vmul.f32 %v3610, %v3605
        %v3614 = vmul.f32 %v3610, %v3606
        %v3615 = vmul.f32 %v3610, %v3607
        %v3616 = vmul.f32 %v3610, %v3608
        %v3623 = vrot.slane %v3611, 7
        %v3624 = vrot.slane %v3613, 7
        %v3625 = vsel %vm3572, %v3623, %v3624
        %v3626 = vrot.slane %v3612, 7
        %v3627 = vrot.slane %v3614, 7
        %v3628 = vsel %vm3572, %v3626, %v3627
        %v3629 = vrot.slane %v3615, 7
        %v3630 = vsel %vm3572, %v3624, %v3629
        %v3631 = vrot.slane %v3616, 7
        %v3632 = vsel %vm3572, %v3627, %v3631
        %3633 = vrot.lane.b32.xlu0 %v3625, 127
        %v3634 = vpop.permute.xlu0 %3633
        %3635 = vrot.lane.b32.xlu0 %v3628, 127
        %v3636 = vpop.permute.xlu0 %3635
        %3637 = vrot.lane.b32.xlu0 %v3630, 127
        %v3638 = vpop.permute.xlu0 %3637
        %3639 = vrot.lane.b32.xlu0 %v3632, 127
        %v3640 = vpop.permute.xlu0 %3639
        %v3641 = vsel %vm274, %v3634, %v3636
        %v3642 = vsel %vm274, %v3638, %v3640
        %v3645 = vadd.f32 %v3580, %v3641
        %v3646 = vadd.f32 %v3581, %v3642
        %3647 = vrot.lane.b32.xlu0 %v3535, 118
        %v3648 = vpop.permute.xlu0 %3647
        %3649 = vrot.lane.b32.xlu0 %v3536, 118
        %v3650 = vpop.permute.xlu0 %3649
        %3651 = vrot.lane.b32.xlu0 %v525, 118
        %v3652 = vpop.permute.xlu0 %3651
        %3653 = vrot.lane.b32.xlu0 %v526, 118
        %v3654 = vpop.permute.xlu0 %3653
        %3655 = vrot.lane.b32.xlu0 %v3537, 118
        %v3656 = vpop.permute.xlu0 %3655
        %3657 = vrot.lane.b32.xlu0 %v3538, 118
        %v3658 = vpop.permute.xlu0 %3657
        %v3659 = vsel %vm289, %v3648, %v3650
        %v3660 = vsel %vm289, %v3652, %v3654
        %v3661 = vsel %vm289, %v3656, %v3658
        %v3668 = vadd.f32 %v3535, %v3659
        %v3669 = vadd.f32 %v3536, %v3650
        %v3670 = vadd.f32 %v525, %v3660
        %v3671 = vadd.f32 %v526, %v3654
        %v3672 = vadd.f32 %v3537, %v3661
        %v3673 = vadd.f32 %v3538, %v3658
        %s3674 = sld [smem:[#allocation4 + $0x6b]]
        %v3675 = vstv %s3674
        %v3676 = vmul.f32 %v3675, %v3668
        %v3677 = vmul.f32 %v3675, %v3669
        %v3678 = vmul.f32 %v3675, %v3670
        %v3679 = vmul.f32 %v3675, %v3671
        %v3680 = vmul.f32 %v3675, %v3672
        %v3681 = vmul.f32 %v3675, %v3673
        %v3688 = vrot.slane %v3676, 7
        %v3689 = vrot.slane %v3678, 7
        %v3690 = vsel %vm3572, %v3688, %v3689
        %v3691 = vrot.slane %v3677, 7
        %v3692 = vrot.slane %v3679, 7
        %v3693 = vsel %vm3572, %v3691, %v3692
        %v3694 = vrot.slane %v3680, 7
        %v3695 = vsel %vm3572, %v3689, %v3694
        %v3696 = vrot.slane %v3681, 7
        %v3697 = vsel %vm3572, %v3692, %v3696
        %3698 = vrot.lane.b32.xlu0 %v3690, 126
        %v3699 = vpop.permute.xlu0 %3698
        %3700 = vrot.lane.b32.xlu0 %v3693, 126
        %v3701 = vpop.permute.xlu0 %3700
        %3702 = vrot.lane.b32.xlu0 %v3695, 126
        %v3703 = vpop.permute.xlu0 %3702
        %3704 = vrot.lane.b32.xlu0 %v3697, 126
        %v3705 = vpop.permute.xlu0 %3704
        %v3706 = vsel %vm318, %v3699, %v3701
        %v3707 = vsel %vm318, %v3703, %v3705
        %v3710 = vadd.f32 %v3645, %v3706
        %v3711 = vadd.f32 %v3646, %v3707
        %3712 = vrot.lane.b32.xlu0 %v3535, 120
        %v3713 = vpop.permute.xlu0 %3712
        %3714 = vrot.lane.b32.xlu0 %v3536, 120
        %v3715 = vpop.permute.xlu0 %3714
        %3716 = vrot.lane.b32.xlu0 %v525, 120
        %v3717 = vpop.permute.xlu0 %3716
        %3718 = vrot.lane.b32.xlu0 %v526, 120
        %v3719 = vpop.permute.xlu0 %3718
        %3720 = vrot.lane.b32.xlu0 %v3537, 120
        %v3721 = vpop.permute.xlu0 %3720
        %3722 = vrot.lane.b32.xlu0 %v3538, 120
        %v3723 = vpop.permute.xlu0 %3722
        %v3724 = vsel %vm333, %v3713, %v3715
        %v3725 = vsel %vm333, %v3717, %v3719
        %v3726 = vsel %vm333, %v3721, %v3723
        %v3733 = vadd.f32 %v3535, %v3724
        %v3734 = vadd.f32 %v3536, %v3715
        %v3735 = vadd.f32 %v525, %v3725
        %v3736 = vadd.f32 %v526, %v3719
        %v3737 = vadd.f32 %v3537, %v3726
        %v3738 = vadd.f32 %v3538, %v3723
        %s3739 = sld [smem:[#allocation4 + $0x6c]]
        %v3740 = vstv %s3739
        %v3741 = vmul.f32 %v3740, %v3733
        %v3742 = vmul.f32 %v3740, %v3734
        %v3743 = vmul.f32 %v3740, %v3735
        %v3744 = vmul.f32 %v3740, %v3736
        %v3745 = vmul.f32 %v3740, %v3737
        %v3746 = vmul.f32 %v3740, %v3738
        %v3753 = vrot.slane %v3741, 7
        %v3754 = vrot.slane %v3743, 7
        %v3755 = vsel %vm3572, %v3753, %v3754
        %v3756 = vrot.slane %v3742, 7
        %v3757 = vrot.slane %v3744, 7
        %v3758 = vsel %vm3572, %v3756, %v3757
        %v3759 = vrot.slane %v3745, 7
        %v3760 = vsel %vm3572, %v3754, %v3759
        %v3761 = vrot.slane %v3746, 7
        %v3762 = vsel %vm3572, %v3757, %v3761
        %3763 = vrot.lane.b32.xlu0 %v3755, 125
        %v3764 = vpop.permute.xlu0 %3763
        %3765 = vrot.lane.b32.xlu0 %v3758, 125
        %v3766 = vpop.permute.xlu0 %3765
        %3767 = vrot.lane.b32.xlu0 %v3760, 125
        %v3768 = vpop.permute.xlu0 %3767
        %3769 = vrot.lane.b32.xlu0 %v3762, 125
        %v3770 = vpop.permute.xlu0 %3769
        %v3771 = vsel %vm362, %v3764, %v3766
        %v3772 = vsel %vm362, %v3768, %v3770
        %v3775 = vadd.f32 %v3710, %v3771
        %v3776 = vadd.f32 %v3711, %v3772
        %3777 = vrot.lane.b32.xlu0 %v3535, 122
        %v3778 = vpop.permute.xlu0 %3777
        %3779 = vrot.lane.b32.xlu0 %v3536, 122
        %v3780 = vpop.permute.xlu0 %3779
        %3781 = vrot.lane.b32.xlu0 %v525, 122
        %v3782 = vpop.permute.xlu0 %3781
        %3783 = vrot.lane.b32.xlu0 %v526, 122
        %v3784 = vpop.permute.xlu0 %3783
        %3785 = vrot.lane.b32.xlu0 %v3537, 122
        %v3786 = vpop.permute.xlu0 %3785
        %3787 = vrot.lane.b32.xlu0 %v3538, 122
        %v3788 = vpop.permute.xlu0 %3787
        %v3789 = vsel %vm377, %v3778, %v3780
        %v3790 = vsel %vm377, %v3782, %v3784
        %v3791 = vsel %vm377, %v3786, %v3788
        %v3798 = vadd.f32 %v3535, %v3789
        %v3799 = vadd.f32 %v3536, %v3780
        %v3800 = vadd.f32 %v525, %v3790
        %v3801 = vadd.f32 %v526, %v3784
        %v3802 = vadd.f32 %v3537, %v3791
        %v3803 = vadd.f32 %v3538, %v3788
        %s3804 = sld [smem:[#allocation4 + $0x6d]]
        %v3805 = vstv %s3804
        %v3806 = vmul.f32 %v3805, %v3798
        %v3807 = vmul.f32 %v3805, %v3799
        %v3808 = vmul.f32 %v3805, %v3800
        %v3809 = vmul.f32 %v3805, %v3801
        %v3810 = vmul.f32 %v3805, %v3802
        %v3811 = vmul.f32 %v3805, %v3803
        %v3818 = vrot.slane %v3806, 7
        %v3819 = vrot.slane %v3808, 7
        %v3820 = vsel %vm3572, %v3818, %v3819
        %v3821 = vrot.slane %v3807, 7
        %v3822 = vrot.slane %v3809, 7
        %v3823 = vsel %vm3572, %v3821, %v3822
        %v3824 = vrot.slane %v3810, 7
        %v3825 = vsel %vm3572, %v3819, %v3824
        %v3826 = vrot.slane %v3811, 7
        %v3827 = vsel %vm3572, %v3822, %v3826
        %3828 = vrot.lane.b32.xlu0 %v3820, 124
        %v3829 = vpop.permute.xlu0 %3828
        %3830 = vrot.lane.b32.xlu0 %v3823, 124
        %v3831 = vpop.permute.xlu0 %3830
        %3832 = vrot.lane.b32.xlu0 %v3825, 124
        %v3833 = vpop.permute.xlu0 %3832
        %3834 = vrot.lane.b32.xlu0 %v3827, 124
        %v3835 = vpop.permute.xlu0 %3834
        %v3836 = vsel %vm406, %v3829, %v3831
        %v3837 = vsel %vm406, %v3833, %v3835
        %v3840 = vadd.f32 %v3775, %v3836
        %v3841 = vadd.f32 %v3776, %v3837
        %3842 = vrot.lane.b32.xlu0 %v3535, 124
        %v3843 = vpop.permute.xlu0 %3842
        %3844 = vrot.lane.b32.xlu0 %v3536, 124
        %v3845 = vpop.permute.xlu0 %3844
        %3846 = vrot.lane.b32.xlu0 %v525, 124
        %v3847 = vpop.permute.xlu0 %3846
        %3848 = vrot.lane.b32.xlu0 %v526, 124
        %v3849 = vpop.permute.xlu0 %3848
        %3850 = vrot.lane.b32.xlu0 %v3537, 124
        %v3851 = vpop.permute.xlu0 %3850
        %3852 = vrot.lane.b32.xlu0 %v3538, 124
        %v3853 = vpop.permute.xlu0 %3852
        %v3854 = vsel %vm406, %v3843, %v3845
        %v3855 = vsel %vm406, %v3847, %v3849
        %v3856 = vsel %vm406, %v3851, %v3853
        %v3863 = vadd.f32 %v3535, %v3854
        %v3864 = vadd.f32 %v3536, %v3845
        %v3865 = vadd.f32 %v525, %v3855
        %v3866 = vadd.f32 %v526, %v3849
        %v3867 = vadd.f32 %v3537, %v3856
        %v3868 = vadd.f32 %v3538, %v3853
        %s3869 = sld [smem:[#allocation4 + $0x6e]]
        %v3870 = vstv %s3869
        %v3871 = vmul.f32 %v3870, %v3863
        %v3872 = vmul.f32 %v3870, %v3864
        %v3873 = vmul.f32 %v3870, %v3865
        %v3874 = vmul.f32 %v3870, %v3866
        %v3875 = vmul.f32 %v3870, %v3867
        %v3876 = vmul.f32 %v3870, %v3868
        %v3883 = vrot.slane %v3871, 7
        %v3884 = vrot.slane %v3873, 7
        %v3885 = vsel %vm3572, %v3883, %v3884
        %v3886 = vrot.slane %v3872, 7
        %v3887 = vrot.slane %v3874, 7
        %v3888 = vsel %vm3572, %v3886, %v3887
        %v3889 = vrot.slane %v3875, 7
        %v3890 = vsel %vm3572, %v3884, %v3889
        %v3891 = vrot.slane %v3876, 7
        %v3892 = vsel %vm3572, %v3887, %v3891
        %3893 = vrot.lane.b32.xlu0 %v3885, 123
        %v3894 = vpop.permute.xlu0 %3893
        %3895 = vrot.lane.b32.xlu0 %v3888, 123
        %v3896 = vpop.permute.xlu0 %3895
        %3897 = vrot.lane.b32.xlu0 %v3890, 123
        %v3898 = vpop.permute.xlu0 %3897
        %3899 = vrot.lane.b32.xlu0 %v3892, 123
        %v3900 = vpop.permute.xlu0 %3899
        %v3901 = vsel %vm449, %v3894, %v3896
        %v3902 = vsel %vm449, %v3898, %v3900
        %v3905 = vadd.f32 %v3840, %v3901
        %v3906 = vadd.f32 %v3841, %v3902
        %3907 = vrot.lane.b32.xlu0 %v3535, 126
        %v3908 = vpop.permute.xlu0 %3907
        %3909 = vrot.lane.b32.xlu0 %v3536, 126
        %v3910 = vpop.permute.xlu0 %3909
        %3911 = vrot.lane.b32.xlu0 %v525, 126
        %v3912 = vpop.permute.xlu0 %3911
        %3913 = vrot.lane.b32.xlu0 %v526, 126
        %v3914 = vpop.permute.xlu0 %3913
        %3915 = vrot.lane.b32.xlu0 %v3537, 126
        %v3916 = vpop.permute.xlu0 %3915
        %3917 = vrot.lane.b32.xlu0 %v3538, 126
        %v3918 = vpop.permute.xlu0 %3917
        %v3919 = vsel %vm318, %v3908, %v3910
        %v3920 = vsel %vm318, %v3912, %v3914
        %v3921 = vsel %vm318, %v3916, %v3918
        %v3928 = vadd.f32 %v3535, %v3919
        %v3929 = vadd.f32 %v3536, %v3910
        %v3930 = vadd.f32 %v525, %v3920
        %v3931 = vadd.f32 %v526, %v3914
        %v3932 = vadd.f32 %v3537, %v3921
        %v3933 = vadd.f32 %v3538, %v3918
        %s3934 = sld [smem:[#allocation4 + $0x6f]]
        %v3935 = vstv %s3934
        %v3936 = vmul.f32 %v3935, %v3928
        %v3937 = vmul.f32 %v3935, %v3929
        %v3938 = vmul.f32 %v3935, %v3930
        %v3939 = vmul.f32 %v3935, %v3931
        %v3940 = vmul.f32 %v3935, %v3932
        %v3941 = vmul.f32 %v3935, %v3933
        %v3948 = vrot.slane %v3936, 7
        %v3949 = vrot.slane %v3938, 7
        %v3950 = vsel %vm3572, %v3948, %v3949
        %v3951 = vrot.slane %v3937, 7
        %v3952 = vrot.slane %v3939, 7
        %v3953 = vsel %vm3572, %v3951, %v3952
        %v3954 = vrot.slane %v3940, 7
        %v3955 = vsel %vm3572, %v3949, %v3954
        %v3956 = vrot.slane %v3941, 7
        %v3957 = vsel %vm3572, %v3952, %v3956
        %3958 = vrot.lane.b32.xlu0 %v3950, 122
        %v3959 = vpop.permute.xlu0 %3958
        %3960 = vrot.lane.b32.xlu0 %v3953, 122
        %v3961 = vpop.permute.xlu0 %3960
        %3962 = vrot.lane.b32.xlu0 %v3955, 122
        %v3963 = vpop.permute.xlu0 %3962
        %3964 = vrot.lane.b32.xlu0 %v3957, 122
        %v3965 = vpop.permute.xlu0 %3964
        %v3966 = vsel %vm377, %v3959, %v3961
        %v3967 = vsel %vm377, %v3963, %v3965
        %v3970 = vadd.f32 %v3905, %v3966
        %v3971 = vadd.f32 %v3906, %v3967
        %s3972 = sld [smem:[#allocation4 + $0x70]]
        %v3973 = vstv %s3972
        %v3974 = vmul.f32 %v3973, %v3535
        %v3975 = vmul.f32 %v3973, %v3536
        %v3976 = vmul.f32 %v3973, %v525
        %v3977 = vmul.f32 %v3973, %v526
        %v3978 = vmul.f32 %v3973, %v3537
        %v3979 = vmul.f32 %v3973, %v3538
        %v3986 = vrot.slane %v3974, 7
        %v3987 = vrot.slane %v3976, 7
        %v3988 = vsel %vm3572, %v3986, %v3987
        %v3989 = vrot.slane %v3975, 7
        %v3990 = vrot.slane %v3977, 7
        %v3991 = vsel %vm3572, %v3989, %v3990
        %v3992 = vrot.slane %v3978, 7
        %v3993 = vsel %vm3572, %v3987, %v3992
        %v3994 = vrot.slane %v3979, 7
        %v3995 = vsel %vm3572, %v3990, %v3994
        %3996 = vrot.lane.b32.xlu0 %v3988, 121
        %v3997 = vpop.permute.xlu0 %3996
        %3998 = vrot.lane.b32.xlu0 %v3991, 121
        %v3999 = vpop.permute.xlu0 %3998
        %4000 = vrot.lane.b32.xlu0 %v3993, 121
        %v4001 = vpop.permute.xlu0 %4000
        %4002 = vrot.lane.b32.xlu0 %v3995, 121
        %v4003 = vpop.permute.xlu0 %4002
        %v4004 = vsel %vm516, %v3997, %v3999
        %v4005 = vsel %vm516, %v4001, %v4003
        %v4008 = vadd.f32 %v3970, %v4004
        %v4009 = vadd.f32 %v3971, %v4005
        %4010 = vst [vmem:[%s143] sm:$0xff] %v4008
        %4011 = vst [vmem:[%s143 + $0x8] sm:$0xff] %v4009
        %p4012 = scmp.lt.s32.totalorder %s22, 1
        %s4013 = scalar_select %p4012, %s22, 1
        %s4014 = smul.addr %s4013, 2
        %s4015 = smul.addr %s4014, 8
        %s4016 = scalar_lea.vmem %s2, %s4015
        // Predicated region
        $region29: #{soft_erosion.3} parent=23 // pred_check
          %p4017 = pneg %p66
        $region30: #{soft_erosion.3} parent=23 // pred_check_branch
          %4019 = sbr.rel (%p4017) target = $region32
        $region31: #{soft_erosion.3} parent=23 // pred_region
          _
        $region32: #{soft_erosion.3} parent=23 // pred_fallthru
          _
      $region24: #{soft_erosion.3} parent=5 // pred_fallthru
        _
      %p4020 = scmp.le.s32.totalorder 2, %s17
      // Predicated region
      $region33: #{soft_erosion.3} parent=5 // pred_check
        %p4021 = pneg %p4020
      $region34: #{soft_erosion.3} parent=5 // pred_check_branch
        %4023 = sbr.rel (%p4021) target = $region36
      $region35: #{soft_erosion.3} parent=5 // pred_region
        %s4024 = ssub.s32 %s17, 2
        // Predicated region
        $region37: #{soft_erosion.3} parent=35 // pred_check
          %p4025 = pneg %p72
        $region38: #{soft_erosion.3} parent=35 // pred_check_branch
          %4027 = sbr.rel (%p4025) target = $region40
        $region39: #{soft_erosion.3} parent=35 // pred_region
          %p4028 = scmp.lt.s32.totalorder %s23, 1
          %s4029 = scalar_select %p4028, %s23, 1
          %s4030 = smul.addr %s4029, 2
          %s4031 = smul.addr %s4030, 8
          %s4032 = scalar_lea.vmem %s2, %s4031
        $region40: #{soft_erosion.3} parent=35 // pred_fallthru
          _
      $region36: #{soft_erosion.3} parent=5 // pred_fallthru
        _
    $region6: #{soft_erosion.3} parent=1 // loop_footer
      %s21 = sadd.s32 1, %s17
    $region7: #{soft_erosion.3} parent=1 // loop_footer_branch
      %16 = sbr.rel target = $region3
    $region8: #{soft_erosion.3} parent=1 // loop_exit
      _
    %4033 = vsyncpa [#allocation6], 1
    %s4034 = scalar_lea.sflag [#allocation6], 1
    %4035 = vsyncpa %s4034, 1

</llo_original>
